<compile_context>
chip_gen: v7x
topology: tpu7x:2x2x1
jax: 0.10.0
libtpu: 0.0.40
codegen_flags: <defaults>
</compile_context>

<pallas_src>
import functools

import jax
import jax.numpy as jnp
from jax.experimental import pallas as pl
from jax.experimental.pallas import tpu as pltpu


def _round_up(v, m):
    return (v + m - 1) // m * m


# ----------------------------------------------------------------------------
# Pallas kernels
# ----------------------------------------------------------------------------
def _project_kernel(x_ref, wp_ref, wq_ref, b_ref, p_ref, q_ref):
    # x_ref : (tm, Cin)   bf16 point features (rows = flattened B*N points)
    # wp_ref: (Cin, Cout) bf16   W_top * bn_scale
    # wq_ref: (Cin, Cout) bf16   (W_bot - W_top) * bn_scale
    # b_ref : (1, Cout)   f32    folded BN bias
    # p_ref / q_ref: (tm, Cout) f32
    x = x_ref[...]
    p_ref[...] = jnp.dot(x, wp_ref[...], preferred_element_type=jnp.float32)
    q_ref[...] = (jnp.dot(x, wq_ref[...], preferred_element_type=jnp.float32)
                  + b_ref[...])


def _conv5_pool_kernel(x1_ref, x2_ref, x3_ref, x4_ref,
                       w1_ref, w2_ref, w3_ref, w4_ref, b_ref,
                       omax_ref, oavg_ref, *, inv_n):
    # x*_ref : (tn, Ci) bf16 activation tiles (Ci = 64, 64, 128, 256)
    # w*_ref : (Ci, 512) bf16 row-blocks of (W5 * bn_scale)   -> no concat needed
    # b_ref  : (1, 512) f32 folded BN bias
    # omax_ref / oavg_ref : (1, 512) f32 running max / running sum (avg at end)
    n_idx = pl.program_id(1)

    y = jnp.dot(x1_ref[...], w1_ref[...], preferred_element_type=jnp.float32)
    y = y + jnp.dot(x2_ref[...], w2_ref[...], preferred_element_type=jnp.float32)
    y = y + jnp.dot(x3_ref[...], w3_ref[...], preferred_element_type=jnp.float32)
    y = y + jnp.dot(x4_ref[...], w4_ref[...], preferred_element_type=jnp.float32)
    y = y + b_ref[...]
    y = jnp.where(y >= 0.0, y, 0.2 * y)                       # LeakyReLU(0.2)

    tile_max = jnp.max(y, axis=0, keepdims=True)
    tile_sum = jnp.sum(y, axis=0, keepdims=True)

    @pl.when(n_idx == 0)
    def _():
        omax_ref[...] = jnp.full_like(omax_ref, -jnp.inf)
        oavg_ref[...] = jnp.zeros_like(oavg_ref)

    omax_ref[...] = jnp.maximum(omax_ref[...], tile_max)
    oavg_ref[...] = oavg_ref[...] + tile_sum

    @pl.when(n_idx == pl.num_programs(1) - 1)
    def _():
        oavg_ref[...] = oavg_ref[...] * inv_n


# ----------------------------------------------------------------------------
# Pallas wrappers
# ----------------------------------------------------------------------------
def project(x, wp, wq, bias, *, tile=256):
    """Per-point projections of one EdgeConv layer (its only matmuls).

    x : (B, N, Cin) f32 -> p, q : (B, N, Cout) f32
    """
    B, N, Cin = x.shape
    Cout = wp.shape[1]
    rows = B * N
    tm = tile if rows >= tile else _round_up(rows, 8)
    rows_p = _round_up(rows, tm)

    x2 = x.reshape(rows, Cin)
    if rows_p != rows:
        x2 = jnp.pad(x2, ((0, rows_p - rows), (0, 0)))
    x2 = x2.astype(jnp.bfloat16)
    wp_b = wp.astype(jnp.bfloat16)
    wq_b = wq.astype(jnp.bfloat16)
    b2 = bias.reshape(1, Cout).astype(jnp.float32)

    p, q = pl.pallas_call(
        _project_kernel,
        out_shape=(jax.ShapeDtypeStruct((rows_p, Cout), jnp.float32),
                   jax.ShapeDtypeStruct((rows_p, Cout), jnp.float32)),
        grid=(rows_p // tm,),
        in_specs=[
            pl.BlockSpec((tm, Cin), lambda i: (i, 0)),
            pl.BlockSpec((Cin, Cout), lambda i: (0, 0)),
            pl.BlockSpec((Cin, Cout), lambda i: (0, 0)),
            pl.BlockSpec((1, Cout), lambda i: (0, 0)),
        ],
        out_specs=(pl.BlockSpec((tm, Cout), lambda i: (i, 0)),
                   pl.BlockSpec((tm, Cout), lambda i: (i, 0))),
        compiler_params=pltpu.CompilerParams(dimension_semantics=("parallel",)),
    )(x2, wp_b, wq_b, b2)

    p = p[:rows].reshape(B, N, Cout)
    q = q[:rows].reshape(B, N, Cout)
    return p, q


def conv5_and_pool(x1, x2, x3, x4, w5_parts, bias):
    """conv5 (1x1, 512->512) + BN + LeakyReLU + global max & avg pool.

    The 512-wide concat input is never built: W5 is split row-wise and the
    kernel sums four partial matmuls.  The point dimension is tiled on an
    'arbitrary' grid axis with running max / sum resident in the outputs.
    """
    B, N, _ = x1.shape
    Cout = 512
    if N % 256 == 0:
        tn = 256
    elif N % 128 == 0:
        tn = 128
    else:
        tn = N                                   # single full-extent tile
    n_tiles = N // tn

    xs = [a.astype(jnp.bfloat16) for a in (x1, x2, x3, x4)]
    ws = [w.astype(jnp.bfloat16) for w in w5_parts]
    b2 = bias.reshape(1, Cout).astype(jnp.float32)

    kernel = functools.partial(_conv5_pool_kernel, inv_n=1.0 / float(N))
    omax, oavg = pl.pallas_call(
        kernel,
        out_shape=(jax.ShapeDtypeStruct((B, 1, Cout), jnp.float32),
                   jax.ShapeDtypeStruct((B, 1, Cout), jnp.float32)),
        grid=(B, n_tiles),
        in_specs=[
            pl.BlockSpec((None, tn, 64), lambda b, n: (b, n, 0)),
            pl.BlockSpec((None, tn, 64), lambda b, n: (b, n, 0)),
            pl.BlockSpec((None, tn, 128), lambda b, n: (b, n, 0)),
            pl.BlockSpec((None, tn, 256), lambda b, n: (b, n, 0)),
            pl.BlockSpec((64, Cout), lambda b, n: (0, 0)),
            pl.BlockSpec((64, Cout), lambda b, n: (0, 0)),
            pl.BlockSpec((128, Cout), lambda b, n: (0, 0)),
            pl.BlockSpec((256, Cout), lambda b, n: (0, 0)),
            pl.BlockSpec((1, Cout), lambda b, n: (0, 0)),
        ],
        out_specs=(pl.BlockSpec((None, 1, Cout), lambda b, n: (b, 0, 0)),
                   pl.BlockSpec((None, 1, Cout), lambda b, n: (b, 0, 0))),
        compiler_params=pltpu.CompilerParams(
            dimension_semantics=("parallel", "arbitrary")),
    )(*xs, *ws, b2)
    return omax[:, 0, :], oavg[:, 0, :]


# ----------------------------------------------------------------------------
# Glue (kNN / neighbor max) in plain JAX
# ----------------------------------------------------------------------------
def knn_idx(x_t, k):
    # x_t: (B, N, C) — same math as the torch knn(); kept in f32 so neighbor
    # selection matches the reference.
    inner = jnp.einsum("bnc,bmc->bnm", x_t, x_t)
    xx = jnp.sum(x_t * x_t, axis=-1)
    pd = -xx[:, :, None] + 2.0 * inner - xx[:, None, :]
    # TODO(synk): torch.topk has no Pallas TPU equivalent; jax.lax.top_k used.
    _, idx = jax.lax.top_k(pd, k)
    return idx  # (B, N, k)


def neighbor_max(p, idx):
    # TODO(synk): large row-gather has no robust in-kernel Pallas TPU lowering;
    # gather + max over the k neighbors is XLA glue on the small (B,N,Cout) p.
    B = p.shape[0]
    b_idx = jnp.arange(B)[:, None, None]
    return jnp.max(p[b_idx, idx], axis=2)        # (B, N, Cout)


# ----------------------------------------------------------------------------
# Parameter construction (deterministic synthetic init) + BN/weight folding
# ----------------------------------------------------------------------------
def _fold_bn(key, c, eps=1e-5):
    k1, k2, k3, k4 = jax.random.split(key, 4)
    gamma = jax.random.uniform(k1, (c,), jnp.float32, 0.5, 1.5)
    beta = 0.1 * jax.random.normal(k2, (c,), jnp.float32)
    mean = 0.1 * jax.random.normal(k3, (c,), jnp.float32)
    var = jax.random.uniform(k4, (c,), jnp.float32, 0.5, 1.5)
    scale = gamma / jnp.sqrt(var + eps)
    bias = beta - mean * scale
    return scale, bias


def make_params(key):
    params = {}
    layer_dims = [("1", 6, 64), ("2", 128, 64), ("3", 128, 128),
                  ("4", 256, 256), ("5", 512, 512)]
    keys = jax.random.split(key, 2 * len(layer_dims))
    for i, (name, cin, cout) in enumerate(layer_dims):
        wk, bk = keys[2 * i], keys[2 * i + 1]
        # PyTorch Conv weight (Cout, Cin, 1, 1) -> stored transposed as (Cin, Cout)
        w = (jax.random.normal(wk, (cin, cout), jnp.float32)
             * (1.0 / jnp.sqrt(jnp.float32(cin))))
        s, b = _fold_bn(bk, cout)
        params["w" + name], params["s" + name], params["b" + name] = w, s, b
    return params


def _fold_edge_layer(w, scale, bias):
    # w: (2*Cin, Cout) transposed conv weight; top half acts on (nbr - center),
    # bottom half on center.  Fold BN scale into the weights (exact).
    cin = w.shape[0] // 2
    w_top, w_bot = w[:cin], w[cin:]
    wp = w_top * scale[None, :]
    wq = (w_bot - w_top) * scale[None, :]
    return wp, wq, bias


# ----------------------------------------------------------------------------
# DGCNN forward (up to the truncation point of the reference forward())
# ----------------------------------------------------------------------------
def dgcnn_forward(x, params, k=20):
    # x: (B, 3, N) — same axis convention as the PyTorch module input
    feats = jnp.transpose(x, (0, 2, 1)).astype(jnp.float32)   # (B, N, 3)

    outs = []
    for name in ("1", "2", "3", "4"):
        wp, wq, bias = _fold_edge_layer(params["w" + name],
                                        params["s" + name],
                                        params["b" + name])
        idx = knn_idx(feats, k)                     # (B, N, k)
        p, q = project(feats, wp, wq, bias)         # Pallas matmuls
        z = neighbor_max(p, idx) + q                # == max_k BN(conv(edge_k))
        feats = jnp.where(z >= 0.0, z, 0.2 * z)     # LeakyReLU(0.2)
        outs.append(feats)

    x1, x2, x3, x4 = outs                           # 64, 64, 128, 256 channels
    w5f = params["w5"] * params["s5"][None, :]      # fold BN scale into conv5
    w5_parts = (w5f[:64], w5f[64:128], w5f[128:256], w5f[256:512])
    gmax, gavg = conv5_and_pool(x1, x2, x3, x4, w5_parts, params["b5"])
    out = jnp.concatenate([gmax, gavg], axis=-1)    # (B, 1024)
    # TODO(synk): linear1/linear2/linear3 + dropout are never reached in the
    # given forward() (it is truncated after the cat), so they are not applied.
    return out


# ----------------------------------------------------------------------------
# Pure-JAX references for kernel self-checks (no kNN so no index ambiguity)
# ----------------------------------------------------------------------------
def _project_reference(x, wp, wq, bias):
    p = jnp.einsum("bnc,cd->bnd", x, wp)
    q = jnp.einsum("bnc,cd->bnd", x, wq) + bias
    return p, q


def _conv5_reference(x1, x2, x3, x4, w5f, bias):
    cat = jnp.concatenate([x1, x2, x3, x4], axis=-1)
    y = jnp.einsum("bnc,cd->bnd", cat, w5f) + bias
    y = jnp.where(y >= 0.0, y, 0.2 * y)
    return jnp.max(y, axis=1), jnp.mean(y, axis=1)


if __name__ == "__main__":
    key = jax.random.PRNGKey(0)
    pkey, xkey, tkey = jax.random.split(key, 3)
    params = make_params(pkey)

    B, C, N, K = 2, 3, 32, 20
    x = jax.random.normal(xkey, (B, C, N), jnp.float32)

    # Full forward through the Pallas-backed pipeline.
    fwd = jax.jit(functools.partial(dgcnn_forward, k=K))
    out = jax.block_until_ready(fwd(x, params))
    assert out.shape == (B, 1024), out.shape
    assert bool(jnp.all(jnp.isfinite(out)))

    # --- kernel self-checks vs pure-JAX references (bf16 MXU => loose tol) ---
    tk1, tk2, tk3, tk4, tk5 = jax.random.split(tkey, 5)

    # project() check on the layer-3 shapes (Cin=64 -> Cout=128).
    wp3, wq3, b3 = _fold_edge_layer(params["w3"], params["s3"], params["b3"])
    xf = jax.random.normal(tk1, (B, N, 64), jnp.float32)
    p_k, q_k = project(xf, wp3, wq3, b3)
    p_r, q_r = _project_reference(xf, wp3, wq3, b3)
    assert jnp.allclose(p_k, p_r, rtol=0.05, atol=0.2)
    assert jnp.allclose(q_k, q_r, rtol=0.05, atol=0.2)

    # conv5_and_pool() check (same inputs to kernel and reference).
    x1t = jax.random.normal(tk2, (B, N, 64), jnp.float32)
    x2t = jax.random.normal(tk3, (B, N, 64), jnp.float32)
    x3t = jax.random.normal(tk4, (B, N, 128), jnp.float32)
    x4t = jax.random.normal(tk5, (B, N, 256), jnp.float32)
    w5f = params["w5"] * params["s5"][None, :]
    parts = (w5f[:64], w5f[64:128], w5f[128:256], w5f[256:512])
    gmax_k, gavg_k = conv5_and_pool(x1t, x2t, x3t, x4t, parts, params["b5"])
    gmax_r, gavg_r = _conv5_reference(x1t, x2t, x3t, x4t, w5f, params["b5"])
    assert jnp.allclose(gmax_k, gmax_r, rtol=0.05, atol=0.2)
    assert jnp.allclose(gavg_k, gavg_r, rtol=0.05, atol=0.2)

    print("KERNEL_OK")
</pallas_src>

<mosaic_0001>
module attributes {stable_mosaic.version = 11 : i64} {
  func.func @_project_kernel(%arg0: i32, %arg1: memref<64x3xbf16, #tpu.memory_space<vmem>>, %arg2: memref<3x64xbf16, #tpu.memory_space<vmem>>, %arg3: memref<3x64xbf16, #tpu.memory_space<vmem>>, %arg4: memref<1x64xf32, #tpu.memory_space<vmem>>, %arg5: memref<64x64xf32, #tpu.memory_space<vmem>>, %arg6: memref<64x64xf32, #tpu.memory_space<vmem>>) attributes {dimension_semantics = [#tpu.dimension_semantics<parallel>], iteration_bounds = array<i64: 1>, scalar_prefetch = 0 : i64, scratch_operands = 0 : i64, tpu.core_type = #tpu.core_type<tc>, window_params = [{transform_indices = @transform_0, window_bounds = array<i64: 64, 3>}, {pipeline_mode = #tpu.pipeline_mode<synchronous>, transform_indices = @transform_1, window_bounds = array<i64: 3, 64>}, {pipeline_mode = #tpu.pipeline_mode<synchronous>, transform_indices = @transform_2, window_bounds = array<i64: 3, 64>}, {pipeline_mode = #tpu.pipeline_mode<synchronous>, transform_indices = @transform_3, window_bounds = array<i64: 1, 64>}, {transform_indices = @transform_4, window_bounds = array<i64: 64, 64>}, {transform_indices = @transform_5, window_bounds = array<i64: 64, 64>}]} {
    %c0 = arith.constant 0 : index
    %c0_0 = arith.constant 0 : index
    %0 = vector.load %arg1[%c0, %c0_0] : memref<64x3xbf16, #tpu.memory_space<vmem>>, vector<64x3xbf16>
    %c0_1 = arith.constant 0 : index
    %c0_2 = arith.constant 0 : index
    %1 = vector.load %arg2[%c0_1, %c0_2] : memref<3x64xbf16, #tpu.memory_space<vmem>>, vector<3x64xbf16>
    %cst = arith.constant dense<0.000000e+00> : vector<64x64xf32>
    %2 = tpu.matmul %0, %1, %cst {dimension_numbers = #tpu.dot_dimension_numbers<[1], [0], [0], [1], [0, 0, 1, 1], [], []>} : vector<64x3xbf16>, vector<3x64xbf16>, vector<64x64xf32> -> vector<64x64xf32>
    %c0_3 = arith.constant 0 : index
    %c0_4 = arith.constant 0 : index
    %3 = vector.load %arg5[%c0_3, %c0_4] : memref<64x64xf32, #tpu.memory_space<vmem>>, vector<64x64xf32>
    tpu.vector_store %arg5[%c0_3, %c0_4], %2 {strides = array<i32>} : memref<64x64xf32, #tpu.memory_space<vmem>>, vector<64x64xf32>,
    %c0_5 = arith.constant 0 : index
    %c0_6 = arith.constant 0 : index
    %4 = vector.load %arg3[%c0_5, %c0_6] : memref<3x64xbf16, #tpu.memory_space<vmem>>, vector<3x64xbf16>
    %cst_7 = arith.constant dense<0.000000e+00> : vector<64x64xf32>
    %5 = tpu.matmul %0, %4, %cst_7 {dimension_numbers = #tpu.dot_dimension_numbers<[1], [0], [0], [1], [0, 0, 1, 1], [], []>} : vector<64x3xbf16>, vector<3x64xbf16>, vector<64x64xf32> -> vector<64x64xf32>
    %c0_8 = arith.constant 0 : index
    %c0_9 = arith.constant 0 : index
    %6 = vector.load %arg4[%c0_8, %c0_9] : memref<1x64xf32, #tpu.memory_space<vmem>>, vector<1x64xf32>
    %7 = vector.broadcast %6 : vector<1x64xf32> to vector<64x64xf32>
    %8 = arith.addf %5, %7 : vector<64x64xf32>
    %c0_10 = arith.constant 0 : index
    %c0_11 = arith.constant 0 : index
    %9 = vector.load %arg6[%c0_10, %c0_11] : memref<64x64xf32, #tpu.memory_space<vmem>>, vector<64x64xf32>
    tpu.vector_store %arg6[%c0_10, %c0_11], %8 {strides = array<i32>} : memref<64x64xf32, #tpu.memory_space<vmem>>, vector<64x64xf32>,
    return
  }
  func.func @transform_0(%arg0: i32) -> (i32, i32) {
    %c0_i32 = arith.constant 0 : i32
    %c0_i32_0 = arith.constant 0 : i32
    return %arg0, %c0_i32 : i32, i32
  }
  func.func @transform_1(%arg0: i32) -> (i32, i32) {
    %c0_i32 = arith.constant 0 : i32
    %c0_i32_0 = arith.constant 0 : i32
    %c0_i32_1 = arith.constant 0 : i32
    return %c0_i32, %c0_i32_0 : i32, i32
  }
  func.func @transform_2(%arg0: i32) -> (i32, i32) {
    %c0_i32 = arith.constant 0 : i32
    %c0_i32_0 = arith.constant 0 : i32
    %c0_i32_1 = arith.constant 0 : i32
    return %c0_i32, %c0_i32_0 : i32, i32
  }
  func.func @transform_3(%arg0: i32) -> (i32, i32) {
    %c0_i32 = arith.constant 0 : i32
    %c0_i32_0 = arith.constant 0 : i32
    %c0_i32_1 = arith.constant 0 : i32
    return %c0_i32, %c0_i32_0 : i32, i32
  }
  func.func @transform_4(%arg0: i32) -> (i32, i32) {
    %c0_i32 = arith.constant 0 : i32
    %c0_i32_0 = arith.constant 0 : i32
    return %arg0, %c0_i32 : i32, i32
  }
  func.func @transform_5(%arg0: i32) -> (i32, i32) {
    %c0_i32 = arith.constant 0 : i32
    %c0_i32_0 = arith.constant 0 : i32
    return %arg0, %c0_i32 : i32, i32
  }
}

module attributes {stable_mosaic.version = 11 : i64} {
  func.func @_project_kernel(%arg0: i32, %arg1: memref<64x64xbf16, #tpu.memory_space<vmem>>, %arg2: memref<64x64xbf16, #tpu.memory_space<vmem>>, %arg3: memref<64x64xbf16, #tpu.memory_space<vmem>>, %arg4: memref<1x64xf32, #tpu.memory_space<vmem>>, %arg5: memref<64x64xf32, #tpu.memory_space<vmem>>, %arg6: memref<64x64xf32, #tpu.memory_space<vmem>>) attributes {dimension_semantics = [#tpu.dimension_semantics<parallel>], iteration_bounds = array<i64: 1>, scalar_prefetch = 0 : i64, scratch_operands = 0 : i64, tpu.core_type = #tpu.core_type<tc>, window_params = [{transform_indices = @transform_0, window_bounds = array<i64: 64, 64>}, {pipeline_mode = #tpu.pipeline_mode<synchronous>, transform_indices = @transform_1, window_bounds = array<i64: 64, 64>}, {pipeline_mode = #tpu.pipeline_mode<synchronous>, transform_indices = @transform_2, window_bounds = array<i64: 64, 64>}, {pipeline_mode = #tpu.pipeline_mode<synchronous>, transform_indices = @transform_3, window_bounds = array<i64: 1, 64>}, {transform_indices = @transform_4, window_bounds = array<i64: 64, 64>}, {transform_indices = @transform_5, window_bounds = array<i64: 64, 64>}]} {
    %c0 = arith.constant 0 : index
    %c0_0 = arith.constant 0 : index
    %0 = vector.load %arg1[%c0, %c0_0] : memref<64x64xbf16, #tpu.memory_space<vmem>>, vector<64x64xbf16>
    %c0_1 = arith.constant 0 : index
    %c0_2 = arith.constant 0 : index
    %1 = vector.load %arg2[%c0_1, %c0_2] : memref<64x64xbf16, #tpu.memory_space<vmem>>, vector<64x64xbf16>
    %cst = arith.constant dense<0.000000e+00> : vector<64x64xf32>
    %2 = tpu.matmul %0, %1, %cst {dimension_numbers = #tpu.dot_dimension_numbers<[1], [0], [0], [1], [0, 0, 1, 1], [], []>} : vector<64x64xbf16>, vector<64x64xbf16>, vector<64x64xf32> -> vector<64x64xf32>
    %c0_3 = arith.constant 0 : index
    %c0_4 = arith.constant 0 : index
    %3 = vector.load %arg5[%c0_3, %c0_4] : memref<64x64xf32, #tpu.memory_space<vmem>>, vector<64x64xf32>
    tpu.vector_store %arg5[%c0_3, %c0_4], %2 {strides = array<i32>} : memref<64x64xf32, #tpu.memory_space<vmem>>, vector<64x64xf32>,
    %c0_5 = arith.constant 0 : index
    %c0_6 = arith.constant 0 : index
    %4 = vector.load %arg3[%c0_5, %c0_6] : memref<64x64xbf16, #tpu.memory_space<vmem>>, vector<64x64xbf16>
    %cst_7 = arith.constant dense<0.000000e+00> : vector<64x64xf32>
    %5 = tpu.matmul %0, %4, %cst_7 {dimension_numbers = #tpu.dot_dimension_numbers<[1], [0], [0], [1], [0, 0, 1, 1], [], []>} : vector<64x64xbf16>, vector<64x64xbf16>, vector<64x64xf32> -> vector<64x64xf32>
    %c0_8 = arith.constant 0 : index
    %c0_9 = arith.constant 0 : index
    %6 = vector.load %arg4[%c0_8, %c0_9] : memref<1x64xf32, #tpu.memory_space<vmem>>, vector<1x64xf32>
    %7 = vector.broadcast %6 : vector<1x64xf32> to vector<64x64xf32>
    %8 = arith.addf %5, %7 : vector<64x64xf32>
    %c0_10 = arith.constant 0 : index
    %c0_11 = arith.constant 0 : index
    %9 = vector.load %arg6[%c0_10, %c0_11] : memref<64x64xf32, #tpu.memory_space<vmem>>, vector<64x64xf32>
    tpu.vector_store %arg6[%c0_10, %c0_11], %8 {strides = array<i32>} : memref<64x64xf32, #tpu.memory_space<vmem>>, vector<64x64xf32>,
    return
  }
  func.func @transform_0(%arg0: i32) -> (i32, i32) {
    %c0_i32 = arith.constant 0 : i32
    %c0_i32_0 = arith.constant 0 : i32
    return %arg0, %c0_i32 : i32, i32
  }
  func.func @transform_1(%arg0: i32) -> (i32, i32) {
    %c0_i32 = arith.constant 0 : i32
    %c0_i32_0 = arith.constant 0 : i32
    %c0_i32_1 = arith.constant 0 : i32
    return %c0_i32, %c0_i32_0 : i32, i32
  }
  func.func @transform_2(%arg0: i32) -> (i32, i32) {
    %c0_i32 = arith.constant 0 : i32
    %c0_i32_0 = arith.constant 0 : i32
    %c0_i32_1 = arith.constant 0 : i32
    return %c0_i32, %c0_i32_0 : i32, i32
  }
  func.func @transform_3(%arg0: i32) -> (i32, i32) {
    %c0_i32 = arith.constant 0 : i32
    %c0_i32_0 = arith.constant 0 : i32
    %c0_i32_1 = arith.constant 0 : i32
    return %c0_i32, %c0_i32_0 : i32, i32
  }
  func.func @transform_4(%arg0: i32) -> (i32, i32) {
    %c0_i32 = arith.constant 0 : i32
    %c0_i32_0 = arith.constant 0 : i32
    return %arg0, %c0_i32 : i32, i32
  }
  func.func @transform_5(%arg0: i32) -> (i32, i32) {
    %c0_i32 = arith.constant 0 : i32
    %c0_i32_0 = arith.constant 0 : i32
    return %arg0, %c0_i32 : i32, i32
  }
}

module attributes {stable_mosaic.version = 11 : i64} {
  func.func @_project_kernel(%arg0: i32, %arg1: memref<64x64xbf16, #tpu.memory_space<vmem>>, %arg2: memref<64x128xbf16, #tpu.memory_space<vmem>>, %arg3: memref<64x128xbf16, #tpu.memory_space<vmem>>, %arg4: memref<1x128xf32, #tpu.memory_space<vmem>>, %arg5: memref<64x128xf32, #tpu.memory_space<vmem>>, %arg6: memref<64x128xf32, #tpu.memory_space<vmem>>) attributes {dimension_semantics = [#tpu.dimension_semantics<parallel>], iteration_bounds = array<i64: 1>, scalar_prefetch = 0 : i64, scratch_operands = 0 : i64, tpu.core_type = #tpu.core_type<tc>, window_params = [{transform_indices = @transform_0, window_bounds = array<i64: 64, 64>}, {pipeline_mode = #tpu.pipeline_mode<synchronous>, transform_indices = @transform_1, window_bounds = array<i64: 64, 128>}, {pipeline_mode = #tpu.pipeline_mode<synchronous>, transform_indices = @transform_2, window_bounds = array<i64: 64, 128>}, {pipeline_mode = #tpu.pipeline_mode<synchronous>, transform_indices = @transform_3, window_bounds = array<i64: 1, 128>}, {transform_indices = @transform_4, window_bounds = array<i64: 64, 128>}, {transform_indices = @transform_5, window_bounds = array<i64: 64, 128>}]} {
    %c0 = arith.constant 0 : index
    %c0_0 = arith.constant 0 : index
    %0 = vector.load %arg1[%c0, %c0_0] : memref<64x64xbf16, #tpu.memory_space<vmem>>, vector<64x64xbf16>
    %c0_1 = arith.constant 0 : index
    %c0_2 = arith.constant 0 : index
    %1 = vector.load %arg2[%c0_1, %c0_2] : memref<64x128xbf16, #tpu.memory_space<vmem>>, vector<64x128xbf16>
    %cst = arith.constant dense<0.000000e+00> : vector<64x128xf32>
    %2 = tpu.matmul %0, %1, %cst {dimension_numbers = #tpu.dot_dimension_numbers<[1], [0], [0], [1], [0, 0, 1, 1], [], []>} : vector<64x64xbf16>, vector<64x128xbf16>, vector<64x128xf32> -> vector<64x128xf32>
    %c0_3 = arith.constant 0 : index
    %c0_4 = arith.constant 0 : index
    %3 = vector.load %arg5[%c0_3, %c0_4] : memref<64x128xf32, #tpu.memory_space<vmem>>, vector<64x128xf32>
    tpu.vector_store %arg5[%c0_3, %c0_4], %2 {strides = array<i32>} : memref<64x128xf32, #tpu.memory_space<vmem>>, vector<64x128xf32>,
    %c0_5 = arith.constant 0 : index
    %c0_6 = arith.constant 0 : index
    %4 = vector.load %arg3[%c0_5, %c0_6] : memref<64x128xbf16, #tpu.memory_space<vmem>>, vector<64x128xbf16>
    %cst_7 = arith.constant dense<0.000000e+00> : vector<64x128xf32>
    %5 = tpu.matmul %0, %4, %cst_7 {dimension_numbers = #tpu.dot_dimension_numbers<[1], [0], [0], [1], [0, 0, 1, 1], [], []>} : vector<64x64xbf16>, vector<64x128xbf16>, vector<64x128xf32> -> vector<64x128xf32>
    %c0_8 = arith.constant 0 : index
    %c0_9 = arith.constant 0 : index
    %6 = vector.load %arg4[%c0_8, %c0_9] : memref<1x128xf32, #tpu.memory_space<vmem>>, vector<1x128xf32>
    %7 = vector.broadcast %6 : vector<1x128xf32> to vector<64x128xf32>
    %8 = arith.addf %5, %7 : vector<64x128xf32>
    %c0_10 = arith.constant 0 : index
    %c0_11 = arith.constant 0 : index
    %9 = vector.load %arg6[%c0_10, %c0_11] : memref<64x128xf32, #tpu.memory_space<vmem>>, vector<64x128xf32>
    tpu.vector_store %arg6[%c0_10, %c0_11], %8 {strides = array<i32>} : memref<64x128xf32, #tpu.memory_space<vmem>>, vector<64x128xf32>,
    return
  }
  func.func @transform_0(%arg0: i32) -> (i32, i32) {
    %c0_i32 = arith.constant 0 : i32
    %c0_i32_0 = arith.constant 0 : i32
    return %arg0, %c0_i32 : i32, i32
  }
  func.func @transform_1(%arg0: i32) -> (i32, i32) {
    %c0_i32 = arith.constant 0 : i32
    %c0_i32_0 = arith.constant 0 : i32
    %c0_i32_1 = arith.constant 0 : i32
    return %c0_i32, %c0_i32_0 : i32, i32
  }
  func.func @transform_2(%arg0: i32) -> (i32, i32) {
    %c0_i32 = arith.constant 0 : i32
    %c0_i32_0 = arith.constant 0 : i32
    %c0_i32_1 = arith.constant 0 : i32
    return %c0_i32, %c0_i32_0 : i32, i32
  }
  func.func @transform_3(%arg0: i32) -> (i32, i32) {
    %c0_i32 = arith.constant 0 : i32
    %c0_i32_0 = arith.constant 0 : i32
    %c0_i32_1 = arith.constant 0 : i32
    return %c0_i32, %c0_i32_0 : i32, i32
  }
  func.func @transform_4(%arg0: i32) -> (i32, i32) {
    %c0_i32 = arith.constant 0 : i32
    %c0_i32_0 = arith.constant 0 : i32
    return %arg0, %c0_i32 : i32, i32
  }
  func.func @transform_5(%arg0: i32) -> (i32, i32) {
    %c0_i32 = arith.constant 0 : i32
    %c0_i32_0 = arith.constant 0 : i32
    return %arg0, %c0_i32 : i32, i32
  }
}

module attributes {stable_mosaic.version = 11 : i64} {
  func.func @_project_kernel(%arg0: i32, %arg1: memref<64x128xbf16, #tpu.memory_space<vmem>>, %arg2: memref<128x256xbf16, #tpu.memory_space<vmem>>, %arg3: memref<128x256xbf16, #tpu.memory_space<vmem>>, %arg4: memref<1x256xf32, #tpu.memory_space<vmem>>, %arg5: memref<64x256xf32, #tpu.memory_space<vmem>>, %arg6: memref<64x256xf32, #tpu.memory_space<vmem>>) attributes {dimension_semantics = [#tpu.dimension_semantics<parallel>], iteration_bounds = array<i64: 1>, scalar_prefetch = 0 : i64, scratch_operands = 0 : i64, tpu.core_type = #tpu.core_type<tc>, window_params = [{transform_indices = @transform_0, window_bounds = array<i64: 64, 128>}, {pipeline_mode = #tpu.pipeline_mode<synchronous>, transform_indices = @transform_1, window_bounds = array<i64: 128, 256>}, {pipeline_mode = #tpu.pipeline_mode<synchronous>, transform_indices = @transform_2, window_bounds = array<i64: 128, 256>}, {pipeline_mode = #tpu.pipeline_mode<synchronous>, transform_indices = @transform_3, window_bounds = array<i64: 1, 256>}, {transform_indices = @transform_4, window_bounds = array<i64: 64, 256>}, {transform_indices = @transform_5, window_bounds = array<i64: 64, 256>}]} {
    %c0 = arith.constant 0 : index
    %c0_0 = arith.constant 0 : index
    %0 = vector.load %arg1[%c0, %c0_0] : memref<64x128xbf16, #tpu.memory_space<vmem>>, vector<64x128xbf16>
    %c0_1 = arith.constant 0 : index
    %c0_2 = arith.constant 0 : index
    %1 = vector.load %arg2[%c0_1, %c0_2] : memref<128x256xbf16, #tpu.memory_space<vmem>>, vector<128x256xbf16>
    %cst = arith.constant dense<0.000000e+00> : vector<64x256xf32>
    %2 = tpu.matmul %0, %1, %cst {dimension_numbers = #tpu.dot_dimension_numbers<[1], [0], [0], [1], [0, 0, 1, 1], [], []>} : vector<64x128xbf16>, vector<128x256xbf16>, vector<64x256xf32> -> vector<64x256xf32>
    %c0_3 = arith.constant 0 : index
    %c0_4 = arith.constant 0 : index
    %3 = vector.load %arg5[%c0_3, %c0_4] : memref<64x256xf32, #tpu.memory_space<vmem>>, vector<64x256xf32>
    tpu.vector_store %arg5[%c0_3, %c0_4], %2 {strides = array<i32>} : memref<64x256xf32, #tpu.memory_space<vmem>>, vector<64x256xf32>,
    %c0_5 = arith.constant 0 : index
    %c0_6 = arith.constant 0 : index
    %4 = vector.load %arg3[%c0_5, %c0_6] : memref<128x256xbf16, #tpu.memory_space<vmem>>, vector<128x256xbf16>
    %cst_7 = arith.constant dense<0.000000e+00> : vector<64x256xf32>
    %5 = tpu.matmul %0, %4, %cst_7 {dimension_numbers = #tpu.dot_dimension_numbers<[1], [0], [0], [1], [0, 0, 1, 1], [], []>} : vector<64x128xbf16>, vector<128x256xbf16>, vector<64x256xf32> -> vector<64x256xf32>
    %c0_8 = arith.constant 0 : index
    %c0_9 = arith.constant 0 : index
    %6 = vector.load %arg4[%c0_8, %c0_9] : memref<1x256xf32, #tpu.memory_space<vmem>>, vector<1x256xf32>
    %7 = vector.broadcast %6 : vector<1x256xf32> to vector<64x256xf32>
    %8 = arith.addf %5, %7 : vector<64x256xf32>
    %c0_10 = arith.constant 0 : index
    %c0_11 = arith.constant 0 : index
    %9 = vector.load %arg6[%c0_10, %c0_11] : memref<64x256xf32, #tpu.memory_space<vmem>>, vector<64x256xf32>
    tpu.vector_store %arg6[%c0_10, %c0_11], %8 {strides = array<i32>} : memref<64x256xf32, #tpu.memory_space<vmem>>, vector<64x256xf32>,
    return
  }
  func.func @transform_0(%arg0: i32) -> (i32, i32) {
    %c0_i32 = arith.constant 0 : i32
    %c0_i32_0 = arith.constant 0 : i32
    return %arg0, %c0_i32 : i32, i32
  }
  func.func @transform_1(%arg0: i32) -> (i32, i32) {
    %c0_i32 = arith.constant 0 : i32
    %c0_i32_0 = arith.constant 0 : i32
    %c0_i32_1 = arith.constant 0 : i32
    return %c0_i32, %c0_i32_0 : i32, i32
  }
  func.func @transform_2(%arg0: i32) -> (i32, i32) {
    %c0_i32 = arith.constant 0 : i32
    %c0_i32_0 = arith.constant 0 : i32
    %c0_i32_1 = arith.constant 0 : i32
    return %c0_i32, %c0_i32_0 : i32, i32
  }
  func.func @transform_3(%arg0: i32) -> (i32, i32) {
    %c0_i32 = arith.constant 0 : i32
    %c0_i32_0 = arith.constant 0 : i32
    %c0_i32_1 = arith.constant 0 : i32
    return %c0_i32, %c0_i32_0 : i32, i32
  }
  func.func @transform_4(%arg0: i32) -> (i32, i32) {
    %c0_i32 = arith.constant 0 : i32
    %c0_i32_0 = arith.constant 0 : i32
    return %arg0, %c0_i32 : i32, i32
  }
  func.func @transform_5(%arg0: i32) -> (i32, i32) {
    %c0_i32 = arith.constant 0 : i32
    %c0_i32_0 = arith.constant 0 : i32
    return %arg0, %c0_i32 : i32, i32
  }
}

module attributes {stable_mosaic.version = 11 : i64} {
  func.func @_conv5_pool_kernel(%arg0: i32, %arg1: i32, %arg2: memref<1x32x64xbf16, #tpu.memory_space<vmem>>, %arg3: memref<1x32x64xbf16, #tpu.memory_space<vmem>>, %arg4: memref<1x32x128xbf16, #tpu.memory_space<vmem>>, %arg5: memref<1x32x256xbf16, #tpu.memory_space<vmem>>, %arg6: memref<64x512xbf16, #tpu.memory_space<vmem>>, %arg7: memref<64x512xbf16, #tpu.memory_space<vmem>>, %arg8: memref<128x512xbf16, #tpu.memory_space<vmem>>, %arg9: memref<256x512xbf16, #tpu.memory_space<vmem>>, %arg10: memref<1x512xf32, #tpu.memory_space<vmem>>, %arg11: memref<1x1x512xf32, #tpu.memory_space<vmem>>, %arg12: memref<1x1x512xf32, #tpu.memory_space<vmem>>) attributes {dimension_semantics = [#tpu.dimension_semantics<parallel>, #tpu.dimension_semantics<arbitrary>], iteration_bounds = array<i64: 2, 1>, scalar_prefetch = 0 : i64, scratch_operands = 0 : i64, tpu.core_type = #tpu.core_type<tc>, window_params = [{transform_indices = @transform_0, window_bounds = array<i64: 1, 32, 64>}, {transform_indices = @transform_1, window_bounds = array<i64: 1, 32, 64>}, {transform_indices = @transform_2, window_bounds = array<i64: 1, 32, 128>}, {transform_indices = @transform_3, window_bounds = array<i64: 1, 32, 256>}, {pipeline_mode = #tpu.pipeline_mode<synchronous>, transform_indices = @transform_4, window_bounds = array<i64: 64, 512>}, {pipeline_mode = #tpu.pipeline_mode<synchronous>, transform_indices = @transform_5, window_bounds = array<i64: 64, 512>}, {pipeline_mode = #tpu.pipeline_mode<synchronous>, transform_indices = @transform_6, window_bounds = array<i64: 128, 512>}, {pipeline_mode = #tpu.pipeline_mode<synchronous>, transform_indices = @transform_7, window_bounds = array<i64: 256, 512>}, {pipeline_mode = #tpu.pipeline_mode<synchronous>, transform_indices = @transform_8, window_bounds = array<i64: 1, 512>}, {transform_indices = @transform_9, window_bounds = array<i64: 1, 1, 512>}, {transform_indices = @transform_10, window_bounds = array<i64: 1, 1, 512>}]} {
    %c0 = arith.constant 0 : index
    %c0_0 = arith.constant 0 : index
    %c0_1 = arith.constant 0 : index
    %0 = vector.load %arg2[%c0, %c0_0, %c0_1] : memref<1x32x64xbf16, #tpu.memory_space<vmem>>, vector<1x32x64xbf16>
    %1 = vector.shape_cast %0 : vector<1x32x64xbf16> to vector<32x64xbf16>
    %c0_2 = arith.constant 0 : index
    %c0_3 = arith.constant 0 : index
    %2 = vector.load %arg6[%c0_2, %c0_3] : memref<64x512xbf16, #tpu.memory_space<vmem>>, vector<64x512xbf16>
    %cst = arith.constant dense<0.000000e+00> : vector<32x512xf32>
    %3 = tpu.matmul %1, %2, %cst {dimension_numbers = #tpu.dot_dimension_numbers<[1], [0], [0], [1], [0, 0, 1, 1], [], []>} : vector<32x64xbf16>, vector<64x512xbf16>, vector<32x512xf32> -> vector<32x512xf32>
    %c0_4 = arith.constant 0 : index
    %c0_5 = arith.constant 0 : index
    %c0_6 = arith.constant 0 : index
    %4 = vector.load %arg3[%c0_4, %c0_5, %c0_6] : memref<1x32x64xbf16, #tpu.memory_space<vmem>>, vector<1x32x64xbf16>
    %5 = vector.shape_cast %4 : vector<1x32x64xbf16> to vector<32x64xbf16>
    %c0_7 = arith.constant 0 : index
    %c0_8 = arith.constant 0 : index
    %6 = vector.load %arg7[%c0_7, %c0_8] : memref<64x512xbf16, #tpu.memory_space<vmem>>, vector<64x512xbf16>
    %cst_9 = arith.constant dense<0.000000e+00> : vector<32x512xf32>
    %7 = tpu.matmul %5, %6, %cst_9 {dimension_numbers = #tpu.dot_dimension_numbers<[1], [0], [0], [1], [0, 0, 1, 1], [], []>} : vector<32x64xbf16>, vector<64x512xbf16>, vector<32x512xf32> -> vector<32x512xf32>
    %8 = arith.addf %3, %7 : vector<32x512xf32>
    %c0_10 = arith.constant 0 : index
    %c0_11 = arith.constant 0 : index
    %c0_12 = arith.constant 0 : index
    %9 = vector.load %arg4[%c0_10, %c0_11, %c0_12] : memref<1x32x128xbf16, #tpu.memory_space<vmem>>, vector<1x32x128xbf16>
    %10 = vector.shape_cast %9 : vector<1x32x128xbf16> to vector<32x128xbf16>
    %c0_13 = arith.constant 0 : index
    %c0_14 = arith.constant 0 : index
    %11 = vector.load %arg8[%c0_13, %c0_14] : memref<128x512xbf16, #tpu.memory_space<vmem>>, vector<128x512xbf16>
    %cst_15 = arith.constant dense<0.000000e+00> : vector<32x512xf32>
    %12 = tpu.matmul %10, %11, %cst_15 {dimension_numbers = #tpu.dot_dimension_numbers<[1], [0], [0], [1], [0, 0, 1, 1], [], []>} : vector<32x128xbf16>, vector<128x512xbf16>, vector<32x512xf32> -> vector<32x512xf32>
    %13 = arith.addf %8, %12 : vector<32x512xf32>
    %c0_16 = arith.constant 0 : index
    %c0_17 = arith.constant 0 : index
    %c0_18 = arith.constant 0 : index
    %14 = vector.load %arg5[%c0_16, %c0_17, %c0_18] : memref<1x32x256xbf16, #tpu.memory_space<vmem>>, vector<1x32x256xbf16>
    %15 = vector.shape_cast %14 : vector<1x32x256xbf16> to vector<32x256xbf16>
    %c0_19 = arith.constant 0 : index
    %c0_20 = arith.constant 0 : index
    %16 = vector.load %arg9[%c0_19, %c0_20] : memref<256x512xbf16, #tpu.memory_space<vmem>>, vector<256x512xbf16>
    %cst_21 = arith.constant dense<0.000000e+00> : vector<32x512xf32>
    %17 = tpu.matmul %15, %16, %cst_21 {dimension_numbers = #tpu.dot_dimension_numbers<[1], [0], [0], [1], [0, 0, 1, 1], [], []>} : vector<32x256xbf16>, vector<256x512xbf16>, vector<32x512xf32> -> vector<32x512xf32>
    %18 = arith.addf %13, %17 : vector<32x512xf32>
    %c0_22 = arith.constant 0 : index
    %c0_23 = arith.constant 0 : index
    %19 = vector.load %arg10[%c0_22, %c0_23] : memref<1x512xf32, #tpu.memory_space<vmem>>, vector<1x512xf32>
    %20 = vector.broadcast %19 : vector<1x512xf32> to vector<32x512xf32>
    %21 = arith.addf %18, %20 : vector<32x512xf32>
    %cst_24 = arith.constant 0.000000e+00 : f32
    %22 = vector.broadcast %cst_24 : f32 to vector<32x512xf32>
    %23 = arith.cmpf oge, %21, %22 : vector<32x512xf32>
    %cst_25 = arith.constant 2.000000e-01 : f32
    %24 = vector.broadcast %cst_25 : f32 to vector<32x512xf32>
    %25 = arith.mulf %24, %21 : vector<32x512xf32>
    %26 = arith.select %23, %21, %25 : vector<32x512xi1>, vector<32x512xf32>
    %cst_26 = arith.constant dense<0xFF800000> : vector<512xf32>
    %27 = vector.multi_reduction <maximumf>, %26, %cst_26 [0] : vector<32x512xf32> to vector<512xf32>
    %28 = vector.shape_cast %27 : vector<512xf32> to vector<1x512xf32>
    %cst_27 = arith.constant dense<0.000000e+00> : vector<512xf32>
    %29 = vector.multi_reduction <add>, %26, %cst_27 [0] : vector<32x512xf32> to vector<512xf32>
    %30 = vector.shape_cast %29 : vector<512xf32> to vector<1x512xf32>
    %c0_i32 = arith.constant 0 : i32
    %31 = arith.cmpi eq, %arg1, %c0_i32 : i32
    %32 = arith.extui %31 : i1 to i32
    %c0_i32_28 = arith.constant 0 : i32
    %33 = arith.cmpi ne, %32, %c0_i32_28 : i32
    scf.if %33 {
      %cst_43 = arith.constant 0xFF800000 : f32
      %49 = vector.broadcast %cst_43 : f32 to vector<1x512xf32>
      %c0_44 = arith.constant 0 : index
      %c0_45 = arith.constant 0 : index
      %c0_46 = arith.constant 0 : index
      %50 = vector.load %arg11[%c0_44, %c0_45, %c0_46] : memref<1x1x512xf32, #tpu.memory_space<vmem>>, vector<1x1x512xf32>
      %51 = vector.shape_cast %50 : vector<1x1x512xf32> to vector<1x512xf32>
      %52 = vector.shape_cast %49 : vector<1x512xf32> to vector<1x1x512xf32>
      tpu.vector_store %arg11[%c0_44, %c0_45, %c0_46], %52 {strides = array<i32>} : memref<1x1x512xf32, #tpu.memory_space<vmem>>, vector<1x1x512xf32>,
      %cst_47 = arith.constant 0.000000e+00 : f32
      %53 = vector.broadcast %cst_47 : f32 to vector<1x512xf32>
      %c0_48 = arith.constant 0 : index
      %c0_49 = arith.constant 0 : index
      %c0_50 = arith.constant 0 : index
      %54 = vector.load %arg12[%c0_48, %c0_49, %c0_50] : memref<1x1x512xf32, #tpu.memory_space<vmem>>, vector<1x1x512xf32>
      %55 = vector.shape_cast %54 : vector<1x1x512xf32> to vector<1x512xf32>
      %56 = vector.shape_cast %53 : vector<1x512xf32> to vector<1x1x512xf32>
      tpu.vector_store %arg12[%c0_48, %c0_49, %c0_50], %56 {strides = array<i32>} : memref<1x1x512xf32, #tpu.memory_space<vmem>>, vector<1x1x512xf32>,
    } else {
    }
    %c0_29 = arith.constant 0 : index
    %c0_30 = arith.constant 0 : index
    %c0_31 = arith.constant 0 : index
    %34 = vector.load %arg11[%c0_29, %c0_30, %c0_31] : memref<1x1x512xf32, #tpu.memory_space<vmem>>, vector<1x1x512xf32>
    %35 = vector.shape_cast %34 : vector<1x1x512xf32> to vector<1x512xf32>
    %36 = arith.maximumf %35, %28 : vector<1x512xf32>
    %c0_32 = arith.constant 0 : index
    %c0_33 = arith.constant 0 : index
    %c0_34 = arith.constant 0 : index
    %37 = vector.load %arg11[%c0_32, %c0_33, %c0_34] : memref<1x1x512xf32, #tpu.memory_space<vmem>>, vector<1x1x512xf32>
    %38 = vector.shape_cast %37 : vector<1x1x512xf32> to vector<1x512xf32>
    %39 = vector.shape_cast %36 : vector<1x512xf32> to vector<1x1x512xf32>
    tpu.vector_store %arg11[%c0_32, %c0_33, %c0_34], %39 {strides = array<i32>} : memref<1x1x512xf32, #tpu.memory_space<vmem>>, vector<1x1x512xf32>,
    %c0_35 = arith.constant 0 : index
    %c0_36 = arith.constant 0 : index
    %c0_37 = arith.constant 0 : index
    %40 = vector.load %arg12[%c0_35, %c0_36, %c0_37] : memref<1x1x512xf32, #tpu.memory_space<vmem>>, vector<1x1x512xf32>
    %41 = vector.shape_cast %40 : vector<1x1x512xf32> to vector<1x512xf32>
    %42 = arith.addf %41, %30 : vector<1x512xf32>
    %c0_38 = arith.constant 0 : index
    %c0_39 = arith.constant 0 : index
    %c0_40 = arith.constant 0 : index
    %43 = vector.load %arg12[%c0_38, %c0_39, %c0_40] : memref<1x1x512xf32, #tpu.memory_space<vmem>>, vector<1x1x512xf32>
    %44 = vector.shape_cast %43 : vector<1x1x512xf32> to vector<1x512xf32>
    %45 = vector.shape_cast %42 : vector<1x512xf32> to vector<1x1x512xf32>
    tpu.vector_store %arg12[%c0_38, %c0_39, %c0_40], %45 {strides = array<i32>} : memref<1x1x512xf32, #tpu.memory_space<vmem>>, vector<1x1x512xf32>,
    %c0_i32_41 = arith.constant 0 : i32
    %46 = arith.cmpi eq, %arg1, %c0_i32_41 : i32
    %47 = arith.extui %46 : i1 to i32
    %c0_i32_42 = arith.constant 0 : i32
    %48 = arith.cmpi ne, %47, %c0_i32_42 : i32
    scf.if %48 {
      %c0_43 = arith.constant 0 : index
      %c0_44 = arith.constant 0 : index
      %c0_45 = arith.constant 0 : index
      %49 = vector.load %arg12[%c0_43, %c0_44, %c0_45] : memref<1x1x512xf32, #tpu.memory_space<vmem>>, vector<1x1x512xf32>
      %50 = vector.shape_cast %49 : vector<1x1x512xf32> to vector<1x512xf32>
      %cst_46 = arith.constant 3.125000e-02 : f32
      %51 = vector.broadcast %cst_46 : f32 to vector<1x512xf32>
      %52 = arith.mulf %50, %51 : vector<1x512xf32>
      %c0_47 = arith.constant 0 : index
      %c0_48 = arith.constant 0 : index
      %c0_49 = arith.constant 0 : index
      %53 = vector.load %arg12[%c0_47, %c0_48, %c0_49] : memref<1x1x512xf32, #tpu.memory_space<vmem>>, vector<1x1x512xf32>
      %54 = vector.shape_cast %53 : vector<1x1x512xf32> to vector<1x512xf32>
      %55 = vector.shape_cast %52 : vector<1x512xf32> to vector<1x1x512xf32>
      tpu.vector_store %arg12[%c0_47, %c0_48, %c0_49], %55 {strides = array<i32>} : memref<1x1x512xf32, #tpu.memory_space<vmem>>, vector<1x1x512xf32>,
    } else {
    }
    return
  }
  func.func @transform_0(%arg0: i32, %arg1: i32) -> (i32, i32, i32) {
    %c0_i32 = arith.constant 0 : i32
    %c0_i32_0 = arith.constant 0 : i32
    return %arg0, %arg1, %c0_i32 : i32, i32, i32
  }
  func.func @transform_1(%arg0: i32, %arg1: i32) -> (i32, i32, i32) {
    %c0_i32 = arith.constant 0 : i32
    %c0_i32_0 = arith.constant 0 : i32
    return %arg0, %arg1, %c0_i32 : i32, i32, i32
  }
  func.func @transform_2(%arg0: i32, %arg1: i32) -> (i32, i32, i32) {
    %c0_i32 = arith.constant 0 : i32
    %c0_i32_0 = arith.constant 0 : i32
    return %arg0, %arg1, %c0_i32 : i32, i32, i32
  }
  func.func @transform_3(%arg0: i32, %arg1: i32) -> (i32, i32, i32) {
    %c0_i32 = arith.constant 0 : i32
    %c0_i32_0 = arith.constant 0 : i32
    return %arg0, %arg1, %c0_i32 : i32, i32, i32
  }
  func.func @transform_4(%arg0: i32, %arg1: i32) -> (i32, i32) {
    %c0_i32 = arith.constant 0 : i32
    %c0_i32_0 = arith.constant 0 : i32
    %c0_i32_1 = arith.constant 0 : i32
    return %c0_i32, %c0_i32_0 : i32, i32
  }
  func.func @transform_5(%arg0: i32, %arg1: i32) -> (i32, i32) {
    %c0_i32 = arith.constant 0 : i32
    %c0_i32_0 = arith.constant 0 : i32
    %c0_i32_1 = arith.constant 0 : i32
    return %c0_i32, %c0_i32_0 : i32, i32
  }
  func.func @transform_6(%arg0: i32, %arg1: i32) -> (i32, i32) {
    %c0_i32 = arith.constant 0 : i32
    %c0_i32_0 = arith.constant 0 : i32
    %c0_i32_1 = arith.constant 0 : i32
    return %c0_i32, %c0_i32_0 : i32, i32
  }
  func.func @transform_7(%arg0: i32, %arg1: i32) -> (i32, i32) {
    %c0_i32 = arith.constant 0 : i32
    %c0_i32_0 = arith.constant 0 : i32
    %c0_i32_1 = arith.constant 0 : i32
    return %c0_i32, %c0_i32_0 : i32, i32
  }
  func.func @transform_8(%arg0: i32, %arg1: i32) -> (i32, i32) {
    %c0_i32 = arith.constant 0 : i32
    %c0_i32_0 = arith.constant 0 : i32
    %c0_i32_1 = arith.constant 0 : i32
    return %c0_i32, %c0_i32_0 : i32, i32
  }
  func.func @transform_9(%arg0: i32, %arg1: i32) -> (i32, i32, i32) {
    %c0_i32 = arith.constant 0 : i32
    %c0_i32_0 = arith.constant 0 : i32
    %c0_i32_1 = arith.constant 0 : i32
    return %arg0, %c0_i32, %c0_i32_0 : i32, i32, i32
  }
  func.func @transform_10(%arg0: i32, %arg1: i32) -> (i32, i32, i32) {
    %c0_i32 = arith.constant 0 : i32
    %c0_i32_0 = arith.constant 0 : i32
    %c0_i32_1 = arith.constant 0 : i32
    return %arg0, %c0_i32, %c0_i32_0 : i32, i32, i32
  }
}

</mosaic_0001>

<llo_original>
// kernel: neg.17
$region0: #{neg.17}
  #allocation0 [shape = 's32[1]{0}', space=sflag, size = 0x4, scoped, tag = 'scoped memory for neg.17']
  %s0 = inlined_call_operand.vmem [shape: f32[2,32], index: 0, kind: input, shape index: {}]
  %s1 = inlined_call_operand.vmem [shape: f32[2,32], index: 1, kind: output, shape index: {}]
  %v2 = vld [vmem:[%s0] sm:$0x3]
  %3 = xla_tuple %v2
  %4 = xla_tuple %3
  %v5 = vxor.u32 %v2, 2147483648
  %6 = xla_tuple %v5
  %7 = vst [vmem:[%s1] sm:$0x3] %v5

// kernel: dgcnn_forward.5
$region0: #{dgcnn_forward.5}
  #allocation0 [shape = 'u32[]', space=smem, size = 0x4, offset = 0x4, fixed_abs, tag = 'smem constant byte address 0x4 - core index']
  #allocation1 [shape = 'u32[144,128]{1,0:T(1,128)}', space=vmem, size = 0x12000, scoped, tag = 'internal scratch']
  %s0 = inlined_call_operand.vmem [shape: bf16[64,3], index: 0, kind: input, shape index: {}]
  %s1 = inlined_call_operand.vmem [shape: bf16[3,64], index: 1, kind: input, shape index: {}]
  %s2 = inlined_call_operand.vmem [shape: bf16[3,64], index: 2, kind: input, shape index: {}]
  %s3 = inlined_call_operand.hbm [shape: f32[1,64], index: 3, kind: input, shape index: {}]
  %s4 = inlined_call_operand.vmem [shape: f32[64,64], index: 4, kind: output, shape index: {0}]
  %s5 = inlined_call_operand.vmem [shape: f32[64,64], index: 5, kind: output, shape index: {1}]
  %6 = xla_tuple %s4, %s5
  %s7 = sld [smem:[#allocation0]]
  $region38: #{dgcnn_forward.5} parent=0
    _
  %s9 = ssub.s32 1, %s7
  %s10 = scalar_select 0, %s9, %s7
  $region1: #{dgcnn_forward.5} parent=0
    #allocation2 [shape = 'u8[512]{0}', space=vmem, size = 0x400, scoped, tag = 'input window, operand 3, single buffered']
    #allocation3 [shape = 's32[1]{0}', space=sflag, size = 0x4, scoped, tag = 'scoped memory for dgcnn_forward.5']
    %11 = vsyncpa [#allocation3], 0
    // Predicated region
    $region2: #{dgcnn_forward.5} parent=1 // pred_check
      _
    $region3: #{dgcnn_forward.5} parent=1 // pred_check_branch
      %13 = sbr.rel (0) target = $region5
    $region4: #{dgcnn_forward.5} parent=1 // pred_region
      _
    $region5: #{dgcnn_forward.5} parent=1 // pred_fallthru
      _
    // Predicated region
    $region6: #{dgcnn_forward.5} parent=1 // pred_check
      _
    $region7: #{dgcnn_forward.5} parent=1 // pred_check_branch
      %15 = sbr.rel (0) target = $region9
    $region8: #{dgcnn_forward.5} parent=1 // pred_region
      _
    $region9: #{dgcnn_forward.5} parent=1 // pred_fallthru
      _
    // Predicated region
    $region10: #{dgcnn_forward.5} parent=1 // pred_check
      _
    $region11: #{dgcnn_forward.5} parent=1 // pred_check_branch
      %17 = sbr.rel (0) target = $region13
    $region12: #{dgcnn_forward.5} parent=1 // pred_region
      _
    $region13: #{dgcnn_forward.5} parent=1 // pred_fallthru
      _
    // Predicated region
    $region14: #{dgcnn_forward.5} parent=1 // pred_check
      _
    $region15: #{dgcnn_forward.5} parent=1 // pred_check_branch
      %19 = sbr.rel (0) target = $region17
    $region16: #{dgcnn_forward.5} parent=1 // pred_region
      %s21 = ssub.s32 16, 16
      %22 = vsyncadd [#allocation3], %s21
      %s24 = sshll.u32 [#allocation2], 4
      %s25 = int_to_ptr.vmem [resolvable:$true] %s24
      %27 = dma.hbm_to_vmem [thread:$0]  %s3, 16, %s25, [#allocation3]
    $region17: #{dgcnn_forward.5} parent=1 // pred_fallthru
      _
    // Predicated region
    $region18: #{dgcnn_forward.5} parent=1 // pred_check
      _
    $region19: #{dgcnn_forward.5} parent=1 // pred_check_branch
      %29 = sbr.rel (0) target = $region21
    $region20: #{dgcnn_forward.5} parent=1 // pred_region
      %30 = dma.done [#allocation3], 16
    $region21: #{dgcnn_forward.5} parent=1 // pred_fallthru
      _
    %v32 = vld [vmem:[%s0] sm:$0xf]
    %v33 = vld [vmem:[%s0 + $0x4] sm:$0xf]
    %v34 = vld [vmem:[%s0 + $0x8] sm:$0xf]
    %v35 = vld [vmem:[%s0 + $0xc] sm:$0xf]
    %v36 = vld [vmem:[%s0 + $0x10] sm:$0xf]
    %v37 = vld [vmem:[%s0 + $0x14] sm:$0xf]
    %v38 = vld [vmem:[%s0 + $0x18] sm:$0xf]
    %v39 = vld [vmem:[%s0 + $0x1c] sm:$0xf]
    %v40 = vld [vmem:[%s1] sm:$0x3]
    %v49 = vunpack.c.l.b16 %v32
    %v50 = vunpack.c.l.b16 %v33
    %v51 = vunpack.c.l.b16 %v34
    %v52 = vunpack.c.l.b16 %v35
    %v53 = vunpack.c.l.b16 %v36
    %v54 = vunpack.c.l.b16 %v37
    %v55 = vunpack.c.l.b16 %v38
    %v56 = vunpack.c.l.b16 %v39
    %v57 = vpack.c.b16 %v50, %v49
    %v58 = vpack.c.b16 %v52, %v51
    %v59 = vpack.c.b16 %v54, %v53
    %v60 = vpack.c.b16 %v56, %v55
    %vm61 = vcmask 23552
    %v63 = vsel %vm61, %v57, 0
    %v66 = vsel %vm61, %v58, 0
    %v69 = vsel %vm61, %v59, 0
    %v72 = vsel %vm61, %v60, 0
    %vm74 = vcmask 1040384
    %vm75 = vcmask 1041408
    %v76 = vsel %vm74, 4294967295, 65535
    %v77 = vsel %vm75, %v76, 0
    %v79 = vand.u32 %v40, %v77
    %81 = vmatprep.subr.bf16.mxu0 0
    %82 = vmatpush1.bf16.msra.mxu0 %v79
    %83 = vmatprep.subr.bf16.mxu0 0
    %84 = vmatpush1.bf16.msra.mxu0 0
    %85 = vmatprep.subr.bf16.mxu0 0
    %86 = vmatpush1.bf16.msra.mxu0 0
    %87 = vmatprep.subr.bf16.mxu0 0
    %88 = vmatpush1.bf16.msra.mxu0 0
    %89 = vmatprep.subr.bf16.mxu0 0
    %90 = vmatpush1.bf16.msra.mxu0 0
    %91 = vmatprep.subr.bf16.mxu0 0
    %92 = vmatpush1.bf16.msra.mxu0 0
    %93 = vmatprep.subr.bf16.mxu0 0
    %94 = vmatpush1.bf16.msra.mxu0 0
    %95 = vmatprep.subr.bf16.mxu0 0
    %96 = vmatpush1.bf16.msra.mxu0 0
    %97 = vmatprep.subr.bf16.mxu0 0
    %98 = vmatpush1.bf16.msra.mxu0 0
    %99 = vmatprep.subr.bf16.mxu0 0
    %100 = vmatpush1.bf16.msra.mxu0 0
    %101 = vmatprep.subr.bf16.mxu0 0
    %102 = vmatpush1.bf16.msra.mxu0 0
    %103 = vmatprep.subr.bf16.mxu0 0
    %104 = vmatpush1.bf16.msra.mxu0 0
    %105 = vmatprep.subr.bf16.mxu0 0
    %106 = vmatpush1.bf16.msra.mxu0 0
    %107 = vmatprep.subr.bf16.mxu0 0
    %108 = vmatpush1.bf16.msra.mxu0 0
    %109 = vmatprep.subr.bf16.mxu0 0
    %110 = vmatpush1.bf16.msra.mxu0 0
    %111 = vmatprep.subr.bf16.mxu0 0
    %112 = vmatpush1.bf16.msra.mxu0 0
    %113 = vmatprep.mubr.bf16.mxu0 0
    %114 = vmatmul.mubr.bf16.gmra.mrb[0].mxu0 %v63
    %v115 = vpop.f32.mrb[0].mxu0
    %v116 = vadd.f32 0.0, %v115
    %v117 = vpop.f32.mrb[0].mxu0
    %v118 = vpop.f32.mrb[0].mxu0
    %v119 = vadd.f32 0.0, %v118
    %v120 = vpop.f32.mrb[0].mxu0
    %121 = vmatprep.mubr.bf16.mxu0 0
    %122 = vmatmul.mubr.bf16.gmra.mrb[0].mxu0 %v66
    %v123 = vpop.f32.mrb[0].mxu0
    %v124 = vadd.f32 0.0, %v123
    %v125 = vpop.f32.mrb[0].mxu0
    %v126 = vpop.f32.mrb[0].mxu0
    %v127 = vadd.f32 0.0, %v126
    %v128 = vpop.f32.mrb[0].mxu0
    %129 = vmatprep.mubr.bf16.mxu0 0
    %130 = vmatmul.mubr.bf16.gmra.mrb[0].mxu0 %v69
    %v131 = vpop.f32.mrb[0].mxu0
    %v132 = vadd.f32 0.0, %v131
    %v133 = vpop.f32.mrb[0].mxu0
    %v134 = vpop.f32.mrb[0].mxu0
    %v135 = vadd.f32 0.0, %v134
    %v136 = vpop.f32.mrb[0].mxu0
    %137 = vmatprep.mubr.bf16.mxu0 0
    %138 = vmatmul.mubr.bf16.gmra.mrb[0].mxu0 %v72
    %v139 = vpop.f32.mrb[0].mxu0
    %v140 = vadd.f32 0.0, %v139
    %v141 = vpop.f32.mrb[0].mxu0
    %v142 = vpop.f32.mrb[0].mxu0
    %v143 = vadd.f32 0.0, %v142
    %v144 = vpop.f32.mrb[0].mxu0
    %145 = vdwg.mxu0
    %vm146 = vcmask 523264
    %147 = vst.msk [vmem:[%s4] sm:$0xff] %vm146, %v116
    %148 = vst.msk [vmem:[%s4 + $0x8] sm:$0xff] %vm146, %v119
    %149 = vst.msk [vmem:[%s4 + $0x10] sm:$0xff] %vm146, %v124
    %150 = vst.msk [vmem:[%s4 + $0x18] sm:$0xff] %vm146, %v127
    %151 = vst.msk [vmem:[%s4 + $0x20] sm:$0xff] %vm146, %v132
    %152 = vst.msk [vmem:[%s4 + $0x28] sm:$0xff] %vm146, %v135
    %153 = vst.msk [vmem:[%s4 + $0x30] sm:$0xff] %vm146, %v140
    %154 = vst.msk [vmem:[%s4 + $0x38] sm:$0xff] %vm146, %v143
    %v155 = vld [vmem:[%s2] sm:$0x3]
    %v156 = vld [vmem:[#allocation2] sm:$0x1]
    %v158 = vlaneseq
    %v159 = vshrl.u32 %v158, 7
    %v160 = vsub.s32 0, %v159
    %v161 = vrot.slane %v156, %v160
    %v164 = vand.u32 %v155, %v77
    %166 = vmatprep.subr.bf16.mxu0 0
    %167 = vmatpush1.bf16.msra.mxu0 %v164
    %168 = vmatprep.subr.bf16.mxu0 0
    %169 = vmatpush1.bf16.msra.mxu0 0
    %170 = vmatprep.subr.bf16.mxu0 0
    %171 = vmatpush1.bf16.msra.mxu0 0
    %172 = vmatprep.subr.bf16.mxu0 0
    %173 = vmatpush1.bf16.msra.mxu0 0
    %174 = vmatprep.subr.bf16.mxu0 0
    %175 = vmatpush1.bf16.msra.mxu0 0
    %176 = vmatprep.subr.bf16.mxu0 0
    %177 = vmatpush1.bf16.msra.mxu0 0
    %178 = vmatprep.subr.bf16.mxu0 0
    %179 = vmatpush1.bf16.msra.mxu0 0
    %180 = vmatprep.subr.bf16.mxu0 0
    %181 = vmatpush1.bf16.msra.mxu0 0
    %182 = vmatprep.subr.bf16.mxu0 0
    %183 = vmatpush1.bf16.msra.mxu0 0
    %184 = vmatprep.subr.bf16.mxu0 0
    %185 = vmatpush1.bf16.msra.mxu0 0
    %186 = vmatprep.subr.bf16.mxu0 0
    %187 = vmatpush1.bf16.msra.mxu0 0
    %188 = vmatprep.subr.bf16.mxu0 0
    %189 = vmatpush1.bf16.msra.mxu0 0
    %190 = vmatprep.subr.bf16.mxu0 0
    %191 = vmatpush1.bf16.msra.mxu0 0
    %192 = vmatprep.subr.bf16.mxu0 0
    %193 = vmatpush1.bf16.msra.mxu0 0
    %194 = vmatprep.subr.bf16.mxu0 0
    %195 = vmatpush1.bf16.msra.mxu0 0
    %196 = vmatprep.subr.bf16.mxu0 0
    %197 = vmatpush1.bf16.msra.mxu0 0
    %198 = vmatprep.mubr.bf16.mxu0 0
    %199 = vmatmul.mubr.bf16.gmra.mrb[0].mxu0 %v63
    %v200 = vpop.f32.mrb[0].mxu0
    %v201 = vadd.f32 %v161, %v200
    %v202 = vpop.f32.mrb[0].mxu0
    %v203 = vpop.f32.mrb[0].mxu0
    %v204 = vadd.f32 %v161, %v203
    %v205 = vpop.f32.mrb[0].mxu0
    %206 = vmatprep.mubr.bf16.mxu0 0
    %207 = vmatmul.mubr.bf16.gmra.mrb[0].mxu0 %v66
    %v208 = vpop.f32.mrb[0].mxu0
    %v209 = vadd.f32 %v161, %v208
    %v210 = vpop.f32.mrb[0].mxu0
    %v211 = vpop.f32.mrb[0].mxu0
    %v212 = vadd.f32 %v161, %v211
    %v213 = vpop.f32.mrb[0].mxu0
    %214 = vmatprep.mubr.bf16.mxu0 0
    %215 = vmatmul.mubr.bf16.gmra.mrb[0].mxu0 %v69
    %v216 = vpop.f32.mrb[0].mxu0
    %v217 = vadd.f32 %v161, %v216
    %v218 = vpop.f32.mrb[0].mxu0
    %v219 = vpop.f32.mrb[0].mxu0
    %v220 = vadd.f32 %v161, %v219
    %v221 = vpop.f32.mrb[0].mxu0
    %222 = vmatprep.mubr.bf16.mxu0 0
    %223 = vmatmul.mubr.bf16.gmra.mrb[0].mxu0 %v72
    %v224 = vpop.f32.mrb[0].mxu0
    %v225 = vadd.f32 %v161, %v224
    %v226 = vpop.f32.mrb[0].mxu0
    %v227 = vpop.f32.mrb[0].mxu0
    %v228 = vadd.f32 %v161, %v227
    %v229 = vpop.f32.mrb[0].mxu0
    %230 = vdwg.mxu0
    %231 = vst.msk [vmem:[%s5] sm:$0xff] %vm146, %v201
    %232 = vst.msk [vmem:[%s5 + $0x8] sm:$0xff] %vm146, %v204
    %233 = vst.msk [vmem:[%s5 + $0x10] sm:$0xff] %vm146, %v209
    %234 = vst.msk [vmem:[%s5 + $0x18] sm:$0xff] %vm146, %v212
    %235 = vst.msk [vmem:[%s5 + $0x20] sm:$0xff] %vm146, %v217
    %236 = vst.msk [vmem:[%s5 + $0x28] sm:$0xff] %vm146, %v220
    %237 = vst.msk [vmem:[%s5 + $0x30] sm:$0xff] %vm146, %v225
    %238 = vst.msk [vmem:[%s5 + $0x38] sm:$0xff] %vm146, %v228
    // Predicated region
    $region22: #{dgcnn_forward.5} parent=1 // pred_check
      _
    $region23: #{dgcnn_forward.5} parent=1 // pred_check_branch
      %240 = sbr.rel (0) target = $region25
    $region24: #{dgcnn_forward.5} parent=1 // pred_region
      _
    $region25: #{dgcnn_forward.5} parent=1 // pred_fallthru
      _
    // Predicated region
    $region26: #{dgcnn_forward.5} parent=1 // pred_check
      _
    $region27: #{dgcnn_forward.5} parent=1 // pred_check_branch
      %242 = sbr.rel (0) target = $region29
    $region28: #{dgcnn_forward.5} parent=1 // pred_region
      _
    $region29: #{dgcnn_forward.5} parent=1 // pred_fallthru
      _
    // Predicated region
    $region30: #{dgcnn_forward.5} parent=1 // pred_check
      _
    $region31: #{dgcnn_forward.5} parent=1 // pred_check_branch
      %244 = sbr.rel (0) target = $region33
    $region32: #{dgcnn_forward.5} parent=1 // pred_region
      _
    $region33: #{dgcnn_forward.5} parent=1 // pred_fallthru
      _
    // Predicated region
    $region34: #{dgcnn_forward.5} parent=1 // pred_check
      _
    $region35: #{dgcnn_forward.5} parent=1 // pred_check_branch
      %246 = sbr.rel (0) target = $region37
    $region36: #{dgcnn_forward.5} parent=1 // pred_region
      _
    $region37: #{dgcnn_forward.5} parent=1 // pred_fallthru
      _
    %247 = vsyncpa [#allocation3], 1

// kernel: dgcnn_forward.6
$region0: #{dgcnn_forward.6}
  #allocation0 [shape = 'u32[]', space=smem, size = 0x4, offset = 0x4, fixed_abs, tag = 'smem constant byte address 0x4 - core index']
  #allocation1 [shape = 'u32[144,128]{1,0:T(1,128)}', space=vmem, size = 0x12000, scoped, tag = 'internal scratch']
  %s0 = inlined_call_operand.vmem [shape: bf16[64,64], index: 0, kind: input, shape index: {}]
  %s1 = inlined_call_operand.vmem [shape: bf16[64,64], index: 1, kind: input, shape index: {}]
  %s2 = inlined_call_operand.vmem [shape: bf16[64,64], index: 2, kind: input, shape index: {}]
  %s3 = inlined_call_operand.vmem [shape: f32[1,64], index: 3, kind: input, shape index: {}]
  %s4 = inlined_call_operand.vmem [shape: f32[64,64], index: 4, kind: output, shape index: {0}]
  %s5 = inlined_call_operand.vmem [shape: f32[64,64], index: 5, kind: output, shape index: {1}]
  %6 = xla_tuple %s4, %s5
  %s7 = sld [smem:[#allocation0]]
  $region34: #{dgcnn_forward.6} parent=0
    _
  %s9 = ssub.s32 1, %s7
  %s10 = scalar_select 0, %s9, %s7
  // Predicated region
  $region2: #{dgcnn_forward.6} parent=0 // pred_check
    _
  $region3: #{dgcnn_forward.6} parent=0 // pred_check_branch
    %12 = sbr.rel (0) target = $region5
  $region4: #{dgcnn_forward.6} parent=0 // pred_region
    _
  $region5: #{dgcnn_forward.6} parent=0 // pred_fallthru
    _
  // Predicated region
  $region6: #{dgcnn_forward.6} parent=0 // pred_check
    _
  $region7: #{dgcnn_forward.6} parent=0 // pred_check_branch
    %14 = sbr.rel (0) target = $region9
  $region8: #{dgcnn_forward.6} parent=0 // pred_region
    _
  $region9: #{dgcnn_forward.6} parent=0 // pred_fallthru
    _
  // Predicated region
  $region10: #{dgcnn_forward.6} parent=0 // pred_check
    _
  $region11: #{dgcnn_forward.6} parent=0 // pred_check_branch
    %16 = sbr.rel (0) target = $region13
  $region12: #{dgcnn_forward.6} parent=0 // pred_region
    _
  $region13: #{dgcnn_forward.6} parent=0 // pred_fallthru
    _
  // Predicated region
  $region14: #{dgcnn_forward.6} parent=0 // pred_check
    _
  $region15: #{dgcnn_forward.6} parent=0 // pred_check_branch
    %18 = sbr.rel (0) target = $region17
  $region16: #{dgcnn_forward.6} parent=0 // pred_region
    _
  $region17: #{dgcnn_forward.6} parent=0 // pred_fallthru
    _
  %v20 = vld [vmem:[%s0] sm:$0xf]
  %v21 = vld [vmem:[%s0 + $0x4] sm:$0xf]
  %v22 = vld [vmem:[%s0 + $0x8] sm:$0xf]
  %v23 = vld [vmem:[%s0 + $0xc] sm:$0xf]
  %v24 = vld [vmem:[%s0 + $0x10] sm:$0xf]
  %v25 = vld [vmem:[%s0 + $0x14] sm:$0xf]
  %v26 = vld [vmem:[%s0 + $0x18] sm:$0xf]
  %v27 = vld [vmem:[%s0 + $0x1c] sm:$0xf]
  %v28 = vld [vmem:[%s1] sm:$0xf]
  %v29 = vld [vmem:[%s1 + $0x4] sm:$0xf]
  %v30 = vld [vmem:[%s1 + $0x8] sm:$0xf]
  %v31 = vld [vmem:[%s1 + $0xc] sm:$0xf]
  %v32 = vld [vmem:[%s1 + $0x10] sm:$0xf]
  %v33 = vld [vmem:[%s1 + $0x14] sm:$0xf]
  %v34 = vld [vmem:[%s1 + $0x18] sm:$0xf]
  %v35 = vld [vmem:[%s1 + $0x1c] sm:$0xf]
  %v44 = vunpack.c.l.b16 %v20
  %v45 = vunpack.c.l.b16 %v21
  %v46 = vunpack.c.l.b16 %v22
  %v47 = vunpack.c.l.b16 %v23
  %v48 = vunpack.c.l.b16 %v24
  %v49 = vunpack.c.l.b16 %v25
  %v50 = vunpack.c.l.b16 %v26
  %v51 = vunpack.c.l.b16 %v27
  %v52 = vpack.c.b16 %v45, %v44
  %v53 = vpack.c.b16 %v47, %v46
  %v54 = vpack.c.b16 %v49, %v48
  %v55 = vpack.c.b16 %v51, %v50
  %v64 = vunpack.c.l.b16 %v28
  %v65 = vunpack.c.l.b16 %v29
  %v66 = vunpack.c.l.b16 %v30
  %v67 = vunpack.c.l.b16 %v31
  %v68 = vunpack.c.l.b16 %v32
  %v69 = vunpack.c.l.b16 %v33
  %v70 = vunpack.c.l.b16 %v34
  %v71 = vunpack.c.l.b16 %v35
  %v72 = vpack.c.b16 %v65, %v64
  %v73 = vpack.c.b16 %v67, %v66
  %v74 = vpack.c.b16 %v69, %v68
  %v75 = vpack.c.b16 %v71, %v70
  %vm80 = vcmask 523264
  %v82 = vsel %vm80, %v52, 0
  %v85 = vsel %vm80, %v53, 0
  %v88 = vsel %vm80, %v54, 0
  %v91 = vsel %vm80, %v55, 0
  %93 = vmatprep.subr.bf16.mxu0 0
  %94 = vmatpush1.bf16.msra.mxu0 %v72
  %95 = vmatprep.subr.bf16.mxu0 0
  %96 = vmatpush1.bf16.msra.mxu0 %v73
  %97 = vmatprep.subr.bf16.mxu0 0
  %98 = vmatpush1.bf16.msra.mxu0 %v74
  %99 = vmatprep.subr.bf16.mxu0 0
  %100 = vmatpush1.bf16.msra.mxu0 %v75
  %101 = vmatprep.subr.bf16.mxu0 0
  %102 = vmatpush1.bf16.msra.mxu0 0
  %103 = vmatprep.subr.bf16.mxu0 0
  %104 = vmatpush1.bf16.msra.mxu0 0
  %105 = vmatprep.subr.bf16.mxu0 0
  %106 = vmatpush1.bf16.msra.mxu0 0
  %107 = vmatprep.subr.bf16.mxu0 0
  %108 = vmatpush1.bf16.msra.mxu0 0
  %109 = vmatprep.subr.bf16.mxu0 0
  %110 = vmatpush1.bf16.msra.mxu0 0
  %111 = vmatprep.subr.bf16.mxu0 0
  %112 = vmatpush1.bf16.msra.mxu0 0
  %113 = vmatprep.subr.bf16.mxu0 0
  %114 = vmatpush1.bf16.msra.mxu0 0
  %115 = vmatprep.subr.bf16.mxu0 0
  %116 = vmatpush1.bf16.msra.mxu0 0
  %117 = vmatprep.subr.bf16.mxu0 0
  %118 = vmatpush1.bf16.msra.mxu0 0
  %119 = vmatprep.subr.bf16.mxu0 0
  %120 = vmatpush1.bf16.msra.mxu0 0
  %121 = vmatprep.subr.bf16.mxu0 0
  %122 = vmatpush1.bf16.msra.mxu0 0
  %123 = vmatprep.subr.bf16.mxu0 0
  %124 = vmatpush1.bf16.msra.mxu0 0
  %125 = vmatprep.mubr.bf16.mxu0 0
  %126 = vmatmul.mubr.bf16.gmra.mrb[0].mxu0 %v82
  %v127 = vpop.f32.mrb[0].mxu0
  %v128 = vadd.f32 0.0, %v127
  %v129 = vpop.f32.mrb[0].mxu0
  %v130 = vpop.f32.mrb[0].mxu0
  %v131 = vadd.f32 0.0, %v130
  %v132 = vpop.f32.mrb[0].mxu0
  %133 = vmatprep.mubr.bf16.mxu0 0
  %134 = vmatmul.mubr.bf16.gmra.mrb[0].mxu0 %v85
  %v135 = vpop.f32.mrb[0].mxu0
  %v136 = vadd.f32 0.0, %v135
  %v137 = vpop.f32.mrb[0].mxu0
  %v138 = vpop.f32.mrb[0].mxu0
  %v139 = vadd.f32 0.0, %v138
  %v140 = vpop.f32.mrb[0].mxu0
  %141 = vmatprep.mubr.bf16.mxu0 0
  %142 = vmatmul.mubr.bf16.gmra.mrb[0].mxu0 %v88
  %v143 = vpop.f32.mrb[0].mxu0
  %v144 = vadd.f32 0.0, %v143
  %v145 = vpop.f32.mrb[0].mxu0
  %v146 = vpop.f32.mrb[0].mxu0
  %v147 = vadd.f32 0.0, %v146
  %v148 = vpop.f32.mrb[0].mxu0
  %149 = vmatprep.mubr.bf16.mxu0 0
  %150 = vmatmul.mubr.bf16.gmra.mrb[0].mxu0 %v91
  %v151 = vpop.f32.mrb[0].mxu0
  %v152 = vadd.f32 0.0, %v151
  %v153 = vpop.f32.mrb[0].mxu0
  %v154 = vpop.f32.mrb[0].mxu0
  %v155 = vadd.f32 0.0, %v154
  %v156 = vpop.f32.mrb[0].mxu0
  %157 = vdwg.mxu0
  %158 = vst.msk [vmem:[%s4] sm:$0xff] %vm80, %v128
  %159 = vst.msk [vmem:[%s4 + $0x8] sm:$0xff] %vm80, %v131
  %160 = vst.msk [vmem:[%s4 + $0x10] sm:$0xff] %vm80, %v136
  %161 = vst.msk [vmem:[%s4 + $0x18] sm:$0xff] %vm80, %v139
  %162 = vst.msk [vmem:[%s4 + $0x20] sm:$0xff] %vm80, %v144
  %163 = vst.msk [vmem:[%s4 + $0x28] sm:$0xff] %vm80, %v147
  %164 = vst.msk [vmem:[%s4 + $0x30] sm:$0xff] %vm80, %v152
  %165 = vst.msk [vmem:[%s4 + $0x38] sm:$0xff] %vm80, %v155
  %v166 = vld [vmem:[%s2] sm:$0xf]
  %v167 = vld [vmem:[%s2 + $0x4] sm:$0xf]
  %v168 = vld [vmem:[%s2 + $0x8] sm:$0xf]
  %v169 = vld [vmem:[%s2 + $0xc] sm:$0xf]
  %v170 = vld [vmem:[%s2 + $0x10] sm:$0xf]
  %v171 = vld [vmem:[%s2 + $0x14] sm:$0xf]
  %v172 = vld [vmem:[%s2 + $0x18] sm:$0xf]
  %v173 = vld [vmem:[%s2 + $0x1c] sm:$0xf]
  %v174 = vld [vmem:[%s3] sm:$0x1]
  %v176 = vlaneseq
  %v177 = vshrl.u32 %v176, 7
  %v178 = vsub.s32 0, %v177
  %v179 = vrot.slane %v174, %v178
  %v189 = vunpack.c.l.b16 %v166
  %v190 = vunpack.c.l.b16 %v167
  %v191 = vunpack.c.l.b16 %v168
  %v192 = vunpack.c.l.b16 %v169
  %v193 = vunpack.c.l.b16 %v170
  %v194 = vunpack.c.l.b16 %v171
  %v195 = vunpack.c.l.b16 %v172
  %v196 = vunpack.c.l.b16 %v173
  %v197 = vpack.c.b16 %v190, %v189
  %v198 = vpack.c.b16 %v192, %v191
  %v199 = vpack.c.b16 %v194, %v193
  %v200 = vpack.c.b16 %v196, %v195
  %205 = vmatprep.subr.bf16.mxu0 0
  %206 = vmatpush1.bf16.msra.mxu0 %v197
  %207 = vmatprep.subr.bf16.mxu0 0
  %208 = vmatpush1.bf16.msra.mxu0 %v198
  %209 = vmatprep.subr.bf16.mxu0 0
  %210 = vmatpush1.bf16.msra.mxu0 %v199
  %211 = vmatprep.subr.bf16.mxu0 0
  %212 = vmatpush1.bf16.msra.mxu0 %v200
  %213 = vmatprep.subr.bf16.mxu0 0
  %214 = vmatpush1.bf16.msra.mxu0 0
  %215 = vmatprep.subr.bf16.mxu0 0
  %216 = vmatpush1.bf16.msra.mxu0 0
  %217 = vmatprep.subr.bf16.mxu0 0
  %218 = vmatpush1.bf16.msra.mxu0 0
  %219 = vmatprep.subr.bf16.mxu0 0
  %220 = vmatpush1.bf16.msra.mxu0 0
  %221 = vmatprep.subr.bf16.mxu0 0
  %222 = vmatpush1.bf16.msra.mxu0 0
  %223 = vmatprep.subr.bf16.mxu0 0
  %224 = vmatpush1.bf16.msra.mxu0 0
  %225 = vmatprep.subr.bf16.mxu0 0
  %226 = vmatpush1.bf16.msra.mxu0 0
  %227 = vmatprep.subr.bf16.mxu0 0
  %228 = vmatpush1.bf16.msra.mxu0 0
  %229 = vmatprep.subr.bf16.mxu0 0
  %230 = vmatpush1.bf16.msra.mxu0 0
  %231 = vmatprep.subr.bf16.mxu0 0
  %232 = vmatpush1.bf16.msra.mxu0 0
  %233 = vmatprep.subr.bf16.mxu0 0
  %234 = vmatpush1.bf16.msra.mxu0 0
  %235 = vmatprep.subr.bf16.mxu0 0
  %236 = vmatpush1.bf16.msra.mxu0 0
  %237 = vmatprep.mubr.bf16.mxu0 0
  %238 = vmatmul.mubr.bf16.gmra.mrb[0].mxu0 %v82
  %v239 = vpop.f32.mrb[0].mxu0
  %v240 = vadd.f32 %v179, %v239
  %v241 = vpop.f32.mrb[0].mxu0
  %v242 = vpop.f32.mrb[0].mxu0
  %v243 = vadd.f32 %v179, %v242
  %v244 = vpop.f32.mrb[0].mxu0
  %245 = vmatprep.mubr.bf16.mxu0 0
  %246 = vmatmul.mubr.bf16.gmra.mrb[0].mxu0 %v85
  %v247 = vpop.f32.mrb[0].mxu0
  %v248 = vadd.f32 %v179, %v247
  %v249 = vpop.f32.mrb[0].mxu0
  %v250 = vpop.f32.mrb[0].mxu0
  %v251 = vadd.f32 %v179, %v250
  %v252 = vpop.f32.mrb[0].mxu0
  %253 = vmatprep.mubr.bf16.mxu0 0
  %254 = vmatmul.mubr.bf16.gmra.mrb[0].mxu0 %v88
  %v255 = vpop.f32.mrb[0].mxu0
  %v256 = vadd.f32 %v179, %v255
  %v257 = vpop.f32.mrb[0].mxu0
  %v258 = vpop.f32.mrb[0].mxu0
  %v259 = vadd.f32 %v179, %v258
  %v260 = vpop.f32.mrb[0].mxu0
  %261 = vmatprep.mubr.bf16.mxu0 0
  %262 = vmatmul.mubr.bf16.gmra.mrb[0].mxu0 %v91
  %v263 = vpop.f32.mrb[0].mxu0
  %v264 = vadd.f32 %v179, %v263
  %v265 = vpop.f32.mrb[0].mxu0
  %v266 = vpop.f32.mrb[0].mxu0
  %v267 = vadd.f32 %v179, %v266
  %v268 = vpop.f32.mrb[0].mxu0
  %269 = vdwg.mxu0
  %270 = vst.msk [vmem:[%s5] sm:$0xff] %vm80, %v240
  %271 = vst.msk [vmem:[%s5 + $0x8] sm:$0xff] %vm80, %v243
  %272 = vst.msk [vmem:[%s5 + $0x10] sm:$0xff] %vm80, %v248
  %273 = vst.msk [vmem:[%s5 + $0x18] sm:$0xff] %vm80, %v251
  %274 = vst.msk [vmem:[%s5 + $0x20] sm:$0xff] %vm80, %v256
  %275 = vst.msk [vmem:[%s5 + $0x28] sm:$0xff] %vm80, %v259
  %276 = vst.msk [vmem:[%s5 + $0x30] sm:$0xff] %vm80, %v264
  %277 = vst.msk [vmem:[%s5 + $0x38] sm:$0xff] %vm80, %v267
  // Predicated region
  $region18: #{dgcnn_forward.6} parent=0 // pred_check
    _
  $region19: #{dgcnn_forward.6} parent=0 // pred_check_branch
    %279 = sbr.rel (0) target = $region21
  $region20: #{dgcnn_forward.6} parent=0 // pred_region
    _
  $region21: #{dgcnn_forward.6} parent=0 // pred_fallthru
    _
  // Predicated region
  $region22: #{dgcnn_forward.6} parent=0 // pred_check
    _
  $region23: #{dgcnn_forward.6} parent=0 // pred_check_branch
    %281 = sbr.rel (0) target = $region25
  $region24: #{dgcnn_forward.6} parent=0 // pred_region
    _
  $region25: #{dgcnn_forward.6} parent=0 // pred_fallthru
    _
  // Predicated region
  $region26: #{dgcnn_forward.6} parent=0 // pred_check
    _
  $region27: #{dgcnn_forward.6} parent=0 // pred_check_branch
    %283 = sbr.rel (0) target = $region29
  $region28: #{dgcnn_forward.6} parent=0 // pred_region
    _
  $region29: #{dgcnn_forward.6} parent=0 // pred_fallthru
    _
  // Predicated region
  $region30: #{dgcnn_forward.6} parent=0 // pred_check
    _
  $region31: #{dgcnn_forward.6} parent=0 // pred_check_branch
    %285 = sbr.rel (0) target = $region33
  $region32: #{dgcnn_forward.6} parent=0 // pred_region
    _
  $region33: #{dgcnn_forward.6} parent=0 // pred_fallthru
    _

// kernel: dgcnn_forward.7
$region0: #{dgcnn_forward.7}
  #allocation0 [shape = 'u32[]', space=smem, size = 0x4, offset = 0x4, fixed_abs, tag = 'smem constant byte address 0x4 - core index']
  #allocation1 [shape = 'u32[144,128]{1,0:T(1,128)}', space=vmem, size = 0x12000, scoped, tag = 'internal scratch']
  %s0 = inlined_call_operand.vmem [shape: bf16[64,64], index: 0, kind: input, shape index: {}]
  %s1 = inlined_call_operand.vmem [shape: bf16[64,128], index: 1, kind: input, shape index: {}]
  %s2 = inlined_call_operand.vmem [shape: bf16[64,128], index: 2, kind: input, shape index: {}]
  %s3 = inlined_call_operand.vmem [shape: f32[1,128], index: 3, kind: input, shape index: {}]
  %s4 = inlined_call_operand.vmem [shape: f32[64,128], index: 4, kind: output, shape index: {0}]
  %s5 = inlined_call_operand.vmem [shape: f32[64,128], index: 5, kind: output, shape index: {1}]
  %6 = xla_tuple %s4, %s5
  %s7 = sld [smem:[#allocation0]]
  $region34: #{dgcnn_forward.7} parent=0
    _
  %s9 = ssub.s32 1, %s7
  %s10 = scalar_select 0, %s9, %s7
  // Predicated region
  $region2: #{dgcnn_forward.7} parent=0 // pred_check
    _
  $region3: #{dgcnn_forward.7} parent=0 // pred_check_branch
    %12 = sbr.rel (0) target = $region5
  $region4: #{dgcnn_forward.7} parent=0 // pred_region
    _
  $region5: #{dgcnn_forward.7} parent=0 // pred_fallthru
    _
  // Predicated region
  $region6: #{dgcnn_forward.7} parent=0 // pred_check
    _
  $region7: #{dgcnn_forward.7} parent=0 // pred_check_branch
    %14 = sbr.rel (0) target = $region9
  $region8: #{dgcnn_forward.7} parent=0 // pred_region
    _
  $region9: #{dgcnn_forward.7} parent=0 // pred_fallthru
    _
  // Predicated region
  $region10: #{dgcnn_forward.7} parent=0 // pred_check
    _
  $region11: #{dgcnn_forward.7} parent=0 // pred_check_branch
    %16 = sbr.rel (0) target = $region13
  $region12: #{dgcnn_forward.7} parent=0 // pred_region
    _
  $region13: #{dgcnn_forward.7} parent=0 // pred_fallthru
    _
  // Predicated region
  $region14: #{dgcnn_forward.7} parent=0 // pred_check
    _
  $region15: #{dgcnn_forward.7} parent=0 // pred_check_branch
    %18 = sbr.rel (0) target = $region17
  $region16: #{dgcnn_forward.7} parent=0 // pred_region
    _
  $region17: #{dgcnn_forward.7} parent=0 // pred_fallthru
    _
  %v20 = vld [vmem:[%s0] sm:$0xf]
  %v21 = vld [vmem:[%s0 + $0x4] sm:$0xf]
  %v22 = vld [vmem:[%s0 + $0x8] sm:$0xf]
  %v23 = vld [vmem:[%s0 + $0xc] sm:$0xf]
  %v24 = vld [vmem:[%s0 + $0x10] sm:$0xf]
  %v25 = vld [vmem:[%s0 + $0x14] sm:$0xf]
  %v26 = vld [vmem:[%s0 + $0x18] sm:$0xf]
  %v27 = vld [vmem:[%s0 + $0x1c] sm:$0xf]
  %v28 = vld [vmem:[%s1] sm:$0xf]
  %v29 = vld [vmem:[%s1 + $0x4] sm:$0xf]
  %v30 = vld [vmem:[%s1 + $0x8] sm:$0xf]
  %v31 = vld [vmem:[%s1 + $0xc] sm:$0xf]
  %v32 = vld [vmem:[%s1 + $0x10] sm:$0xf]
  %v33 = vld [vmem:[%s1 + $0x14] sm:$0xf]
  %v34 = vld [vmem:[%s1 + $0x18] sm:$0xf]
  %v35 = vld [vmem:[%s1 + $0x1c] sm:$0xf]
  %v44 = vunpack.c.l.b16 %v20
  %v45 = vunpack.c.l.b16 %v21
  %v46 = vunpack.c.l.b16 %v22
  %v47 = vunpack.c.l.b16 %v23
  %v48 = vunpack.c.l.b16 %v24
  %v49 = vunpack.c.l.b16 %v25
  %v50 = vunpack.c.l.b16 %v26
  %v51 = vunpack.c.l.b16 %v27
  %v52 = vpack.c.b16 %v45, %v44
  %v53 = vpack.c.b16 %v47, %v46
  %v54 = vpack.c.b16 %v49, %v48
  %v55 = vpack.c.b16 %v51, %v50
  %v64 = vunpack.c.l.b16 %v28
  %v65 = vunpack.c.l.b16 %v29
  %v66 = vunpack.c.l.b16 %v30
  %v67 = vunpack.c.l.b16 %v31
  %v68 = vunpack.c.l.b16 %v32
  %v69 = vunpack.c.l.b16 %v33
  %v70 = vunpack.c.l.b16 %v34
  %v71 = vunpack.c.l.b16 %v35
  %v72 = vpack.c.b16 %v65, %v64
  %v73 = vpack.c.b16 %v67, %v66
  %v74 = vpack.c.b16 %v69, %v68
  %v75 = vpack.c.b16 %v71, %v70
  %vm80 = vcmask 523264
  %v82 = vsel %vm80, %v52, 0
  %v85 = vsel %vm80, %v53, 0
  %v88 = vsel %vm80, %v54, 0
  %v91 = vsel %vm80, %v55, 0
  %93 = vmatprep.subr.bf16.mxu0 0
  %94 = vmatpush1.bf16.msra.mxu0 %v72
  %95 = vmatprep.subr.bf16.mxu0 0
  %96 = vmatpush1.bf16.msra.mxu0 %v73
  %97 = vmatprep.subr.bf16.mxu0 0
  %98 = vmatpush1.bf16.msra.mxu0 %v74
  %99 = vmatprep.subr.bf16.mxu0 0
  %100 = vmatpush1.bf16.msra.mxu0 %v75
  %101 = vmatprep.subr.bf16.mxu0 0
  %102 = vmatpush1.bf16.msra.mxu0 0
  %103 = vmatprep.subr.bf16.mxu0 0
  %104 = vmatpush1.bf16.msra.mxu0 0
  %105 = vmatprep.subr.bf16.mxu0 0
  %106 = vmatpush1.bf16.msra.mxu0 0
  %107 = vmatprep.subr.bf16.mxu0 0
  %108 = vmatpush1.bf16.msra.mxu0 0
  %109 = vmatprep.subr.bf16.mxu0 0
  %110 = vmatpush1.bf16.msra.mxu0 0
  %111 = vmatprep.subr.bf16.mxu0 0
  %112 = vmatpush1.bf16.msra.mxu0 0
  %113 = vmatprep.subr.bf16.mxu0 0
  %114 = vmatpush1.bf16.msra.mxu0 0
  %115 = vmatprep.subr.bf16.mxu0 0
  %116 = vmatpush1.bf16.msra.mxu0 0
  %117 = vmatprep.subr.bf16.mxu0 0
  %118 = vmatpush1.bf16.msra.mxu0 0
  %119 = vmatprep.subr.bf16.mxu0 0
  %120 = vmatpush1.bf16.msra.mxu0 0
  %121 = vmatprep.subr.bf16.mxu0 0
  %122 = vmatpush1.bf16.msra.mxu0 0
  %123 = vmatprep.subr.bf16.mxu0 0
  %124 = vmatpush1.bf16.msra.mxu0 0
  %125 = vmatprep.mubr.bf16.mxu0 0
  %126 = vmatmul.mubr.bf16.gmra.mrb[0].mxu0 %v82
  %v127 = vpop.f32.mrb[0].mxu0
  %v128 = vadd.f32 0.0, %v127
  %v129 = vpop.f32.mrb[0].mxu0
  %v130 = vpop.f32.mrb[0].mxu0
  %v131 = vadd.f32 0.0, %v130
  %v132 = vpop.f32.mrb[0].mxu0
  %133 = vmatprep.mubr.bf16.mxu0 0
  %134 = vmatmul.mubr.bf16.gmra.mrb[0].mxu0 %v85
  %v135 = vpop.f32.mrb[0].mxu0
  %v136 = vadd.f32 0.0, %v135
  %v137 = vpop.f32.mrb[0].mxu0
  %v138 = vpop.f32.mrb[0].mxu0
  %v139 = vadd.f32 0.0, %v138
  %v140 = vpop.f32.mrb[0].mxu0
  %141 = vmatprep.mubr.bf16.mxu0 0
  %142 = vmatmul.mubr.bf16.gmra.mrb[0].mxu0 %v88
  %v143 = vpop.f32.mrb[0].mxu0
  %v144 = vadd.f32 0.0, %v143
  %v145 = vpop.f32.mrb[0].mxu0
  %v146 = vpop.f32.mrb[0].mxu0
  %v147 = vadd.f32 0.0, %v146
  %v148 = vpop.f32.mrb[0].mxu0
  %149 = vmatprep.mubr.bf16.mxu0 0
  %150 = vmatmul.mubr.bf16.gmra.mrb[0].mxu0 %v91
  %v151 = vpop.f32.mrb[0].mxu0
  %v152 = vadd.f32 0.0, %v151
  %v153 = vpop.f32.mrb[0].mxu0
  %v154 = vpop.f32.mrb[0].mxu0
  %v155 = vadd.f32 0.0, %v154
  %v156 = vpop.f32.mrb[0].mxu0
  %157 = vdwg.mxu0
  %158 = vst [vmem:[%s4] sm:$0xff] %v128
  %159 = vst [vmem:[%s4 + $0x8] sm:$0xff] %v131
  %160 = vst [vmem:[%s4 + $0x10] sm:$0xff] %v136
  %161 = vst [vmem:[%s4 + $0x18] sm:$0xff] %v139
  %162 = vst [vmem:[%s4 + $0x20] sm:$0xff] %v144
  %163 = vst [vmem:[%s4 + $0x28] sm:$0xff] %v147
  %164 = vst [vmem:[%s4 + $0x30] sm:$0xff] %v152
  %165 = vst [vmem:[%s4 + $0x38] sm:$0xff] %v155
  %v166 = vld [vmem:[%s2] sm:$0xf]
  %v167 = vld [vmem:[%s2 + $0x4] sm:$0xf]
  %v168 = vld [vmem:[%s2 + $0x8] sm:$0xf]
  %v169 = vld [vmem:[%s2 + $0xc] sm:$0xf]
  %v170 = vld [vmem:[%s2 + $0x10] sm:$0xf]
  %v171 = vld [vmem:[%s2 + $0x14] sm:$0xf]
  %v172 = vld [vmem:[%s2 + $0x18] sm:$0xf]
  %v173 = vld [vmem:[%s2 + $0x1c] sm:$0xf]
  %v174 = vld [vmem:[%s3] sm:$0x1]
  %v176 = vlaneseq
  %v177 = vshrl.u32 %v176, 7
  %v178 = vsub.s32 0, %v177
  %v179 = vrot.slane %v174, %v178
  %v189 = vunpack.c.l.b16 %v166
  %v190 = vunpack.c.l.b16 %v167
  %v191 = vunpack.c.l.b16 %v168
  %v192 = vunpack.c.l.b16 %v169
  %v193 = vunpack.c.l.b16 %v170
  %v194 = vunpack.c.l.b16 %v171
  %v195 = vunpack.c.l.b16 %v172
  %v196 = vunpack.c.l.b16 %v173
  %v197 = vpack.c.b16 %v190, %v189
  %v198 = vpack.c.b16 %v192, %v191
  %v199 = vpack.c.b16 %v194, %v193
  %v200 = vpack.c.b16 %v196, %v195
  %205 = vmatprep.subr.bf16.mxu0 0
  %206 = vmatpush1.bf16.msra.mxu0 %v197
  %207 = vmatprep.subr.bf16.mxu0 0
  %208 = vmatpush1.bf16.msra.mxu0 %v198
  %209 = vmatprep.subr.bf16.mxu0 0
  %210 = vmatpush1.bf16.msra.mxu0 %v199
  %211 = vmatprep.subr.bf16.mxu0 0
  %212 = vmatpush1.bf16.msra.mxu0 %v200
  %213 = vmatprep.subr.bf16.mxu0 0
  %214 = vmatpush1.bf16.msra.mxu0 0
  %215 = vmatprep.subr.bf16.mxu0 0
  %216 = vmatpush1.bf16.msra.mxu0 0
  %217 = vmatprep.subr.bf16.mxu0 0
  %218 = vmatpush1.bf16.msra.mxu0 0
  %219 = vmatprep.subr.bf16.mxu0 0
  %220 = vmatpush1.bf16.msra.mxu0 0
  %221 = vmatprep.subr.bf16.mxu0 0
  %222 = vmatpush1.bf16.msra.mxu0 0
  %223 = vmatprep.subr.bf16.mxu0 0
  %224 = vmatpush1.bf16.msra.mxu0 0
  %225 = vmatprep.subr.bf16.mxu0 0
  %226 = vmatpush1.bf16.msra.mxu0 0
  %227 = vmatprep.subr.bf16.mxu0 0
  %228 = vmatpush1.bf16.msra.mxu0 0
  %229 = vmatprep.subr.bf16.mxu0 0
  %230 = vmatpush1.bf16.msra.mxu0 0
  %231 = vmatprep.subr.bf16.mxu0 0
  %232 = vmatpush1.bf16.msra.mxu0 0
  %233 = vmatprep.subr.bf16.mxu0 0
  %234 = vmatpush1.bf16.msra.mxu0 0
  %235 = vmatprep.subr.bf16.mxu0 0
  %236 = vmatpush1.bf16.msra.mxu0 0
  %237 = vmatprep.mubr.bf16.mxu0 0
  %238 = vmatmul.mubr.bf16.gmra.mrb[0].mxu0 %v82
  %v239 = vpop.f32.mrb[0].mxu0
  %v240 = vadd.f32 %v179, %v239
  %v241 = vpop.f32.mrb[0].mxu0
  %v242 = vpop.f32.mrb[0].mxu0
  %v243 = vadd.f32 %v179, %v242
  %v244 = vpop.f32.mrb[0].mxu0
  %245 = vmatprep.mubr.bf16.mxu0 0
  %246 = vmatmul.mubr.bf16.gmra.mrb[0].mxu0 %v85
  %v247 = vpop.f32.mrb[0].mxu0
  %v248 = vadd.f32 %v179, %v247
  %v249 = vpop.f32.mrb[0].mxu0
  %v250 = vpop.f32.mrb[0].mxu0
  %v251 = vadd.f32 %v179, %v250
  %v252 = vpop.f32.mrb[0].mxu0
  %253 = vmatprep.mubr.bf16.mxu0 0
  %254 = vmatmul.mubr.bf16.gmra.mrb[0].mxu0 %v88
  %v255 = vpop.f32.mrb[0].mxu0
  %v256 = vadd.f32 %v179, %v255
  %v257 = vpop.f32.mrb[0].mxu0
  %v258 = vpop.f32.mrb[0].mxu0
  %v259 = vadd.f32 %v179, %v258
  %v260 = vpop.f32.mrb[0].mxu0
  %261 = vmatprep.mubr.bf16.mxu0 0
  %262 = vmatmul.mubr.bf16.gmra.mrb[0].mxu0 %v91
  %v263 = vpop.f32.mrb[0].mxu0
  %v264 = vadd.f32 %v179, %v263
  %v265 = vpop.f32.mrb[0].mxu0
  %v266 = vpop.f32.mrb[0].mxu0
  %v267 = vadd.f32 %v179, %v266
  %v268 = vpop.f32.mrb[0].mxu0
  %269 = vdwg.mxu0
  %270 = vst [vmem:[%s5] sm:$0xff] %v240
  %271 = vst [vmem:[%s5 + $0x8] sm:$0xff] %v243
  %272 = vst [vmem:[%s5 + $0x10] sm:$0xff] %v248
  %273 = vst [vmem:[%s5 + $0x18] sm:$0xff] %v251
  %274 = vst [vmem:[%s5 + $0x20] sm:$0xff] %v256
  %275 = vst [vmem:[%s5 + $0x28] sm:$0xff] %v259
  %276 = vst [vmem:[%s5 + $0x30] sm:$0xff] %v264
  %277 = vst [vmem:[%s5 + $0x38] sm:$0xff] %v267
  // Predicated region
  $region18: #{dgcnn_forward.7} parent=0 // pred_check
    _
  $region19: #{dgcnn_forward.7} parent=0 // pred_check_branch
    %279 = sbr.rel (0) target = $region21
  $region20: #{dgcnn_forward.7} parent=0 // pred_region
    _
  $region21: #{dgcnn_forward.7} parent=0 // pred_fallthru
    _
  // Predicated region
  $region22: #{dgcnn_forward.7} parent=0 // pred_check
    _
  $region23: #{dgcnn_forward.7} parent=0 // pred_check_branch
    %281 = sbr.rel (0) target = $region25
  $region24: #{dgcnn_forward.7} parent=0 // pred_region
    _
  $region25: #{dgcnn_forward.7} parent=0 // pred_fallthru
    _
  // Predicated region
  $region26: #{dgcnn_forward.7} parent=0 // pred_check
    _
  $region27: #{dgcnn_forward.7} parent=0 // pred_check_branch
    %283 = sbr.rel (0) target = $region29
  $region28: #{dgcnn_forward.7} parent=0 // pred_region
    _
  $region29: #{dgcnn_forward.7} parent=0 // pred_fallthru
    _
  // Predicated region
  $region30: #{dgcnn_forward.7} parent=0 // pred_check
    _
  $region31: #{dgcnn_forward.7} parent=0 // pred_check_branch
    %285 = sbr.rel (0) target = $region33
  $region32: #{dgcnn_forward.7} parent=0 // pred_region
    _
  $region33: #{dgcnn_forward.7} parent=0 // pred_fallthru
    _

// kernel: dgcnn_forward.8
$region0: #{dgcnn_forward.8}
  #allocation0 [shape = 'u32[]', space=smem, size = 0x4, offset = 0x4, fixed_abs, tag = 'smem constant byte address 0x4 - core index']
  #allocation1 [shape = 'u32[144,128]{1,0:T(1,128)}', space=vmem, size = 0x12000, scoped, tag = 'internal scratch']
  %s0 = inlined_call_operand.vmem [shape: bf16[64,128], index: 0, kind: input, shape index: {}]
  %s1 = inlined_call_operand.vmem [shape: bf16[128,256], index: 1, kind: input, shape index: {}]
  %s2 = inlined_call_operand.vmem [shape: bf16[128,256], index: 2, kind: input, shape index: {}]
  %s3 = inlined_call_operand.vmem [shape: f32[1,256], index: 3, kind: input, shape index: {}]
  %s4 = inlined_call_operand.vmem [shape: f32[64,256], index: 4, kind: output, shape index: {0}]
  %s5 = inlined_call_operand.vmem [shape: f32[64,256], index: 5, kind: output, shape index: {1}]
  %6 = xla_tuple %s4, %s5
  %s7 = sld [smem:[#allocation0]]
  $region34: #{dgcnn_forward.8} parent=0
    _
  %s9 = ssub.s32 1, %s7
  %s10 = scalar_select 0, %s9, %s7
  // Predicated region
  $region2: #{dgcnn_forward.8} parent=0 // pred_check
    _
  $region3: #{dgcnn_forward.8} parent=0 // pred_check_branch
    %12 = sbr.rel (0) target = $region5
  $region4: #{dgcnn_forward.8} parent=0 // pred_region
    _
  $region5: #{dgcnn_forward.8} parent=0 // pred_fallthru
    _
  // Predicated region
  $region6: #{dgcnn_forward.8} parent=0 // pred_check
    _
  $region7: #{dgcnn_forward.8} parent=0 // pred_check_branch
    %14 = sbr.rel (0) target = $region9
  $region8: #{dgcnn_forward.8} parent=0 // pred_region
    _
  $region9: #{dgcnn_forward.8} parent=0 // pred_fallthru
    _
  // Predicated region
  $region10: #{dgcnn_forward.8} parent=0 // pred_check
    _
  $region11: #{dgcnn_forward.8} parent=0 // pred_check_branch
    %16 = sbr.rel (0) target = $region13
  $region12: #{dgcnn_forward.8} parent=0 // pred_region
    _
  $region13: #{dgcnn_forward.8} parent=0 // pred_fallthru
    _
  // Predicated region
  $region14: #{dgcnn_forward.8} parent=0 // pred_check
    _
  $region15: #{dgcnn_forward.8} parent=0 // pred_check_branch
    %18 = sbr.rel (0) target = $region17
  $region16: #{dgcnn_forward.8} parent=0 // pred_region
    _
  $region17: #{dgcnn_forward.8} parent=0 // pred_fallthru
    _
  %v20 = vld [vmem:[%s0] sm:$0xf]
  %v21 = vld [vmem:[%s0 + $0x4] sm:$0xf]
  %v22 = vld [vmem:[%s0 + $0x8] sm:$0xf]
  %v23 = vld [vmem:[%s0 + $0xc] sm:$0xf]
  %v24 = vld [vmem:[%s0 + $0x10] sm:$0xf]
  %v25 = vld [vmem:[%s0 + $0x14] sm:$0xf]
  %v26 = vld [vmem:[%s0 + $0x18] sm:$0xf]
  %v27 = vld [vmem:[%s0 + $0x1c] sm:$0xf]
  %v28 = vld [vmem:[%s1] sm:$0xff]
  %v29 = vld [vmem:[%s1 + $0x8] sm:$0xff]
  %v30 = vld [vmem:[%s1 + $0x10] sm:$0xff]
  %v31 = vld [vmem:[%s1 + $0x18] sm:$0xff]
  %v32 = vld [vmem:[%s1 + $0x20] sm:$0xff]
  %v33 = vld [vmem:[%s1 + $0x28] sm:$0xff]
  %v34 = vld [vmem:[%s1 + $0x30] sm:$0xff]
  %v35 = vld [vmem:[%s1 + $0x38] sm:$0xff]
  %v36 = vld [vmem:[%s1 + $0x40] sm:$0xff]
  %v37 = vld [vmem:[%s1 + $0x48] sm:$0xff]
  %v38 = vld [vmem:[%s1 + $0x50] sm:$0xff]
  %v39 = vld [vmem:[%s1 + $0x58] sm:$0xff]
  %v40 = vld [vmem:[%s1 + $0x60] sm:$0xff]
  %v41 = vld [vmem:[%s1 + $0x68] sm:$0xff]
  %v42 = vld [vmem:[%s1 + $0x70] sm:$0xff]
  %v43 = vld [vmem:[%s1 + $0x78] sm:$0xff]
  %v52 = vunpack.c.l.b16 %v20
  %v53 = vunpack.c.l.b16 %v21
  %v54 = vunpack.c.l.b16 %v22
  %v55 = vunpack.c.l.b16 %v23
  %v56 = vunpack.c.l.b16 %v24
  %v57 = vunpack.c.l.b16 %v25
  %v58 = vunpack.c.l.b16 %v26
  %v59 = vunpack.c.l.b16 %v27
  %v60 = vpack.c.b16 %v53, %v52
  %v61 = vpack.c.b16 %v55, %v54
  %v62 = vpack.c.b16 %v57, %v56
  %v63 = vpack.c.b16 %v59, %v58
  %v84 = vunpack.c.l.b16 %v28
  %v85 = vunpack.c.h.b16 %v28
  %v86 = vunpack.c.l.b16 %v29
  %v87 = vunpack.c.h.b16 %v29
  %v88 = vunpack.c.l.b16 %v30
  %v89 = vunpack.c.h.b16 %v30
  %v90 = vunpack.c.l.b16 %v31
  %v91 = vunpack.c.h.b16 %v31
  %v92 = vunpack.c.l.b16 %v32
  %v93 = vunpack.c.h.b16 %v32
  %v94 = vunpack.c.l.b16 %v33
  %v95 = vunpack.c.h.b16 %v33
  %v96 = vunpack.c.l.b16 %v34
  %v97 = vunpack.c.h.b16 %v34
  %v98 = vunpack.c.l.b16 %v35
  %v99 = vunpack.c.h.b16 %v35
  %v100 = vunpack.c.l.b16 %v36
  %v101 = vunpack.c.h.b16 %v36
  %v102 = vunpack.c.l.b16 %v37
  %v103 = vunpack.c.h.b16 %v37
  %v104 = vunpack.c.l.b16 %v38
  %v105 = vunpack.c.h.b16 %v38
  %v106 = vunpack.c.l.b16 %v39
  %v107 = vunpack.c.h.b16 %v39
  %v108 = vunpack.c.l.b16 %v40
  %v109 = vunpack.c.h.b16 %v40
  %v110 = vunpack.c.l.b16 %v41
  %v111 = vunpack.c.h.b16 %v41
  %v112 = vunpack.c.l.b16 %v42
  %v113 = vunpack.c.h.b16 %v42
  %v114 = vunpack.c.l.b16 %v43
  %v115 = vunpack.c.h.b16 %v43
  %v116 = vpack.c.b16 %v86, %v84
  %v117 = vpack.c.b16 %v87, %v85
  %v118 = vpack.c.b16 %v90, %v88
  %v119 = vpack.c.b16 %v91, %v89
  %v120 = vpack.c.b16 %v94, %v92
  %v121 = vpack.c.b16 %v95, %v93
  %v122 = vpack.c.b16 %v98, %v96
  %v123 = vpack.c.b16 %v99, %v97
  %v124 = vpack.c.b16 %v102, %v100
  %v125 = vpack.c.b16 %v103, %v101
  %v126 = vpack.c.b16 %v106, %v104
  %v127 = vpack.c.b16 %v107, %v105
  %v128 = vpack.c.b16 %v110, %v108
  %v129 = vpack.c.b16 %v111, %v109
  %v130 = vpack.c.b16 %v114, %v112
  %v131 = vpack.c.b16 %v115, %v113
  %148 = vmatprep.subr.bf16.mxu0 %v117
  %149 = vmatpush1.bf16.msra.mxu0 %v116
  %150 = vmatprep.subr.bf16.mxu0 %v119
  %151 = vmatpush1.bf16.msra.mxu0 %v118
  %152 = vmatprep.subr.bf16.mxu0 %v121
  %153 = vmatpush1.bf16.msra.mxu0 %v120
  %154 = vmatprep.subr.bf16.mxu0 %v123
  %155 = vmatpush1.bf16.msra.mxu0 %v122
  %156 = vmatprep.subr.bf16.mxu0 %v125
  %157 = vmatpush1.bf16.msra.mxu0 %v124
  %158 = vmatprep.subr.bf16.mxu0 %v127
  %159 = vmatpush1.bf16.msra.mxu0 %v126
  %160 = vmatprep.subr.bf16.mxu0 %v129
  %161 = vmatpush1.bf16.msra.mxu0 %v128
  %162 = vmatprep.subr.bf16.mxu0 %v131
  %163 = vmatpush1.bf16.msra.mxu0 %v130
  %164 = vmatprep.subr.bf16.mxu0 0
  %165 = vmatpush1.bf16.msra.mxu0 0
  %166 = vmatprep.subr.bf16.mxu0 0
  %167 = vmatpush1.bf16.msra.mxu0 0
  %168 = vmatprep.subr.bf16.mxu0 0
  %169 = vmatpush1.bf16.msra.mxu0 0
  %170 = vmatprep.subr.bf16.mxu0 0
  %171 = vmatpush1.bf16.msra.mxu0 0
  %172 = vmatprep.subr.bf16.mxu0 0
  %173 = vmatpush1.bf16.msra.mxu0 0
  %174 = vmatprep.subr.bf16.mxu0 0
  %175 = vmatpush1.bf16.msra.mxu0 0
  %176 = vmatprep.subr.bf16.mxu0 0
  %177 = vmatpush1.bf16.msra.mxu0 0
  %178 = vmatprep.subr.bf16.mxu0 0
  %179 = vmatpush1.bf16.msra.mxu0 0
  %180 = vmatprep.mubr.bf16.mxu0 0
  %181 = vmatmul.mubr.bf16.gmra.mrb[0].mxu0 %v60
  %v182 = vpop.f32.mrb[0].mxu0
  %v183 = vadd.f32 0.0, %v182
  %v184 = vpop.f32.mrb[0].mxu0
  %v185 = vadd.f32 0.0, %v184
  %v186 = vpop.f32.mrb[0].mxu0
  %v187 = vadd.f32 0.0, %v186
  %v188 = vpop.f32.mrb[0].mxu0
  %v189 = vadd.f32 0.0, %v188
  %190 = vmatprep.mubr.bf16.mxu0 0
  %191 = vmatmul.mubr.bf16.gmra.mrb[0].mxu0 %v61
  %v192 = vpop.f32.mrb[0].mxu0
  %v193 = vadd.f32 0.0, %v192
  %v194 = vpop.f32.mrb[0].mxu0
  %v195 = vadd.f32 0.0, %v194
  %v196 = vpop.f32.mrb[0].mxu0
  %v197 = vadd.f32 0.0, %v196
  %v198 = vpop.f32.mrb[0].mxu0
  %v199 = vadd.f32 0.0, %v198
  %200 = vmatprep.mubr.bf16.mxu0 0
  %201 = vmatmul.mubr.bf16.gmra.mrb[0].mxu0 %v62
  %v202 = vpop.f32.mrb[0].mxu0
  %v203 = vadd.f32 0.0, %v202
  %v204 = vpop.f32.mrb[0].mxu0
  %v205 = vadd.f32 0.0, %v204
  %v206 = vpop.f32.mrb[0].mxu0
  %v207 = vadd.f32 0.0, %v206
  %v208 = vpop.f32.mrb[0].mxu0
  %v209 = vadd.f32 0.0, %v208
  %210 = vmatprep.mubr.bf16.mxu0 0
  %211 = vmatmul.mubr.bf16.gmra.mrb[0].mxu0 %v63
  %v212 = vpop.f32.mrb[0].mxu0
  %v213 = vadd.f32 0.0, %v212
  %v214 = vpop.f32.mrb[0].mxu0
  %v215 = vadd.f32 0.0, %v214
  %v216 = vpop.f32.mrb[0].mxu0
  %v217 = vadd.f32 0.0, %v216
  %v218 = vpop.f32.mrb[0].mxu0
  %v219 = vadd.f32 0.0, %v218
  %220 = vdwg.mxu0
  %221 = vst [vmem:[%s4] sm:$0xff] %v183
  %222 = vst [vmem:[%s4 + $0x8] sm:$0xff] %v185
  %223 = vst [vmem:[%s4 + $0x10] sm:$0xff] %v187
  %224 = vst [vmem:[%s4 + $0x18] sm:$0xff] %v189
  %225 = vst [vmem:[%s4 + $0x20] sm:$0xff] %v193
  %226 = vst [vmem:[%s4 + $0x28] sm:$0xff] %v195
  %227 = vst [vmem:[%s4 + $0x30] sm:$0xff] %v197
  %228 = vst [vmem:[%s4 + $0x38] sm:$0xff] %v199
  %229 = vst [vmem:[%s4 + $0x40] sm:$0xff] %v203
  %230 = vst [vmem:[%s4 + $0x48] sm:$0xff] %v205
  %231 = vst [vmem:[%s4 + $0x50] sm:$0xff] %v207
  %232 = vst [vmem:[%s4 + $0x58] sm:$0xff] %v209
  %233 = vst [vmem:[%s4 + $0x60] sm:$0xff] %v213
  %234 = vst [vmem:[%s4 + $0x68] sm:$0xff] %v215
  %235 = vst [vmem:[%s4 + $0x70] sm:$0xff] %v217
  %236 = vst [vmem:[%s4 + $0x78] sm:$0xff] %v219
  %v237 = vld [vmem:[%s2] sm:$0xff]
  %v238 = vld [vmem:[%s2 + $0x8] sm:$0xff]
  %v239 = vld [vmem:[%s2 + $0x10] sm:$0xff]
  %v240 = vld [vmem:[%s2 + $0x18] sm:$0xff]
  %v241 = vld [vmem:[%s2 + $0x20] sm:$0xff]
  %v242 = vld [vmem:[%s2 + $0x28] sm:$0xff]
  %v243 = vld [vmem:[%s2 + $0x30] sm:$0xff]
  %v244 = vld [vmem:[%s2 + $0x38] sm:$0xff]
  %v245 = vld [vmem:[%s2 + $0x40] sm:$0xff]
  %v246 = vld [vmem:[%s2 + $0x48] sm:$0xff]
  %v247 = vld [vmem:[%s2 + $0x50] sm:$0xff]
  %v248 = vld [vmem:[%s2 + $0x58] sm:$0xff]
  %v249 = vld [vmem:[%s2 + $0x60] sm:$0xff]
  %v250 = vld [vmem:[%s2 + $0x68] sm:$0xff]
  %v251 = vld [vmem:[%s2 + $0x70] sm:$0xff]
  %v252 = vld [vmem:[%s2 + $0x78] sm:$0xff]
  %v253 = vld [vmem:[%s3] sm:$0x3]
  %v255 = vlaneseq
  %v256 = vshrl.u32 %v255, 7
  %v257 = vsub.s32 0, %v256
  %v258 = vrot.slane %v253, %v257
  %v259 = vlaneseq
  %v260 = vshrl.u32 %v259, 7
  %v261 = vsub.s32 1, %v260
  %v262 = vrot.slane %v253, %v261
  %v281 = vunpack.c.l.b16 %v237
  %v282 = vunpack.c.h.b16 %v237
  %v283 = vunpack.c.l.b16 %v238
  %v284 = vunpack.c.h.b16 %v238
  %v285 = vunpack.c.l.b16 %v239
  %v286 = vunpack.c.h.b16 %v239
  %v287 = vunpack.c.l.b16 %v240
  %v288 = vunpack.c.h.b16 %v240
  %v289 = vunpack.c.l.b16 %v241
  %v290 = vunpack.c.h.b16 %v241
  %v291 = vunpack.c.l.b16 %v242
  %v292 = vunpack.c.h.b16 %v242
  %v293 = vunpack.c.l.b16 %v243
  %v294 = vunpack.c.h.b16 %v243
  %v295 = vunpack.c.l.b16 %v244
  %v296 = vunpack.c.h.b16 %v244
  %v297 = vunpack.c.l.b16 %v245
  %v298 = vunpack.c.h.b16 %v245
  %v299 = vunpack.c.l.b16 %v246
  %v300 = vunpack.c.h.b16 %v246
  %v301 = vunpack.c.l.b16 %v247
  %v302 = vunpack.c.h.b16 %v247
  %v303 = vunpack.c.l.b16 %v248
  %v304 = vunpack.c.h.b16 %v248
  %v305 = vunpack.c.l.b16 %v249
  %v306 = vunpack.c.h.b16 %v249
  %v307 = vunpack.c.l.b16 %v250
  %v308 = vunpack.c.h.b16 %v250
  %v309 = vunpack.c.l.b16 %v251
  %v310 = vunpack.c.h.b16 %v251
  %v311 = vunpack.c.l.b16 %v252
  %v312 = vunpack.c.h.b16 %v252
  %v313 = vpack.c.b16 %v283, %v281
  %v314 = vpack.c.b16 %v284, %v282
  %v315 = vpack.c.b16 %v287, %v285
  %v316 = vpack.c.b16 %v288, %v286
  %v317 = vpack.c.b16 %v291, %v289
  %v318 = vpack.c.b16 %v292, %v290
  %v319 = vpack.c.b16 %v295, %v293
  %v320 = vpack.c.b16 %v296, %v294
  %v321 = vpack.c.b16 %v299, %v297
  %v322 = vpack.c.b16 %v300, %v298
  %v323 = vpack.c.b16 %v303, %v301
  %v324 = vpack.c.b16 %v304, %v302
  %v325 = vpack.c.b16 %v307, %v305
  %v326 = vpack.c.b16 %v308, %v306
  %v327 = vpack.c.b16 %v311, %v309
  %v328 = vpack.c.b16 %v312, %v310
  %345 = vmatprep.subr.bf16.mxu0 %v314
  %346 = vmatpush1.bf16.msra.mxu0 %v313
  %347 = vmatprep.subr.bf16.mxu0 %v316
  %348 = vmatpush1.bf16.msra.mxu0 %v315
  %349 = vmatprep.subr.bf16.mxu0 %v318
  %350 = vmatpush1.bf16.msra.mxu0 %v317
  %351 = vmatprep.subr.bf16.mxu0 %v320
  %352 = vmatpush1.bf16.msra.mxu0 %v319
  %353 = vmatprep.subr.bf16.mxu0 %v322
  %354 = vmatpush1.bf16.msra.mxu0 %v321
  %355 = vmatprep.subr.bf16.mxu0 %v324
  %356 = vmatpush1.bf16.msra.mxu0 %v323
  %357 = vmatprep.subr.bf16.mxu0 %v326
  %358 = vmatpush1.bf16.msra.mxu0 %v325
  %359 = vmatprep.subr.bf16.mxu0 %v328
  %360 = vmatpush1.bf16.msra.mxu0 %v327
  %361 = vmatprep.subr.bf16.mxu0 0
  %362 = vmatpush1.bf16.msra.mxu0 0
  %363 = vmatprep.subr.bf16.mxu0 0
  %364 = vmatpush1.bf16.msra.mxu0 0
  %365 = vmatprep.subr.bf16.mxu0 0
  %366 = vmatpush1.bf16.msra.mxu0 0
  %367 = vmatprep.subr.bf16.mxu0 0
  %368 = vmatpush1.bf16.msra.mxu0 0
  %369 = vmatprep.subr.bf16.mxu0 0
  %370 = vmatpush1.bf16.msra.mxu0 0
  %371 = vmatprep.subr.bf16.mxu0 0
  %372 = vmatpush1.bf16.msra.mxu0 0
  %373 = vmatprep.subr.bf16.mxu0 0
  %374 = vmatpush1.bf16.msra.mxu0 0
  %375 = vmatprep.subr.bf16.mxu0 0
  %376 = vmatpush1.bf16.msra.mxu0 0
  %377 = vmatprep.mubr.bf16.mxu0 0
  %378 = vmatmul.mubr.bf16.gmra.mrb[0].mxu0 %v60
  %v379 = vpop.f32.mrb[0].mxu0
  %v380 = vadd.f32 %v258, %v379
  %v381 = vpop.f32.mrb[0].mxu0
  %v382 = vadd.f32 %v262, %v381
  %v383 = vpop.f32.mrb[0].mxu0
  %v384 = vadd.f32 %v258, %v383
  %v385 = vpop.f32.mrb[0].mxu0
  %v386 = vadd.f32 %v262, %v385
  %387 = vmatprep.mubr.bf16.mxu0 0
  %388 = vmatmul.mubr.bf16.gmra.mrb[0].mxu0 %v61
  %v389 = vpop.f32.mrb[0].mxu0
  %v390 = vadd.f32 %v258, %v389
  %v391 = vpop.f32.mrb[0].mxu0
  %v392 = vadd.f32 %v262, %v391
  %v393 = vpop.f32.mrb[0].mxu0
  %v394 = vadd.f32 %v258, %v393
  %v395 = vpop.f32.mrb[0].mxu0
  %v396 = vadd.f32 %v262, %v395
  %397 = vmatprep.mubr.bf16.mxu0 0
  %398 = vmatmul.mubr.bf16.gmra.mrb[0].mxu0 %v62
  %v399 = vpop.f32.mrb[0].mxu0
  %v400 = vadd.f32 %v258, %v399
  %v401 = vpop.f32.mrb[0].mxu0
  %v402 = vadd.f32 %v262, %v401
  %v403 = vpop.f32.mrb[0].mxu0
  %v404 = vadd.f32 %v258, %v403
  %v405 = vpop.f32.mrb[0].mxu0
  %v406 = vadd.f32 %v262, %v405
  %407 = vmatprep.mubr.bf16.mxu0 0
  %408 = vmatmul.mubr.bf16.gmra.mrb[0].mxu0 %v63
  %v409 = vpop.f32.mrb[0].mxu0
  %v410 = vadd.f32 %v258, %v409
  %v411 = vpop.f32.mrb[0].mxu0
  %v412 = vadd.f32 %v262, %v411
  %v413 = vpop.f32.mrb[0].mxu0
  %v414 = vadd.f32 %v258, %v413
  %v415 = vpop.f32.mrb[0].mxu0
  %v416 = vadd.f32 %v262, %v415
  %417 = vdwg.mxu0
  %418 = vst [vmem:[%s5] sm:$0xff] %v380
  %419 = vst [vmem:[%s5 + $0x8] sm:$0xff] %v382
  %420 = vst [vmem:[%s5 + $0x10] sm:$0xff] %v384
  %421 = vst [vmem:[%s5 + $0x18] sm:$0xff] %v386
  %422 = vst [vmem:[%s5 + $0x20] sm:$0xff] %v390
  %423 = vst [vmem:[%s5 + $0x28] sm:$0xff] %v392
  %424 = vst [vmem:[%s5 + $0x30] sm:$0xff] %v394
  %425 = vst [vmem:[%s5 + $0x38] sm:$0xff] %v396
  %426 = vst [vmem:[%s5 + $0x40] sm:$0xff] %v400
  %427 = vst [vmem:[%s5 + $0x48] sm:$0xff] %v402
  %428 = vst [vmem:[%s5 + $0x50] sm:$0xff] %v404
  %429 = vst [vmem:[%s5 + $0x58] sm:$0xff] %v406
  %430 = vst [vmem:[%s5 + $0x60] sm:$0xff] %v410
  %431 = vst [vmem:[%s5 + $0x68] sm:$0xff] %v412
  %432 = vst [vmem:[%s5 + $0x70] sm:$0xff] %v414
  %433 = vst [vmem:[%s5 + $0x78] sm:$0xff] %v416
  // Predicated region
  $region18: #{dgcnn_forward.8} parent=0 // pred_check
    _
  $region19: #{dgcnn_forward.8} parent=0 // pred_check_branch
    %435 = sbr.rel (0) target = $region21
  $region20: #{dgcnn_forward.8} parent=0 // pred_region
    _
  $region21: #{dgcnn_forward.8} parent=0 // pred_fallthru
    _
  // Predicated region
  $region22: #{dgcnn_forward.8} parent=0 // pred_check
    _
  $region23: #{dgcnn_forward.8} parent=0 // pred_check_branch
    %437 = sbr.rel (0) target = $region25
  $region24: #{dgcnn_forward.8} parent=0 // pred_region
    _
  $region25: #{dgcnn_forward.8} parent=0 // pred_fallthru
    _
  // Predicated region
  $region26: #{dgcnn_forward.8} parent=0 // pred_check
    _
  $region27: #{dgcnn_forward.8} parent=0 // pred_check_branch
    %439 = sbr.rel (0) target = $region29
  $region28: #{dgcnn_forward.8} parent=0 // pred_region
    _
  $region29: #{dgcnn_forward.8} parent=0 // pred_fallthru
    _
  // Predicated region
  $region30: #{dgcnn_forward.8} parent=0 // pred_check
    _
  $region31: #{dgcnn_forward.8} parent=0 // pred_check_branch
    %441 = sbr.rel (0) target = $region33
  $region32: #{dgcnn_forward.8} parent=0 // pred_region
    _
  $region33: #{dgcnn_forward.8} parent=0 // pred_fallthru
    _

// kernel: dgcnn_forward.9
$region0: #{dgcnn_forward.9}
  #allocation0 [shape = 'u32[]', space=smem, size = 0x4, offset = 0x4, fixed_abs, tag = 'smem constant byte address 0x4 - core index']
  #allocation1 [shape = 'u32[144,128]{1,0:T(1,128)}', space=vmem, size = 0x12000, scoped, tag = 'internal scratch']
  %s0 = inlined_call_operand.vmem [shape: bf16[2,32,64], index: 0, kind: input, shape index: {}]
  %s1 = inlined_call_operand.vmem [shape: bf16[2,32,64], index: 1, kind: input, shape index: {}]
  %s2 = inlined_call_operand.vmem [shape: bf16[2,32,128], index: 2, kind: input, shape index: {}]
  %s3 = inlined_call_operand.vmem [shape: bf16[2,32,256], index: 3, kind: input, shape index: {}]
  %s4 = inlined_call_operand.vmem [shape: bf16[64,512], index: 4, kind: input, shape index: {}]
  %s5 = inlined_call_operand.vmem [shape: bf16[64,512], index: 5, kind: input, shape index: {}]
  %s6 = inlined_call_operand.vmem [shape: bf16[128,512], index: 6, kind: input, shape index: {}]
  %s7 = inlined_call_operand.vmem [shape: bf16[256,512], index: 7, kind: input, shape index: {}]
  %s8 = inlined_call_operand.vmem [shape: f32[1,512], index: 8, kind: input, shape index: {}]
  %s9 = inlined_call_operand.vmem [shape: f32[2,1,512], index: 9, kind: output, shape index: {0}]
  %s10 = inlined_call_operand.vmem [shape: f32[2,1,512], index: 10, kind: output, shape index: {1}]
  %11 = xla_tuple %s9, %s10
  %s12 = sld [smem:[#allocation0]]
  $region85: #{dgcnn_forward.9} parent=0
    _
  %s14 = ssub.s32 1, %s12
  %s15 = scalar_select 0, %s14, %s12
  loop: start=0, step=1, limit=4
  $region2: #{dgcnn_forward.9} parent=0 // loop_pre_header
    _
  $region3: #{dgcnn_forward.9} parent=0 // loop_header
    %s17 = sphi 0, %s21
    %p18 = scmp.ge.s32.totalorder %s17, 4
    %s24 = sphi 0, %s36
    %s25 = sphi 0, %s32
    %s26 = sphi 0, %s24
    %s27 = sphi 0, %s25
    %s28 = sphi 0, %s26
    %s29 = sphi 0, %s27
    %s41 = sphi 0, %s43
    %s44 = sphi 0, %s41
    %s45 = sphi 0, %s44
    %s61 = sphi 0, %s45
    %s69 = sphi 0, %s71
    %s72 = sphi 0, %s69
    %s73 = sphi 0, %s72
    %s89 = sphi 0, %s73
    %s97 = sphi 0, %s99
    %s100 = sphi 0, %s97
    %s101 = sphi 0, %s100
    %s117 = sphi 0, %s101
    %s125 = sphi 0, %s127
    %s128 = sphi 0, %s125
    %s129 = sphi 0, %s128
    %s145 = sphi 0, %s129
    %s149 = sphi 0, %s149
    %s151 = sphi 0, %s149
    %s152 = sphi 0, %s151
    %s166 = sphi 0, %s152
    %s170 = sphi 0, %s170
    %s172 = sphi 0, %s170
    %s173 = sphi 0, %s172
    %s187 = sphi 0, %s173
    %s191 = sphi 0, %s191
    %s193 = sphi 0, %s191
    %s194 = sphi 0, %s193
    %s208 = sphi 0, %s194
    %s212 = sphi 0, %s212
    %s214 = sphi 0, %s212
    %s215 = sphi 0, %s214
    %s229 = sphi 0, %s215
    %s233 = sphi 0, %s233
    %s235 = sphi 0, %s233
    %s236 = sphi 0, %s235
    %s250 = sphi 0, %s236
    %s256 = sphi 0, %s258
    %s259 = sphi 0, %s256
    %s260 = sphi 0, %s259
    %s276 = sphi 0, %s260
    %s282 = sphi 0, %s284
    %s285 = sphi 0, %s282
    %s286 = sphi 0, %s285
    %s302 = sphi 0, %s286
  $region4: #{dgcnn_forward.9} parent=0 // loop_header_branch
    %20 = sbr.rel (%p18) target = $region8
  $region5: #{dgcnn_forward.9} parent=0 // loop_body
    %s22 = ssub.s32 %s17, 1
    %s23 = ssub.s32 %s17, 2
    %s30 = sadd.s32 1, %s25
    %p31 = scmp.ge.s32.totalorder %s30, 1
    %s32 = scalar_select %p31, 0, %s30
    %s33 = sadd.s32 1, %s24
    %s34 = scalar_select %p31, %s33, %s24
    %p35 = scmp.ge.s32.totalorder %s34, 2
    %s36 = scalar_select %p35, 0, %s34
    %s37 = ssub.s32 %s24, %s36
    %s38 = ssub.s32 %s25, %s32
    %s39 = sor.u32 %s37, %s38
    %p40 = scmp.eq.s32.totalorder %s39, 0
    %s42 = sadd.s32 %s41, 1
    %s43 = scalar_select %p40, %s41, %s42
    %p46 = pneg %p40
    %p47 = scmp.eq.s32.totalorder %s17, 1
    %p48 = por %p46, %p47
    %p49 = scmp.ne.s32.totalorder %s41, %s44
    %p50 = scmp.eq.s32.totalorder %s17, 0
    %p51 = por %p49, %p50
    %p52 = scmp.ne.s32.totalorder %s41, %s44
    %p53 = scmp.eq.s32.totalorder %s22, 1
    %p54 = por %p52, %p53
    %p55 = scmp.ne.s32.totalorder %s44, %s45
    %p56 = scmp.eq.s32.totalorder %s22, 0
    %p57 = por %p55, %p56
    %p58 = scmp.ne.s32.totalorder %s44, %s45
    %p59 = scmp.eq.s32.totalorder %s23, 1
    %p60 = por %p58, %p59
    %p62 = scmp.ne.s32.totalorder %s45, %s61
    %p63 = scmp.eq.s32.totalorder %s23, 0
    %p64 = por %p62, %p63
    %s65 = ssub.s32 %s24, %s36
    %s66 = ssub.s32 %s25, %s32
    %s67 = sor.u32 %s65, %s66
    %p68 = scmp.eq.s32.totalorder %s67, 0
    %s70 = sadd.s32 %s69, 1
    %s71 = scalar_select %p68, %s69, %s70
    %p74 = pneg %p68
    %p75 = scmp.eq.s32.totalorder %s17, 1
    %p76 = por %p74, %p75
    %p77 = scmp.ne.s32.totalorder %s69, %s72
    %p78 = scmp.eq.s32.totalorder %s17, 0
    %p79 = por %p77, %p78
    %p80 = scmp.ne.s32.totalorder %s69, %s72
    %p81 = scmp.eq.s32.totalorder %s22, 1
    %p82 = por %p80, %p81
    %p83 = scmp.ne.s32.totalorder %s72, %s73
    %p84 = scmp.eq.s32.totalorder %s22, 0
    %p85 = por %p83, %p84
    %p86 = scmp.ne.s32.totalorder %s72, %s73
    %p87 = scmp.eq.s32.totalorder %s23, 1
    %p88 = por %p86, %p87
    %p90 = scmp.ne.s32.totalorder %s73, %s89
    %p91 = scmp.eq.s32.totalorder %s23, 0
    %p92 = por %p90, %p91
    %s93 = ssub.s32 %s24, %s36
    %s94 = ssub.s32 %s25, %s32
    %s95 = sor.u32 %s93, %s94
    %p96 = scmp.eq.s32.totalorder %s95, 0
    %s98 = sadd.s32 %s97, 1
    %s99 = scalar_select %p96, %s97, %s98
    %p102 = pneg %p96
    %p103 = scmp.eq.s32.totalorder %s17, 1
    %p104 = por %p102, %p103
    %p105 = scmp.ne.s32.totalorder %s97, %s100
    %p106 = scmp.eq.s32.totalorder %s17, 0
    %p107 = por %p105, %p106
    %p108 = scmp.ne.s32.totalorder %s97, %s100
    %p109 = scmp.eq.s32.totalorder %s22, 1
    %p110 = por %p108, %p109
    %p111 = scmp.ne.s32.totalorder %s100, %s101
    %p112 = scmp.eq.s32.totalorder %s22, 0
    %p113 = por %p111, %p112
    %p114 = scmp.ne.s32.totalorder %s100, %s101
    %p115 = scmp.eq.s32.totalorder %s23, 1
    %p116 = por %p114, %p115
    %p118 = scmp.ne.s32.totalorder %s101, %s117
    %p119 = scmp.eq.s32.totalorder %s23, 0
    %p120 = por %p118, %p119
    %s121 = ssub.s32 %s24, %s36
    %s122 = ssub.s32 %s25, %s32
    %s123 = sor.u32 %s121, %s122
    %p124 = scmp.eq.s32.totalorder %s123, 0
    %s126 = sadd.s32 %s125, 1
    %s127 = scalar_select %p124, %s125, %s126
    %p130 = pneg %p124
    %p131 = scmp.eq.s32.totalorder %s17, 1
    %p132 = por %p130, %p131
    %p133 = scmp.ne.s32.totalorder %s125, %s128
    %p134 = scmp.eq.s32.totalorder %s17, 0
    %p135 = por %p133, %p134
    %p136 = scmp.ne.s32.totalorder %s125, %s128
    %p137 = scmp.eq.s32.totalorder %s22, 1
    %p138 = por %p136, %p137
    %p139 = scmp.ne.s32.totalorder %s128, %s129
    %p140 = scmp.eq.s32.totalorder %s22, 0
    %p141 = por %p139, %p140
    %p142 = scmp.ne.s32.totalorder %s128, %s129
    %p143 = scmp.eq.s32.totalorder %s23, 1
    %p144 = por %p142, %p143
    %p146 = scmp.ne.s32.totalorder %s129, %s145
    %p147 = scmp.eq.s32.totalorder %s23, 0
    %p148 = por %p146, %p147
    %s150 = sadd.s32 %s149, 1
    %p153 = scmp.eq.s32.totalorder %s17, 1
    %p154 = scmp.ne.s32.totalorder %s149, %s151
    %p155 = scmp.eq.s32.totalorder %s17, 0
    %p156 = por %p154, %p155
    %p157 = scmp.ne.s32.totalorder %s149, %s151
    %p158 = scmp.eq.s32.totalorder %s22, 1
    %p159 = por %p157, %p158
    %p160 = scmp.ne.s32.totalorder %s151, %s152
    %p161 = scmp.eq.s32.totalorder %s22, 0
    %p162 = por %p160, %p161
    %p163 = scmp.ne.s32.totalorder %s151, %s152
    %p164 = scmp.eq.s32.totalorder %s23, 1
    %p165 = por %p163, %p164
    %p167 = scmp.ne.s32.totalorder %s152, %s166
    %p168 = scmp.eq.s32.totalorder %s23, 0
    %p169 = por %p167, %p168
    %s171 = sadd.s32 %s170, 1
    %p174 = scmp.eq.s32.totalorder %s17, 1
    %p175 = scmp.ne.s32.totalorder %s170, %s172
    %p176 = scmp.eq.s32.totalorder %s17, 0
    %p177 = por %p175, %p176
    %p178 = scmp.ne.s32.totalorder %s170, %s172
    %p179 = scmp.eq.s32.totalorder %s22, 1
    %p180 = por %p178, %p179
    %p181 = scmp.ne.s32.totalorder %s172, %s173
    %p182 = scmp.eq.s32.totalorder %s22, 0
    %p183 = por %p181, %p182
    %p184 = scmp.ne.s32.totalorder %s172, %s173
    %p185 = scmp.eq.s32.totalorder %s23, 1
    %p186 = por %p184, %p185
    %p188 = scmp.ne.s32.totalorder %s173, %s187
    %p189 = scmp.eq.s32.totalorder %s23, 0
    %p190 = por %p188, %p189
    %s192 = sadd.s32 %s191, 1
    %p195 = scmp.eq.s32.totalorder %s17, 1
    %p196 = scmp.ne.s32.totalorder %s191, %s193
    %p197 = scmp.eq.s32.totalorder %s17, 0
    %p198 = por %p196, %p197
    %p199 = scmp.ne.s32.totalorder %s191, %s193
    %p200 = scmp.eq.s32.totalorder %s22, 1
    %p201 = por %p199, %p200
    %p202 = scmp.ne.s32.totalorder %s193, %s194
    %p203 = scmp.eq.s32.totalorder %s22, 0
    %p204 = por %p202, %p203
    %p205 = scmp.ne.s32.totalorder %s193, %s194
    %p206 = scmp.eq.s32.totalorder %s23, 1
    %p207 = por %p205, %p206
    %p209 = scmp.ne.s32.totalorder %s194, %s208
    %p210 = scmp.eq.s32.totalorder %s23, 0
    %p211 = por %p209, %p210
    %s213 = sadd.s32 %s212, 1
    %p216 = scmp.eq.s32.totalorder %s17, 1
    %p217 = scmp.ne.s32.totalorder %s212, %s214
    %p218 = scmp.eq.s32.totalorder %s17, 0
    %p219 = por %p217, %p218
    %p220 = scmp.ne.s32.totalorder %s212, %s214
    %p221 = scmp.eq.s32.totalorder %s22, 1
    %p222 = por %p220, %p221
    %p223 = scmp.ne.s32.totalorder %s214, %s215
    %p224 = scmp.eq.s32.totalorder %s22, 0
    %p225 = por %p223, %p224
    %p226 = scmp.ne.s32.totalorder %s214, %s215
    %p227 = scmp.eq.s32.totalorder %s23, 1
    %p228 = por %p226, %p227
    %p230 = scmp.ne.s32.totalorder %s215, %s229
    %p231 = scmp.eq.s32.totalorder %s23, 0
    %p232 = por %p230, %p231
    %s234 = sadd.s32 %s233, 1
    %p237 = scmp.eq.s32.totalorder %s17, 1
    %p238 = scmp.ne.s32.totalorder %s233, %s235
    %p239 = scmp.eq.s32.totalorder %s17, 0
    %p240 = por %p238, %p239
    %p241 = scmp.ne.s32.totalorder %s233, %s235
    %p242 = scmp.eq.s32.totalorder %s22, 1
    %p243 = por %p241, %p242
    %p244 = scmp.ne.s32.totalorder %s235, %s236
    %p245 = scmp.eq.s32.totalorder %s22, 0
    %p246 = por %p244, %p245
    %p247 = scmp.ne.s32.totalorder %s235, %s236
    %p248 = scmp.eq.s32.totalorder %s23, 1
    %p249 = por %p247, %p248
    %p251 = scmp.ne.s32.totalorder %s236, %s250
    %p252 = scmp.eq.s32.totalorder %s23, 0
    %p253 = por %p251, %p252
    %s254 = ssub.s32 %s24, %s36
    %p255 = scmp.eq.s32.totalorder %s254, 0
    %s257 = sadd.s32 %s256, 1
    %s258 = scalar_select %p255, %s256, %s257
    %p261 = pneg %p255
    %p262 = scmp.eq.s32.totalorder %s17, 1
    %p263 = por %p261, %p262
    %p264 = scmp.ne.s32.totalorder %s256, %s259
    %p265 = scmp.eq.s32.totalorder %s17, 0
    %p266 = por %p264, %p265
    %p267 = scmp.ne.s32.totalorder %s256, %s259
    %p268 = scmp.eq.s32.totalorder %s22, 1
    %p269 = por %p267, %p268
    %p270 = scmp.ne.s32.totalorder %s259, %s260
    %p271 = scmp.eq.s32.totalorder %s22, 0
    %p272 = por %p270, %p271
    %p273 = scmp.ne.s32.totalorder %s259, %s260
    %p274 = scmp.eq.s32.totalorder %s23, 1
    %p275 = por %p273, %p274
    %p277 = scmp.ne.s32.totalorder %s260, %s276
    %p278 = scmp.eq.s32.totalorder %s23, 0
    %p279 = por %p277, %p278
    %s280 = ssub.s32 %s24, %s36
    %p281 = scmp.eq.s32.totalorder %s280, 0
    %s283 = sadd.s32 %s282, 1
    %s284 = scalar_select %p281, %s282, %s283
    %p287 = pneg %p281
    %p288 = scmp.eq.s32.totalorder %s17, 1
    %p289 = por %p287, %p288
    %p290 = scmp.ne.s32.totalorder %s282, %s285
    %p291 = scmp.eq.s32.totalorder %s17, 0
    %p292 = por %p290, %p291
    %p293 = scmp.ne.s32.totalorder %s282, %s285
    %p294 = scmp.eq.s32.totalorder %s22, 1
    %p295 = por %p293, %p294
    %p296 = scmp.ne.s32.totalorder %s285, %s286
    %p297 = scmp.eq.s32.totalorder %s22, 0
    %p298 = por %p296, %p297
    %p299 = scmp.ne.s32.totalorder %s285, %s286
    %p300 = scmp.eq.s32.totalorder %s23, 1
    %p301 = por %p299, %p300
    %p303 = scmp.ne.s32.totalorder %s286, %s302
    %p304 = scmp.eq.s32.totalorder %s23, 0
    %p305 = por %p303, %p304
    %p306 = scmp.le.s32.totalorder 1, %s17
    %p307 = scmp.lt.s32.totalorder %s17, 3
    %p308 = pnand %p306, %p307
    %p309 = pneg %p308
    // Predicated region
    $region9: #{dgcnn_forward.9} parent=5 // pred_check
      _
    $region10: #{dgcnn_forward.9} parent=5 // pred_check_branch
      %311 = sbr.rel (%p308) target = $region12
    $region11: #{dgcnn_forward.9} parent=5 // pred_region
      %s312 = ssub.s32 %s17, 1
      // Predicated region
      $region13: #{dgcnn_forward.9} parent=11 // pred_check
        %p313 = pneg %p162
      $region14: #{dgcnn_forward.9} parent=11 // pred_check_branch
        %315 = sbr.rel (%p313) target = $region16
      $region15: #{dgcnn_forward.9} parent=11 // pred_region
        _
      $region16: #{dgcnn_forward.9} parent=11 // pred_fallthru
        _
      // Predicated region
      $region17: #{dgcnn_forward.9} parent=11 // pred_check
        %p316 = pneg %p183
      $region18: #{dgcnn_forward.9} parent=11 // pred_check_branch
        %318 = sbr.rel (%p316) target = $region20
      $region19: #{dgcnn_forward.9} parent=11 // pred_region
        _
      $region20: #{dgcnn_forward.9} parent=11 // pred_fallthru
        _
      // Predicated region
      $region21: #{dgcnn_forward.9} parent=11 // pred_check
        %p319 = pneg %p204
      $region22: #{dgcnn_forward.9} parent=11 // pred_check_branch
        %321 = sbr.rel (%p319) target = $region24
      $region23: #{dgcnn_forward.9} parent=11 // pred_region
        _
      $region24: #{dgcnn_forward.9} parent=11 // pred_fallthru
        _
      // Predicated region
      $region25: #{dgcnn_forward.9} parent=11 // pred_check
        %p322 = pneg %p225
      $region26: #{dgcnn_forward.9} parent=11 // pred_check_branch
        %324 = sbr.rel (%p322) target = $region28
      $region27: #{dgcnn_forward.9} parent=11 // pred_region
        _
      $region28: #{dgcnn_forward.9} parent=11 // pred_fallthru
        _
      // Predicated region
      $region29: #{dgcnn_forward.9} parent=11 // pred_check
        %p325 = pneg %p246
      $region30: #{dgcnn_forward.9} parent=11 // pred_check_branch
        %327 = sbr.rel (%p325) target = $region32
      $region31: #{dgcnn_forward.9} parent=11 // pred_region
        _
      $region32: #{dgcnn_forward.9} parent=11 // pred_fallthru
        _
    $region12: #{dgcnn_forward.9} parent=5 // pred_fallthru
      _
    %p328 = scmp.lt.s32.totalorder %s17, 2
    // Predicated region
    $region33: #{dgcnn_forward.9} parent=5 // pred_check
      %p329 = pneg %p328
    $region34: #{dgcnn_forward.9} parent=5 // pred_check_branch
      %331 = sbr.rel (%p329) target = $region36
    $region35: #{dgcnn_forward.9} parent=5 // pred_region
      // Predicated region
      $region37: #{dgcnn_forward.9} parent=35 // pred_check
        %p332 = pneg %p51
      $region38: #{dgcnn_forward.9} parent=35 // pred_check_branch
        %334 = sbr.rel (%p332) target = $region40
      $region39: #{dgcnn_forward.9} parent=35 // pred_region
        %s335 = smul.u32 4, %s25
        %p336 = scmp.lt.s32.totalorder %s24, 1
        %s337 = scalar_select %p336, %s24, 1
        %p338 = scmp.lt.s32.totalorder %s335, 3
        %s339 = scalar_select %p338, %s335, 3
        %s340 = smul.addr %s337, 4
        %s341 = sadd.s32 %s339, %s340
        %s342 = smul.addr %s341, 4
        %s343 = scalar_lea.vmem %s0, %s342
        %s344 = smul.u32 4, %s25
      $region40: #{dgcnn_forward.9} parent=35 // pred_fallthru
        _
      // Predicated region
      $region41: #{dgcnn_forward.9} parent=35 // pred_check
        %p345 = pneg %p79
      $region42: #{dgcnn_forward.9} parent=35 // pred_check_branch
        %347 = sbr.rel (%p345) target = $region44
      $region43: #{dgcnn_forward.9} parent=35 // pred_region
        %s348 = smul.u32 4, %s25
        %p349 = scmp.lt.s32.totalorder %s24, 1
        %s350 = scalar_select %p349, %s24, 1
        %p351 = scmp.lt.s32.totalorder %s348, 3
        %s352 = scalar_select %p351, %s348, 3
        %s353 = smul.addr %s350, 4
        %s354 = sadd.s32 %s352, %s353
        %s355 = smul.addr %s354, 4
        %s356 = scalar_lea.vmem %s1, %s355
        %s357 = smul.u32 4, %s25
      $region44: #{dgcnn_forward.9} parent=35 // pred_fallthru
        _
      // Predicated region
      $region45: #{dgcnn_forward.9} parent=35 // pred_check
        %p358 = pneg %p107
      $region46: #{dgcnn_forward.9} parent=35 // pred_check_branch
        %360 = sbr.rel (%p358) target = $region48
      $region47: #{dgcnn_forward.9} parent=35 // pred_region
        %s361 = smul.u32 4, %s25
        %p362 = scmp.lt.s32.totalorder %s24, 1
        %s363 = scalar_select %p362, %s24, 1
        %p364 = scmp.lt.s32.totalorder %s361, 3
        %s365 = scalar_select %p364, %s361, 3
        %s366 = smul.addr %s363, 4
        %s367 = sadd.s32 %s365, %s366
        %s368 = smul.addr %s367, 4
        %s369 = scalar_lea.vmem %s2, %s368
        %s370 = smul.u32 4, %s25
      $region48: #{dgcnn_forward.9} parent=35 // pred_fallthru
        _
      // Predicated region
      $region49: #{dgcnn_forward.9} parent=35 // pred_check
        %p371 = pneg %p135
      $region50: #{dgcnn_forward.9} parent=35 // pred_check_branch
        %373 = sbr.rel (%p371) target = $region52
      $region51: #{dgcnn_forward.9} parent=35 // pred_region
        %s374 = smul.u32 4, %s25
        %p375 = scmp.lt.s32.totalorder %s24, 1
        %s376 = scalar_select %p375, %s24, 1
        %p377 = scmp.lt.s32.totalorder %s374, 3
        %s378 = scalar_select %p377, %s374, 3
        %s379 = smul.addr %s378, 2
        %s380 = smul.addr %s376, 8
        %s381 = sadd.s32 %s379, %s380
        %s382 = smul.addr %s381, 4
        %s383 = scalar_lea.vmem %s3, %s382
        %s384 = smul.u32 4, %s25
      $region52: #{dgcnn_forward.9} parent=35 // pred_fallthru
        _
    $region36: #{dgcnn_forward.9} parent=5 // pred_fallthru
      _
    %p385 = scmp.le.s32.totalorder 1, %s17
    %p386 = scmp.lt.s32.totalorder %s17, 3
    %p387 = pnand %p385, %p386
    %p388 = pneg %p387
    // Predicated region
    $region53: #{dgcnn_forward.9} parent=5 // pred_check
      _
    $region54: #{dgcnn_forward.9} parent=5 // pred_check_branch
      %390 = sbr.rel (%p387) target = $region56
    $region55: #{dgcnn_forward.9} parent=5 // pred_region
      %s391 = ssub.s32 %s17, 1
      %s392 = smul.u32 4, %s27
      %p393 = scmp.lt.s32.totalorder %s26, 1
      %s394 = scalar_select %p393, %s26, 1
      %p395 = scmp.lt.s32.totalorder %s392, 3
      %s396 = scalar_select %p395, %s392, 3
      %s397 = smul.addr %s394, 4
      %s398 = sadd.s32 %s396, %s397
      %s399 = smul.addr %s398, 4
      %s400 = scalar_lea.vmem %s0, %s399
      %p401 = pneg %p57
      %p402 = pneg %p54
      %s403 = smul.u32 4, %s27
      %p404 = scmp.lt.s32.totalorder %s26, 1
      %s405 = scalar_select %p404, %s26, 1
      %p406 = scmp.lt.s32.totalorder %s403, 3
      %s407 = scalar_select %p406, %s403, 3
      %s408 = smul.addr %s405, 4
      %s409 = sadd.s32 %s407, %s408
      %s410 = smul.addr %s409, 4
      %s411 = scalar_lea.vmem %s1, %s410
      %p412 = pneg %p85
      %p413 = pneg %p82
      %s414 = smul.u32 4, %s27
      %p415 = scmp.lt.s32.totalorder %s26, 1
      %s416 = scalar_select %p415, %s26, 1
      %p417 = scmp.lt.s32.totalorder %s414, 3
      %s418 = scalar_select %p417, %s414, 3
      %s419 = smul.addr %s416, 4
      %s420 = sadd.s32 %s418, %s419
      %s421 = smul.addr %s420, 4
      %s422 = scalar_lea.vmem %s2, %s421
      %p423 = pneg %p113
      %p424 = pneg %p110
      %s425 = smul.u32 4, %s27
      %p426 = scmp.lt.s32.totalorder %s26, 1
      %s427 = scalar_select %p426, %s26, 1
      %p428 = scmp.lt.s32.totalorder %s425, 3
      %s429 = scalar_select %p428, %s425, 3
      %s430 = smul.addr %s429, 2
      %s431 = smul.addr %s427, 8
      %s432 = sadd.s32 %s430, %s431
      %s433 = smul.addr %s432, 4
      %s434 = scalar_lea.vmem %s3, %s433
      %p435 = pneg %p141
      %p436 = pneg %p138
      %p437 = pneg %p162
      %p438 = pneg %p159
      %p439 = pneg %p183
      %p440 = pneg %p180
      %p441 = pneg %p204
      %p442 = pneg %p201
      %p443 = pneg %p225
      %p444 = pneg %p222
      %p445 = pneg %p246
      %p446 = pneg %p243
      %p447 = pneg %p272
      %p448 = pneg %p269
      %p449 = scmp.lt.s32.totalorder %s26, 1
      %s450 = scalar_select %p449, %s26, 1
      %s451 = smul.addr %s450, 4
      %s452 = scalar_lea.vmem %s9, %s451
      %p453 = pneg %p298
      %p454 = pneg %p295
      %p455 = scmp.lt.s32.totalorder %s26, 1
      %s456 = scalar_select %p455, %s26, 1
      %s457 = smul.addr %s456, 4
      %s458 = scalar_lea.vmem %s10, %s457
      %s459 = smul.u32 4, %s27
      %p460 = scmp.lt.s32.totalorder %s26, 1
      %s461 = scalar_select %p460, %s26, 1
      %p462 = scmp.lt.s32.totalorder %s459, 3
      %s463 = scalar_select %p462, %s459, 3
      %s464 = smul.addr %s461, 4
      %s465 = sadd.s32 %s463, %s464
      %s466 = smul.addr %s465, 4
      %s467 = scalar_lea.vmem %s0, %s466
      %s468 = smul.u32 4, %s27
      %s469 = smul.u32 4, %s27
      %p470 = scmp.lt.s32.totalorder %s26, 1
      %s471 = scalar_select %p470, %s26, 1
      %p472 = scmp.lt.s32.totalorder %s469, 3
      %s473 = scalar_select %p472, %s469, 3
      %s474 = smul.addr %s471, 4
      %s475 = sadd.s32 %s473, %s474
      %s476 = smul.addr %s475, 4
      %s477 = scalar_lea.vmem %s1, %s476
      %s478 = smul.u32 4, %s27
      %s479 = smul.u32 4, %s27
      %p480 = scmp.lt.s32.totalorder %s26, 1
      %s481 = scalar_select %p480, %s26, 1
      %p482 = scmp.lt.s32.totalorder %s479, 3
      %s483 = scalar_select %p482, %s479, 3
      %s484 = smul.addr %s481, 4
      %s485 = sadd.s32 %s483, %s484
      %s486 = smul.addr %s485, 4
      %s487 = scalar_lea.vmem %s2, %s486
      %s488 = smul.u32 4, %s27
      %s489 = smul.u32 4, %s27
      %p490 = scmp.lt.s32.totalorder %s26, 1
      %s491 = scalar_select %p490, %s26, 1
      %p492 = scmp.lt.s32.totalorder %s489, 3
      %s493 = scalar_select %p492, %s489, 3
      %s494 = smul.addr %s493, 2
      %s495 = smul.addr %s491, 8
      %s496 = sadd.s32 %s494, %s495
      %s497 = smul.addr %s496, 4
      %s498 = scalar_lea.vmem %s3, %s497
      %s499 = smul.u32 4, %s27
      %p500 = scmp.lt.s32.totalorder %s26, 1
      %s501 = scalar_select %p500, %s26, 1
      %s502 = smul.addr %s501, 4
      %s503 = scalar_lea.vmem %s9, %s502
      %p504 = scmp.lt.s32.totalorder %s26, 1
      %s505 = scalar_select %p504, %s26, 1
      %s506 = smul.addr %s505, 4
      %s507 = scalar_lea.vmem %s10, %s506
      %v509 = vld [vmem:[%s467] sm:$0xf]
      %v510 = vld [vmem:[%s467 + $0x4] sm:$0xf]
      %v511 = vld [vmem:[%s467 + $0x8] sm:$0xf]
      %v512 = vld [vmem:[%s467 + $0xc] sm:$0xf]
      %v513 = vld [vmem:[%s4] sm:$0xff]
      %v514 = vld [vmem:[%s4 + $0x8] sm:$0xff]
      %v515 = vld [vmem:[%s4 + $0x10] sm:$0xff]
      %v516 = vld [vmem:[%s4 + $0x18] sm:$0xff]
      %v517 = vld [vmem:[%s4 + $0x20] sm:$0xff]
      %v518 = vld [vmem:[%s4 + $0x28] sm:$0xff]
      %v519 = vld [vmem:[%s4 + $0x30] sm:$0xff]
      %v520 = vld [vmem:[%s4 + $0x38] sm:$0xff]
      %v521 = vld [vmem:[%s4 + $0x40] sm:$0xff]
      %v522 = vld [vmem:[%s4 + $0x48] sm:$0xff]
      %v523 = vld [vmem:[%s4 + $0x50] sm:$0xff]
      %v524 = vld [vmem:[%s4 + $0x58] sm:$0xff]
      %v525 = vld [vmem:[%s4 + $0x60] sm:$0xff]
      %v526 = vld [vmem:[%s4 + $0x68] sm:$0xff]
      %v527 = vld [vmem:[%s4 + $0x70] sm:$0xff]
      %v528 = vld [vmem:[%s4 + $0x78] sm:$0xff]
      %v529 = vld [vmem:[%s477] sm:$0xf]
      %v530 = vld [vmem:[%s477 + $0x4] sm:$0xf]
      %v531 = vld [vmem:[%s477 + $0x8] sm:$0xf]
      %v532 = vld [vmem:[%s477 + $0xc] sm:$0xf]
      %v533 = vld [vmem:[%s5] sm:$0xff]
      %v534 = vld [vmem:[%s5 + $0x8] sm:$0xff]
      %v535 = vld [vmem:[%s5 + $0x10] sm:$0xff]
      %v536 = vld [vmem:[%s5 + $0x18] sm:$0xff]
      %v537 = vld [vmem:[%s5 + $0x20] sm:$0xff]
      %v538 = vld [vmem:[%s5 + $0x28] sm:$0xff]
      %v539 = vld [vmem:[%s5 + $0x30] sm:$0xff]
      %v540 = vld [vmem:[%s5 + $0x38] sm:$0xff]
      %v541 = vld [vmem:[%s5 + $0x40] sm:$0xff]
      %v542 = vld [vmem:[%s5 + $0x48] sm:$0xff]
      %v543 = vld [vmem:[%s5 + $0x50] sm:$0xff]
      %v544 = vld [vmem:[%s5 + $0x58] sm:$0xff]
      %v545 = vld [vmem:[%s5 + $0x60] sm:$0xff]
      %v546 = vld [vmem:[%s5 + $0x68] sm:$0xff]
      %v547 = vld [vmem:[%s5 + $0x70] sm:$0xff]
      %v548 = vld [vmem:[%s5 + $0x78] sm:$0xff]
      %v553 = vunpack.c.l.b16 %v529
      %v554 = vunpack.c.l.b16 %v530
      %v555 = vunpack.c.l.b16 %v531
      %v556 = vunpack.c.l.b16 %v532
      %v557 = vpack.c.b16 %v554, %v553
      %v558 = vpack.c.b16 %v556, %v555
      %v575 = vunpack.c.l.b16 %v533
      %v576 = vunpack.c.h.b16 %v533
      %v577 = vunpack.c.l.b16 %v534
      %v578 = vunpack.c.h.b16 %v534
      %v579 = vunpack.c.l.b16 %v535
      %v580 = vunpack.c.h.b16 %v535
      %v581 = vunpack.c.l.b16 %v536
      %v582 = vunpack.c.h.b16 %v536
      %v583 = vunpack.c.l.b16 %v537
      %v584 = vunpack.c.h.b16 %v537
      %v585 = vunpack.c.l.b16 %v538
      %v586 = vunpack.c.h.b16 %v538
      %v587 = vunpack.c.l.b16 %v539
      %v588 = vunpack.c.h.b16 %v539
      %v589 = vunpack.c.l.b16 %v540
      %v590 = vunpack.c.h.b16 %v540
      %v591 = vunpack.c.l.b16 %v541
      %v592 = vunpack.c.h.b16 %v541
      %v593 = vunpack.c.l.b16 %v542
      %v594 = vunpack.c.h.b16 %v542
      %v595 = vunpack.c.l.b16 %v543
      %v596 = vunpack.c.h.b16 %v543
      %v597 = vunpack.c.l.b16 %v544
      %v598 = vunpack.c.h.b16 %v544
      %v599 = vunpack.c.l.b16 %v545
      %v600 = vunpack.c.h.b16 %v545
      %v601 = vunpack.c.l.b16 %v546
      %v602 = vunpack.c.h.b16 %v546
      %v603 = vunpack.c.l.b16 %v547
      %v604 = vunpack.c.h.b16 %v547
      %v605 = vunpack.c.l.b16 %v548
      %v606 = vunpack.c.h.b16 %v548
      %v607 = vpack.c.b16 %v579, %v575
      %v608 = vpack.c.b16 %v580, %v576
      %v609 = vpack.c.b16 %v581, %v577
      %v610 = vpack.c.b16 %v582, %v578
      %v611 = vpack.c.b16 %v587, %v583
      %v612 = vpack.c.b16 %v588, %v584
      %v613 = vpack.c.b16 %v589, %v585
      %v614 = vpack.c.b16 %v590, %v586
      %v615 = vpack.c.b16 %v595, %v591
      %v616 = vpack.c.b16 %v596, %v592
      %v617 = vpack.c.b16 %v597, %v593
      %v618 = vpack.c.b16 %v598, %v594
      %v619 = vpack.c.b16 %v603, %v599
      %v620 = vpack.c.b16 %v604, %v600
      %v621 = vpack.c.b16 %v605, %v601
      %v622 = vpack.c.b16 %v606, %v602
      %vm639 = vcmask 523264
      %v641 = vsel %vm639, %v557, 0
      %v644 = vsel %vm639, %v558, 0
      %646 = vmatprep.subr.bf16.mxu0 %v608
      %647 = vmatpush1.bf16.msra.mxu0 %v607
      %648 = vmatprep.subr.bf16.mxu0 %v612
      %649 = vmatpush1.bf16.msra.mxu0 %v611
      %650 = vmatprep.subr.bf16.mxu0 %v616
      %651 = vmatpush1.bf16.msra.mxu0 %v615
      %652 = vmatprep.subr.bf16.mxu0 %v620
      %653 = vmatpush1.bf16.msra.mxu0 %v619
      %654 = vmatprep.subr.bf16.mxu0 0
      %655 = vmatpush1.bf16.msra.mxu0 0
      %656 = vmatprep.subr.bf16.mxu0 0
      %657 = vmatpush1.bf16.msra.mxu0 0
      %658 = vmatprep.subr.bf16.mxu0 0
      %659 = vmatpush1.bf16.msra.mxu0 0
      %660 = vmatprep.subr.bf16.mxu0 0
      %661 = vmatpush1.bf16.msra.mxu0 0
      %662 = vmatprep.subr.bf16.mxu0 0
      %663 = vmatpush1.bf16.msra.mxu0 0
      %664 = vmatprep.subr.bf16.mxu0 0
      %665 = vmatpush1.bf16.msra.mxu0 0
      %666 = vmatprep.subr.bf16.mxu0 0
      %667 = vmatpush1.bf16.msra.mxu0 0
      %668 = vmatprep.subr.bf16.mxu0 0
      %669 = vmatpush1.bf16.msra.mxu0 0
      %670 = vmatprep.subr.bf16.mxu0 0
      %671 = vmatpush1.bf16.msra.mxu0 0
      %672 = vmatprep.subr.bf16.mxu0 0
      %673 = vmatpush1.bf16.msra.mxu0 0
      %674 = vmatprep.subr.bf16.mxu0 0
      %675 = vmatpush1.bf16.msra.mxu0 0
      %676 = vmatprep.subr.bf16.mxu0 0
      %677 = vmatpush1.bf16.msra.mxu0 0
      %678 = vmatprep.mubr.bf16.mxu0 0
      %679 = vmatmul.mubr.bf16.gmra.mrb[0].mxu0 %v641
      %v680 = vpop.f32.mrb[0].mxu0
      %v681 = vadd.f32 0.0, %v680
      %v682 = vpop.f32.mrb[0].mxu0
      %v683 = vadd.f32 0.0, %v682
      %v684 = vpop.f32.mrb[0].mxu0
      %v685 = vadd.f32 0.0, %v684
      %v686 = vpop.f32.mrb[0].mxu0
      %v687 = vadd.f32 0.0, %v686
      %688 = vmatprep.mubr.bf16.mxu0 0
      %689 = vmatmul.mubr.bf16.gmra.mrb[0].mxu0 %v644
      %v690 = vpop.f32.mrb[0].mxu0
      %v691 = vadd.f32 0.0, %v690
      %v692 = vpop.f32.mrb[0].mxu0
      %v693 = vadd.f32 0.0, %v692
      %v694 = vpop.f32.mrb[0].mxu0
      %v695 = vadd.f32 0.0, %v694
      %v696 = vpop.f32.mrb[0].mxu0
      %v697 = vadd.f32 0.0, %v696
      %698 = vdwg.mxu0
      %699 = vmatprep.subr.bf16.mxu0 %v610
      %700 = vmatpush1.bf16.msra.mxu0 %v609
      %701 = vmatprep.subr.bf16.mxu0 %v614
      %702 = vmatpush1.bf16.msra.mxu0 %v613
      %703 = vmatprep.subr.bf16.mxu0 %v618
      %704 = vmatpush1.bf16.msra.mxu0 %v617
      %705 = vmatprep.subr.bf16.mxu0 %v622
      %706 = vmatpush1.bf16.msra.mxu0 %v621
      %707 = vmatprep.subr.bf16.mxu0 0
      %708 = vmatpush1.bf16.msra.mxu0 0
      %709 = vmatprep.subr.bf16.mxu0 0
      %710 = vmatpush1.bf16.msra.mxu0 0
      %711 = vmatprep.subr.bf16.mxu0 0
      %712 = vmatpush1.bf16.msra.mxu0 0
      %713 = vmatprep.subr.bf16.mxu0 0
      %714 = vmatpush1.bf16.msra.mxu0 0
      %715 = vmatprep.subr.bf16.mxu0 0
      %716 = vmatpush1.bf16.msra.mxu0 0
      %717 = vmatprep.subr.bf16.mxu0 0
      %718 = vmatpush1.bf16.msra.mxu0 0
      %719 = vmatprep.subr.bf16.mxu0 0
      %720 = vmatpush1.bf16.msra.mxu0 0
      %721 = vmatprep.subr.bf16.mxu0 0
      %722 = vmatpush1.bf16.msra.mxu0 0
      %723 = vmatprep.subr.bf16.mxu0 0
      %724 = vmatpush1.bf16.msra.mxu0 0
      %725 = vmatprep.subr.bf16.mxu0 0
      %726 = vmatpush1.bf16.msra.mxu0 0
      %727 = vmatprep.subr.bf16.mxu0 0
      %728 = vmatpush1.bf16.msra.mxu0 0
      %729 = vmatprep.subr.bf16.mxu0 0
      %730 = vmatpush1.bf16.msra.mxu0 0
      %731 = vmatprep.mubr.bf16.mxu0 0
      %732 = vmatmul.mubr.bf16.gmra.mrb[0].mxu0 %v641
      %v733 = vpop.f32.mrb[0].mxu0
      %v734 = vadd.f32 0.0, %v733
      %v735 = vpop.f32.mrb[0].mxu0
      %v736 = vadd.f32 0.0, %v735
      %v737 = vpop.f32.mrb[0].mxu0
      %v738 = vadd.f32 0.0, %v737
      %v739 = vpop.f32.mrb[0].mxu0
      %v740 = vadd.f32 0.0, %v739
      %741 = vmatprep.mubr.bf16.mxu0 0
      %742 = vmatmul.mubr.bf16.gmra.mrb[0].mxu0 %v644
      %v743 = vpop.f32.mrb[0].mxu0
      %v744 = vadd.f32 0.0, %v743
      %v745 = vpop.f32.mrb[0].mxu0
      %v746 = vadd.f32 0.0, %v745
      %v747 = vpop.f32.mrb[0].mxu0
      %v748 = vadd.f32 0.0, %v747
      %v749 = vpop.f32.mrb[0].mxu0
      %v750 = vadd.f32 0.0, %v749
      %751 = vdwg.mxu0
      %v756 = vunpack.c.l.b16 %v509
      %v757 = vunpack.c.l.b16 %v510
      %v758 = vunpack.c.l.b16 %v511
      %v759 = vunpack.c.l.b16 %v512
      %v760 = vpack.c.b16 %v757, %v756
      %v761 = vpack.c.b16 %v759, %v758
      %v778 = vunpack.c.l.b16 %v513
      %v779 = vunpack.c.h.b16 %v513
      %v780 = vunpack.c.l.b16 %v514
      %v781 = vunpack.c.h.b16 %v514
      %v782 = vunpack.c.l.b16 %v515
      %v783 = vunpack.c.h.b16 %v515
      %v784 = vunpack.c.l.b16 %v516
      %v785 = vunpack.c.h.b16 %v516
      %v786 = vunpack.c.l.b16 %v517
      %v787 = vunpack.c.h.b16 %v517
      %v788 = vunpack.c.l.b16 %v518
      %v789 = vunpack.c.h.b16 %v518
      %v790 = vunpack.c.l.b16 %v519
      %v791 = vunpack.c.h.b16 %v519
      %v792 = vunpack.c.l.b16 %v520
      %v793 = vunpack.c.h.b16 %v520
      %v794 = vunpack.c.l.b16 %v521
      %v795 = vunpack.c.h.b16 %v521
      %v796 = vunpack.c.l.b16 %v522
      %v797 = vunpack.c.h.b16 %v522
      %v798 = vunpack.c.l.b16 %v523
      %v799 = vunpack.c.h.b16 %v523
      %v800 = vunpack.c.l.b16 %v524
      %v801 = vunpack.c.h.b16 %v524
      %v802 = vunpack.c.l.b16 %v525
      %v803 = vunpack.c.h.b16 %v525
      %v804 = vunpack.c.l.b16 %v526
      %v805 = vunpack.c.h.b16 %v526
      %v806 = vunpack.c.l.b16 %v527
      %v807 = vunpack.c.h.b16 %v527
      %v808 = vunpack.c.l.b16 %v528
      %v809 = vunpack.c.h.b16 %v528
      %v810 = vpack.c.b16 %v782, %v778
      %v811 = vpack.c.b16 %v783, %v779
      %v812 = vpack.c.b16 %v784, %v780
      %v813 = vpack.c.b16 %v785, %v781
      %v814 = vpack.c.b16 %v790, %v786
      %v815 = vpack.c.b16 %v791, %v787
      %v816 = vpack.c.b16 %v792, %v788
      %v817 = vpack.c.b16 %v793, %v789
      %v818 = vpack.c.b16 %v798, %v794
      %v819 = vpack.c.b16 %v799, %v795
      %v820 = vpack.c.b16 %v800, %v796
      %v821 = vpack.c.b16 %v801, %v797
      %v822 = vpack.c.b16 %v806, %v802
      %v823 = vpack.c.b16 %v807, %v803
      %v824 = vpack.c.b16 %v808, %v804
      %v825 = vpack.c.b16 %v809, %v805
      %v843 = vsel %vm639, %v760, 0
      %v846 = vsel %vm639, %v761, 0
      %848 = vmatprep.subr.bf16.mxu0 %v811
      %849 = vmatpush1.bf16.msra.mxu0 %v810
      %850 = vmatprep.subr.bf16.mxu0 %v815
      %851 = vmatpush1.bf16.msra.mxu0 %v814
      %852 = vmatprep.subr.bf16.mxu0 %v819
      %853 = vmatpush1.bf16.msra.mxu0 %v818
      %854 = vmatprep.subr.bf16.mxu0 %v823
      %855 = vmatpush1.bf16.msra.mxu0 %v822
      %856 = vmatprep.subr.bf16.mxu0 0
      %857 = vmatpush1.bf16.msra.mxu0 0
      %858 = vmatprep.subr.bf16.mxu0 0
      %859 = vmatpush1.bf16.msra.mxu0 0
      %860 = vmatprep.subr.bf16.mxu0 0
      %861 = vmatpush1.bf16.msra.mxu0 0
      %862 = vmatprep.subr.bf16.mxu0 0
      %863 = vmatpush1.bf16.msra.mxu0 0
      %864 = vmatprep.subr.bf16.mxu0 0
      %865 = vmatpush1.bf16.msra.mxu0 0
      %866 = vmatprep.subr.bf16.mxu0 0
      %867 = vmatpush1.bf16.msra.mxu0 0
      %868 = vmatprep.subr.bf16.mxu0 0
      %869 = vmatpush1.bf16.msra.mxu0 0
      %870 = vmatprep.subr.bf16.mxu0 0
      %871 = vmatpush1.bf16.msra.mxu0 0
      %872 = vmatprep.subr.bf16.mxu0 0
      %873 = vmatpush1.bf16.msra.mxu0 0
      %874 = vmatprep.subr.bf16.mxu0 0
      %875 = vmatpush1.bf16.msra.mxu0 0
      %876 = vmatprep.subr.bf16.mxu0 0
      %877 = vmatpush1.bf16.msra.mxu0 0
      %878 = vmatprep.subr.bf16.mxu0 0
      %879 = vmatpush1.bf16.msra.mxu0 0
      %880 = vmatprep.mubr.bf16.mxu0 0
      %881 = vmatmul.mubr.bf16.gmra.mrb[0].mxu0 %v843
      %v882 = vpop.f32.mrb[0].mxu0
      %v883 = vadd.f32 %v681, %v882
      %v884 = vpop.f32.mrb[0].mxu0
      %v885 = vadd.f32 %v683, %v884
      %v886 = vpop.f32.mrb[0].mxu0
      %v887 = vadd.f32 %v685, %v886
      %v888 = vpop.f32.mrb[0].mxu0
      %v889 = vadd.f32 %v687, %v888
      %890 = vmatprep.mubr.bf16.mxu0 0
      %891 = vmatmul.mubr.bf16.gmra.mrb[0].mxu0 %v846
      %v892 = vpop.f32.mrb[0].mxu0
      %v893 = vadd.f32 %v691, %v892
      %v894 = vpop.f32.mrb[0].mxu0
      %v895 = vadd.f32 %v693, %v894
      %v896 = vpop.f32.mrb[0].mxu0
      %v897 = vadd.f32 %v695, %v896
      %v898 = vpop.f32.mrb[0].mxu0
      %v899 = vadd.f32 %v697, %v898
      %900 = vdwg.mxu0
      %901 = vmatprep.subr.bf16.mxu0 %v813
      %902 = vmatpush1.bf16.msra.mxu0 %v812
      %903 = vmatprep.subr.bf16.mxu0 %v817
      %904 = vmatpush1.bf16.msra.mxu0 %v816
      %905 = vmatprep.subr.bf16.mxu0 %v821
      %906 = vmatpush1.bf16.msra.mxu0 %v820
      %907 = vmatprep.subr.bf16.mxu0 %v825
      %908 = vmatpush1.bf16.msra.mxu0 %v824
      %909 = vmatprep.subr.bf16.mxu0 0
      %910 = vmatpush1.bf16.msra.mxu0 0
      %911 = vmatprep.subr.bf16.mxu0 0
      %912 = vmatpush1.bf16.msra.mxu0 0
      %913 = vmatprep.subr.bf16.mxu0 0
      %914 = vmatpush1.bf16.msra.mxu0 0
      %915 = vmatprep.subr.bf16.mxu0 0
      %916 = vmatpush1.bf16.msra.mxu0 0
      %917 = vmatprep.subr.bf16.mxu0 0
      %918 = vmatpush1.bf16.msra.mxu0 0
      %919 = vmatprep.subr.bf16.mxu0 0
      %920 = vmatpush1.bf16.msra.mxu0 0
      %921 = vmatprep.subr.bf16.mxu0 0
      %922 = vmatpush1.bf16.msra.mxu0 0
      %923 = vmatprep.subr.bf16.mxu0 0
      %924 = vmatpush1.bf16.msra.mxu0 0
      %925 = vmatprep.subr.bf16.mxu0 0
      %926 = vmatpush1.bf16.msra.mxu0 0
      %927 = vmatprep.subr.bf16.mxu0 0
      %928 = vmatpush1.bf16.msra.mxu0 0
      %929 = vmatprep.subr.bf16.mxu0 0
      %930 = vmatpush1.bf16.msra.mxu0 0
      %931 = vmatprep.subr.bf16.mxu0 0
      %932 = vmatpush1.bf16.msra.mxu0 0
      %933 = vmatprep.mubr.bf16.mxu0 0
      %934 = vmatmul.mubr.bf16.gmra.mrb[0].mxu0 %v843
      %v935 = vpop.f32.mrb[0].mxu0
      %v936 = vadd.f32 %v734, %v935
      %v937 = vpop.f32.mrb[0].mxu0
      %v938 = vadd.f32 %v736, %v937
      %v939 = vpop.f32.mrb[0].mxu0
      %v940 = vadd.f32 %v738, %v939
      %v941 = vpop.f32.mrb[0].mxu0
      %v942 = vadd.f32 %v740, %v941
      %943 = vmatprep.mubr.bf16.mxu0 0
      %944 = vmatmul.mubr.bf16.gmra.mrb[0].mxu0 %v846
      %v945 = vpop.f32.mrb[0].mxu0
      %v946 = vadd.f32 %v744, %v945
      %v947 = vpop.f32.mrb[0].mxu0
      %v948 = vadd.f32 %v746, %v947
      %v949 = vpop.f32.mrb[0].mxu0
      %v950 = vadd.f32 %v748, %v949
      %v951 = vpop.f32.mrb[0].mxu0
      %v952 = vadd.f32 %v750, %v951
      %953 = vdwg.mxu0
      %v954 = vld [vmem:[%s487] sm:$0xf]
      %v955 = vld [vmem:[%s487 + $0x4] sm:$0xf]
      %v956 = vld [vmem:[%s487 + $0x8] sm:$0xf]
      %v957 = vld [vmem:[%s487 + $0xc] sm:$0xf]
      %v958 = vld [vmem:[%s6] sm:$0xff]
      %v959 = vld [vmem:[%s6 + $0x8] sm:$0xff]
      %v960 = vld [vmem:[%s6 + $0x10] sm:$0xff]
      %v961 = vld [vmem:[%s6 + $0x18] sm:$0xff]
      %v962 = vld [vmem:[%s6 + $0x20] sm:$0xff]
      %v963 = vld [vmem:[%s6 + $0x28] sm:$0xff]
      %v964 = vld [vmem:[%s6 + $0x30] sm:$0xff]
      %v965 = vld [vmem:[%s6 + $0x38] sm:$0xff]
      %v966 = vld [vmem:[%s6 + $0x40] sm:$0xff]
      %v967 = vld [vmem:[%s6 + $0x48] sm:$0xff]
      %v968 = vld [vmem:[%s6 + $0x50] sm:$0xff]
      %v969 = vld [vmem:[%s6 + $0x58] sm:$0xff]
      %v970 = vld [vmem:[%s6 + $0x60] sm:$0xff]
      %v971 = vld [vmem:[%s6 + $0x68] sm:$0xff]
      %v972 = vld [vmem:[%s6 + $0x70] sm:$0xff]
      %v973 = vld [vmem:[%s6 + $0x78] sm:$0xff]
      %v974 = vld [vmem:[%s6 + $0x80] sm:$0xff]
      %v975 = vld [vmem:[%s6 + $0x88] sm:$0xff]
      %v976 = vld [vmem:[%s6 + $0x90] sm:$0xff]
      %v977 = vld [vmem:[%s6 + $0x98] sm:$0xff]
      %v978 = vld [vmem:[%s6 + $0xa0] sm:$0xff]
      %v979 = vld [vmem:[%s6 + $0xa8] sm:$0xff]
      %v980 = vld [vmem:[%s6 + $0xb0] sm:$0xff]
      %v981 = vld [vmem:[%s6 + $0xb8] sm:$0xff]
      %v982 = vld [vmem:[%s6 + $0xc0] sm:$0xff]
      %v983 = vld [vmem:[%s6 + $0xc8] sm:$0xff]
      %v984 = vld [vmem:[%s6 + $0xd0] sm:$0xff]
      %v985 = vld [vmem:[%s6 + $0xd8] sm:$0xff]
      %v986 = vld [vmem:[%s6 + $0xe0] sm:$0xff]
      %v987 = vld [vmem:[%s6 + $0xe8] sm:$0xff]
      %v988 = vld [vmem:[%s6 + $0xf0] sm:$0xff]
      %v989 = vld [vmem:[%s6 + $0xf8] sm:$0xff]
      %v994 = vunpack.c.l.b16 %v954
      %v995 = vunpack.c.l.b16 %v955
      %v996 = vunpack.c.l.b16 %v956
      %v997 = vunpack.c.l.b16 %v957
      %v998 = vpack.c.b16 %v995, %v994
      %v999 = vpack.c.b16 %v997, %v996
      %v1034 = vunpack.c.l.b16 %v958
      %v1035 = vunpack.c.h.b16 %v958
      %v1036 = vunpack.c.l.b16 %v959
      %v1037 = vunpack.c.h.b16 %v959
      %v1038 = vunpack.c.l.b16 %v960
      %v1039 = vunpack.c.h.b16 %v960
      %v1040 = vunpack.c.l.b16 %v961
      %v1041 = vunpack.c.h.b16 %v961
      %v1042 = vunpack.c.l.b16 %v962
      %v1043 = vunpack.c.h.b16 %v962
      %v1044 = vunpack.c.l.b16 %v963
      %v1045 = vunpack.c.h.b16 %v963
      %v1046 = vunpack.c.l.b16 %v964
      %v1047 = vunpack.c.h.b16 %v964
      %v1048 = vunpack.c.l.b16 %v965
      %v1049 = vunpack.c.h.b16 %v965
      %v1050 = vunpack.c.l.b16 %v966
      %v1051 = vunpack.c.h.b16 %v966
      %v1052 = vunpack.c.l.b16 %v967
      %v1053 = vunpack.c.h.b16 %v967
      %v1054 = vunpack.c.l.b16 %v968
      %v1055 = vunpack.c.h.b16 %v968
      %v1056 = vunpack.c.l.b16 %v969
      %v1057 = vunpack.c.h.b16 %v969
      %v1058 = vunpack.c.l.b16 %v970
      %v1059 = vunpack.c.h.b16 %v970
      %v1060 = vunpack.c.l.b16 %v971
      %v1061 = vunpack.c.h.b16 %v971
      %v1062 = vunpack.c.l.b16 %v972
      %v1063 = vunpack.c.h.b16 %v972
      %v1064 = vunpack.c.l.b16 %v973
      %v1065 = vunpack.c.h.b16 %v973
      %v1066 = vunpack.c.l.b16 %v974
      %v1067 = vunpack.c.h.b16 %v974
      %v1068 = vunpack.c.l.b16 %v975
      %v1069 = vunpack.c.h.b16 %v975
      %v1070 = vunpack.c.l.b16 %v976
      %v1071 = vunpack.c.h.b16 %v976
      %v1072 = vunpack.c.l.b16 %v977
      %v1073 = vunpack.c.h.b16 %v977
      %v1074 = vunpack.c.l.b16 %v978
      %v1075 = vunpack.c.h.b16 %v978
      %v1076 = vunpack.c.l.b16 %v979
      %v1077 = vunpack.c.h.b16 %v979
      %v1078 = vunpack.c.l.b16 %v980
      %v1079 = vunpack.c.h.b16 %v980
      %v1080 = vunpack.c.l.b16 %v981
      %v1081 = vunpack.c.h.b16 %v981
      %v1082 = vunpack.c.l.b16 %v982
      %v1083 = vunpack.c.h.b16 %v982
      %v1084 = vunpack.c.l.b16 %v983
      %v1085 = vunpack.c.h.b16 %v983
      %v1086 = vunpack.c.l.b16 %v984
      %v1087 = vunpack.c.h.b16 %v984
      %v1088 = vunpack.c.l.b16 %v985
      %v1089 = vunpack.c.h.b16 %v985
      %v1090 = vunpack.c.l.b16 %v986
      %v1091 = vunpack.c.h.b16 %v986
      %v1092 = vunpack.c.l.b16 %v987
      %v1093 = vunpack.c.h.b16 %v987
      %v1094 = vunpack.c.l.b16 %v988
      %v1095 = vunpack.c.h.b16 %v988
      %v1096 = vunpack.c.l.b16 %v989
      %v1097 = vunpack.c.h.b16 %v989
      %v1098 = vpack.c.b16 %v1038, %v1034
      %v1099 = vpack.c.b16 %v1039, %v1035
      %v1100 = vpack.c.b16 %v1040, %v1036
      %v1101 = vpack.c.b16 %v1041, %v1037
      %v1102 = vpack.c.b16 %v1046, %v1042
      %v1103 = vpack.c.b16 %v1047, %v1043
      %v1104 = vpack.c.b16 %v1048, %v1044
      %v1105 = vpack.c.b16 %v1049, %v1045
      %v1106 = vpack.c.b16 %v1054, %v1050
      %v1107 = vpack.c.b16 %v1055, %v1051
      %v1108 = vpack.c.b16 %v1056, %v1052
      %v1109 = vpack.c.b16 %v1057, %v1053
      %v1110 = vpack.c.b16 %v1062, %v1058
      %v1111 = vpack.c.b16 %v1063, %v1059
      %v1112 = vpack.c.b16 %v1064, %v1060
      %v1113 = vpack.c.b16 %v1065, %v1061
      %v1114 = vpack.c.b16 %v1070, %v1066
      %v1115 = vpack.c.b16 %v1071, %v1067
      %v1116 = vpack.c.b16 %v1072, %v1068
      %v1117 = vpack.c.b16 %v1073, %v1069
      %v1118 = vpack.c.b16 %v1078, %v1074
      %v1119 = vpack.c.b16 %v1079, %v1075
      %v1120 = vpack.c.b16 %v1080, %v1076
      %v1121 = vpack.c.b16 %v1081, %v1077
      %v1122 = vpack.c.b16 %v1086, %v1082
      %v1123 = vpack.c.b16 %v1087, %v1083
      %v1124 = vpack.c.b16 %v1088, %v1084
      %v1125 = vpack.c.b16 %v1089, %v1085
      %v1126 = vpack.c.b16 %v1094, %v1090
      %v1127 = vpack.c.b16 %v1095, %v1091
      %v1128 = vpack.c.b16 %v1096, %v1092
      %v1129 = vpack.c.b16 %v1097, %v1093
      %1162 = vmatprep.subr.bf16.mxu0 %v1099
      %1163 = vmatpush1.bf16.msra.mxu0 %v1098
      %1164 = vmatprep.subr.bf16.mxu0 %v1103
      %1165 = vmatpush1.bf16.msra.mxu0 %v1102
      %1166 = vmatprep.subr.bf16.mxu0 %v1107
      %1167 = vmatpush1.bf16.msra.mxu0 %v1106
      %1168 = vmatprep.subr.bf16.mxu0 %v1111
      %1169 = vmatpush1.bf16.msra.mxu0 %v1110
      %1170 = vmatprep.subr.bf16.mxu0 %v1115
      %1171 = vmatpush1.bf16.msra.mxu0 %v1114
      %1172 = vmatprep.subr.bf16.mxu0 %v1119
      %1173 = vmatpush1.bf16.msra.mxu0 %v1118
      %1174 = vmatprep.subr.bf16.mxu0 %v1123
      %1175 = vmatpush1.bf16.msra.mxu0 %v1122
      %1176 = vmatprep.subr.bf16.mxu0 %v1127
      %1177 = vmatpush1.bf16.msra.mxu0 %v1126
      %1178 = vmatprep.subr.bf16.mxu0 0
      %1179 = vmatpush1.bf16.msra.mxu0 0
      %1180 = vmatprep.subr.bf16.mxu0 0
      %1181 = vmatpush1.bf16.msra.mxu0 0
      %1182 = vmatprep.subr.bf16.mxu0 0
      %1183 = vmatpush1.bf16.msra.mxu0 0
      %1184 = vmatprep.subr.bf16.mxu0 0
      %1185 = vmatpush1.bf16.msra.mxu0 0
      %1186 = vmatprep.subr.bf16.mxu0 0
      %1187 = vmatpush1.bf16.msra.mxu0 0
      %1188 = vmatprep.subr.bf16.mxu0 0
      %1189 = vmatpush1.bf16.msra.mxu0 0
      %1190 = vmatprep.subr.bf16.mxu0 0
      %1191 = vmatpush1.bf16.msra.mxu0 0
      %1192 = vmatprep.subr.bf16.mxu0 0
      %1193 = vmatpush1.bf16.msra.mxu0 0
      %1194 = vmatprep.mubr.bf16.mxu0 0
      %1195 = vmatmul.mubr.bf16.gmra.mrb[0].mxu0 %v998
      %v1196 = vpop.f32.mrb[0].mxu0
      %v1197 = vadd.f32 0.0, %v1196
      %v1198 = vpop.f32.mrb[0].mxu0
      %v1199 = vadd.f32 0.0, %v1198
      %v1200 = vpop.f32.mrb[0].mxu0
      %v1201 = vadd.f32 0.0, %v1200
      %v1202 = vpop.f32.mrb[0].mxu0
      %v1203 = vadd.f32 0.0, %v1202
      %1204 = vmatprep.mubr.bf16.mxu0 0
      %1205 = vmatmul.mubr.bf16.gmra.mrb[0].mxu0 %v999
      %v1206 = vpop.f32.mrb[0].mxu0
      %v1207 = vadd.f32 0.0, %v1206
      %v1208 = vpop.f32.mrb[0].mxu0
      %v1209 = vadd.f32 0.0, %v1208
      %v1210 = vpop.f32.mrb[0].mxu0
      %v1211 = vadd.f32 0.0, %v1210
      %v1212 = vpop.f32.mrb[0].mxu0
      %v1213 = vadd.f32 0.0, %v1212
      %1214 = vdwg.mxu0
      %1215 = vmatprep.subr.bf16.mxu0 %v1101
      %1216 = vmatpush1.bf16.msra.mxu0 %v1100
      %1217 = vmatprep.subr.bf16.mxu0 %v1105
      %1218 = vmatpush1.bf16.msra.mxu0 %v1104
      %1219 = vmatprep.subr.bf16.mxu0 %v1109
      %1220 = vmatpush1.bf16.msra.mxu0 %v1108
      %1221 = vmatprep.subr.bf16.mxu0 %v1113
      %1222 = vmatpush1.bf16.msra.mxu0 %v1112
      %1223 = vmatprep.subr.bf16.mxu0 %v1117
      %1224 = vmatpush1.bf16.msra.mxu0 %v1116
      %1225 = vmatprep.subr.bf16.mxu0 %v1121
      %1226 = vmatpush1.bf16.msra.mxu0 %v1120
      %1227 = vmatprep.subr.bf16.mxu0 %v1125
      %1228 = vmatpush1.bf16.msra.mxu0 %v1124
      %1229 = vmatprep.subr.bf16.mxu0 %v1129
      %1230 = vmatpush1.bf16.msra.mxu0 %v1128
      %1231 = vmatprep.subr.bf16.mxu0 0
      %1232 = vmatpush1.bf16.msra.mxu0 0
      %1233 = vmatprep.subr.bf16.mxu0 0
      %1234 = vmatpush1.bf16.msra.mxu0 0
      %1235 = vmatprep.subr.bf16.mxu0 0
      %1236 = vmatpush1.bf16.msra.mxu0 0
      %1237 = vmatprep.subr.bf16.mxu0 0
      %1238 = vmatpush1.bf16.msra.mxu0 0
      %1239 = vmatprep.subr.bf16.mxu0 0
      %1240 = vmatpush1.bf16.msra.mxu0 0
      %1241 = vmatprep.subr.bf16.mxu0 0
      %1242 = vmatpush1.bf16.msra.mxu0 0
      %1243 = vmatprep.subr.bf16.mxu0 0
      %1244 = vmatpush1.bf16.msra.mxu0 0
      %1245 = vmatprep.subr.bf16.mxu0 0
      %1246 = vmatpush1.bf16.msra.mxu0 0
      %1247 = vmatprep.mubr.bf16.mxu0 0
      %1248 = vmatmul.mubr.bf16.gmra.mrb[0].mxu0 %v998
      %v1249 = vpop.f32.mrb[0].mxu0
      %v1250 = vadd.f32 0.0, %v1249
      %v1251 = vpop.f32.mrb[0].mxu0
      %v1252 = vadd.f32 0.0, %v1251
      %v1253 = vpop.f32.mrb[0].mxu0
      %v1254 = vadd.f32 0.0, %v1253
      %v1255 = vpop.f32.mrb[0].mxu0
      %v1256 = vadd.f32 0.0, %v1255
      %1257 = vmatprep.mubr.bf16.mxu0 0
      %1258 = vmatmul.mubr.bf16.gmra.mrb[0].mxu0 %v999
      %v1259 = vpop.f32.mrb[0].mxu0
      %v1260 = vadd.f32 0.0, %v1259
      %v1261 = vpop.f32.mrb[0].mxu0
      %v1262 = vadd.f32 0.0, %v1261
      %v1263 = vpop.f32.mrb[0].mxu0
      %v1264 = vadd.f32 0.0, %v1263
      %v1265 = vpop.f32.mrb[0].mxu0
      %v1266 = vadd.f32 0.0, %v1265
      %1267 = vdwg.mxu0
      %v1268 = vadd.f32 %v883, %v1197
      %v1269 = vadd.f32 %v885, %v1199
      %v1270 = vadd.f32 %v936, %v1250
      %v1271 = vadd.f32 %v938, %v1252
      %v1272 = vadd.f32 %v887, %v1201
      %v1273 = vadd.f32 %v889, %v1203
      %v1274 = vadd.f32 %v940, %v1254
      %v1275 = vadd.f32 %v942, %v1256
      %v1276 = vadd.f32 %v893, %v1207
      %v1277 = vadd.f32 %v895, %v1209
      %v1278 = vadd.f32 %v946, %v1260
      %v1279 = vadd.f32 %v948, %v1262
      %v1280 = vadd.f32 %v897, %v1211
      %v1281 = vadd.f32 %v899, %v1213
      %v1282 = vadd.f32 %v950, %v1264
      %v1283 = vadd.f32 %v952, %v1266
      %v1284 = vld [vmem:[%s498] sm:$0xff]
      %v1285 = vld [vmem:[%s498 + $0x8] sm:$0xff]
      %v1286 = vld [vmem:[%s498 + $0x10] sm:$0xff]
      %v1287 = vld [vmem:[%s498 + $0x18] sm:$0xff]
      %v1288 = vld [vmem:[%s7] sm:$0xff]
      %v1289 = vld [vmem:[%s7 + $0x8] sm:$0xff]
      %v1290 = vld [vmem:[%s7 + $0x10] sm:$0xff]
      %v1291 = vld [vmem:[%s7 + $0x18] sm:$0xff]
      %v1292 = vld [vmem:[%s7 + $0x20] sm:$0xff]
      %v1293 = vld [vmem:[%s7 + $0x28] sm:$0xff]
      %v1294 = vld [vmem:[%s7 + $0x30] sm:$0xff]
      %v1295 = vld [vmem:[%s7 + $0x38] sm:$0xff]
      %v1296 = vld [vmem:[%s7 + $0x40] sm:$0xff]
      %v1297 = vld [vmem:[%s7 + $0x48] sm:$0xff]
      %v1298 = vld [vmem:[%s7 + $0x50] sm:$0xff]
      %v1299 = vld [vmem:[%s7 + $0x58] sm:$0xff]
      %v1300 = vld [vmem:[%s7 + $0x60] sm:$0xff]
      %v1301 = vld [vmem:[%s7 + $0x68] sm:$0xff]
      %v1302 = vld [vmem:[%s7 + $0x70] sm:$0xff]
      %v1303 = vld [vmem:[%s7 + $0x78] sm:$0xff]
      %v1304 = vld [vmem:[%s7 + $0x80] sm:$0xff]
      %v1305 = vld [vmem:[%s7 + $0x88] sm:$0xff]
      %v1306 = vld [vmem:[%s7 + $0x90] sm:$0xff]
      %v1307 = vld [vmem:[%s7 + $0x98] sm:$0xff]
      %v1308 = vld [vmem:[%s7 + $0xa0] sm:$0xff]
      %v1309 = vld [vmem:[%s7 + $0xa8] sm:$0xff]
      %v1310 = vld [vmem:[%s7 + $0xb0] sm:$0xff]
      %v1311 = vld [vmem:[%s7 + $0xb8] sm:$0xff]
      %v1312 = vld [vmem:[%s7 + $0xc0] sm:$0xff]
      %v1313 = vld [vmem:[%s7 + $0xc8] sm:$0xff]
      %v1314 = vld [vmem:[%s7 + $0xd0] sm:$0xff]
      %v1315 = vld [vmem:[%s7 + $0xd8] sm:$0xff]
      %v1316 = vld [vmem:[%s7 + $0xe0] sm:$0xff]
      %v1317 = vld [vmem:[%s7 + $0xe8] sm:$0xff]
      %v1318 = vld [vmem:[%s7 + $0xf0] sm:$0xff]
      %v1319 = vld [vmem:[%s7 + $0xf8] sm:$0xff]
      %v1320 = vld [vmem:[%s7 + $0x100] sm:$0xff]
      %v1321 = vld [vmem:[%s7 + $0x108] sm:$0xff]
      %v1322 = vld [vmem:[%s7 + $0x110] sm:$0xff]
      %v1323 = vld [vmem:[%s7 + $0x118] sm:$0xff]
      %v1324 = vld [vmem:[%s7 + $0x120] sm:$0xff]
      %v1325 = vld [vmem:[%s7 + $0x128] sm:$0xff]
      %v1326 = vld [vmem:[%s7 + $0x130] sm:$0xff]
      %v1327 = vld [vmem:[%s7 + $0x138] sm:$0xff]
      %v1328 = vld [vmem:[%s7 + $0x140] sm:$0xff]
      %v1329 = vld [vmem:[%s7 + $0x148] sm:$0xff]
      %v1330 = vld [vmem:[%s7 + $0x150] sm:$0xff]
      %v1331 = vld [vmem:[%s7 + $0x158] sm:$0xff]
      %v1332 = vld [vmem:[%s7 + $0x160] sm:$0xff]
      %v1333 = vld [vmem:[%s7 + $0x168] sm:$0xff]
      %v1334 = vld [vmem:[%s7 + $0x170] sm:$0xff]
      %v1335 = vld [vmem:[%s7 + $0x178] sm:$0xff]
      %v1336 = vld [vmem:[%s7 + $0x180] sm:$0xff]
      %v1337 = vld [vmem:[%s7 + $0x188] sm:$0xff]
      %v1338 = vld [vmem:[%s7 + $0x190] sm:$0xff]
      %v1339 = vld [vmem:[%s7 + $0x198] sm:$0xff]
      %v1340 = vld [vmem:[%s7 + $0x1a0] sm:$0xff]
      %v1341 = vld [vmem:[%s7 + $0x1a8] sm:$0xff]
      %v1342 = vld [vmem:[%s7 + $0x1b0] sm:$0xff]
      %v1343 = vld [vmem:[%s7 + $0x1b8] sm:$0xff]
      %v1344 = vld [vmem:[%s7 + $0x1c0] sm:$0xff]
      %v1345 = vld [vmem:[%s7 + $0x1c8] sm:$0xff]
      %v1346 = vld [vmem:[%s7 + $0x1d0] sm:$0xff]
      %v1347 = vld [vmem:[%s7 + $0x1d8] sm:$0xff]
      %v1348 = vld [vmem:[%s7 + $0x1e0] sm:$0xff]
      %v1349 = vld [vmem:[%s7 + $0x1e8] sm:$0xff]
      %v1350 = vld [vmem:[%s7 + $0x1f0] sm:$0xff]
      %v1351 = vld [vmem:[%s7 + $0x1f8] sm:$0xff]
      %v1356 = vunpack.c.l.b16 %v1284
      %v1357 = vunpack.c.h.b16 %v1284
      %v1358 = vunpack.c.l.b16 %v1285
      %v1359 = vunpack.c.h.b16 %v1285
      %v1360 = vunpack.c.l.b16 %v1286
      %v1361 = vunpack.c.h.b16 %v1286
      %v1362 = vunpack.c.l.b16 %v1287
      %v1363 = vunpack.c.h.b16 %v1287
      %v1364 = vpack.c.b16 %v1358, %v1356
      %v1365 = vpack.c.b16 %v1359, %v1357
      %v1366 = vpack.c.b16 %v1362, %v1360
      %v1367 = vpack.c.b16 %v1363, %v1361
      %v1436 = vunpack.c.l.b16 %v1288
      %v1437 = vunpack.c.h.b16 %v1288
      %v1438 = vunpack.c.l.b16 %v1289
      %v1439 = vunpack.c.h.b16 %v1289
      %v1440 = vunpack.c.l.b16 %v1290
      %v1441 = vunpack.c.h.b16 %v1290
      %v1442 = vunpack.c.l.b16 %v1291
      %v1443 = vunpack.c.h.b16 %v1291
      %v1444 = vunpack.c.l.b16 %v1292
      %v1445 = vunpack.c.h.b16 %v1292
      %v1446 = vunpack.c.l.b16 %v1293
      %v1447 = vunpack.c.h.b16 %v1293
      %v1448 = vunpack.c.l.b16 %v1294
      %v1449 = vunpack.c.h.b16 %v1294
      %v1450 = vunpack.c.l.b16 %v1295
      %v1451 = vunpack.c.h.b16 %v1295
      %v1452 = vunpack.c.l.b16 %v1296
      %v1453 = vunpack.c.h.b16 %v1296
      %v1454 = vunpack.c.l.b16 %v1297
      %v1455 = vunpack.c.h.b16 %v1297
      %v1456 = vunpack.c.l.b16 %v1298
      %v1457 = vunpack.c.h.b16 %v1298
      %v1458 = vunpack.c.l.b16 %v1299
      %v1459 = vunpack.c.h.b16 %v1299
      %v1460 = vunpack.c.l.b16 %v1300
      %v1461 = vunpack.c.h.b16 %v1300
      %v1462 = vunpack.c.l.b16 %v1301
      %v1463 = vunpack.c.h.b16 %v1301
      %v1464 = vunpack.c.l.b16 %v1302
      %v1465 = vunpack.c.h.b16 %v1302
      %v1466 = vunpack.c.l.b16 %v1303
      %v1467 = vunpack.c.h.b16 %v1303
      %v1468 = vunpack.c.l.b16 %v1304
      %v1469 = vunpack.c.h.b16 %v1304
      %v1470 = vunpack.c.l.b16 %v1305
      %v1471 = vunpack.c.h.b16 %v1305
      %v1472 = vunpack.c.l.b16 %v1306
      %v1473 = vunpack.c.h.b16 %v1306
      %v1474 = vunpack.c.l.b16 %v1307
      %v1475 = vunpack.c.h.b16 %v1307
      %v1476 = vunpack.c.l.b16 %v1308
      %v1477 = vunpack.c.h.b16 %v1308
      %v1478 = vunpack.c.l.b16 %v1309
      %v1479 = vunpack.c.h.b16 %v1309
      %v1480 = vunpack.c.l.b16 %v1310
      %v1481 = vunpack.c.h.b16 %v1310
      %v1482 = vunpack.c.l.b16 %v1311
      %v1483 = vunpack.c.h.b16 %v1311
      %v1484 = vunpack.c.l.b16 %v1312
      %v1485 = vunpack.c.h.b16 %v1312
      %v1486 = vunpack.c.l.b16 %v1313
      %v1487 = vunpack.c.h.b16 %v1313
      %v1488 = vunpack.c.l.b16 %v1314
      %v1489 = vunpack.c.h.b16 %v1314
      %v1490 = vunpack.c.l.b16 %v1315
      %v1491 = vunpack.c.h.b16 %v1315
      %v1492 = vunpack.c.l.b16 %v1316
      %v1493 = vunpack.c.h.b16 %v1316
      %v1494 = vunpack.c.l.b16 %v1317
      %v1495 = vunpack.c.h.b16 %v1317
      %v1496 = vunpack.c.l.b16 %v1318
      %v1497 = vunpack.c.h.b16 %v1318
      %v1498 = vunpack.c.l.b16 %v1319
      %v1499 = vunpack.c.h.b16 %v1319
      %v1500 = vunpack.c.l.b16 %v1320
      %v1501 = vunpack.c.h.b16 %v1320
      %v1502 = vunpack.c.l.b16 %v1321
      %v1503 = vunpack.c.h.b16 %v1321
      %v1504 = vunpack.c.l.b16 %v1322
      %v1505 = vunpack.c.h.b16 %v1322
      %v1506 = vunpack.c.l.b16 %v1323
      %v1507 = vunpack.c.h.b16 %v1323
      %v1508 = vunpack.c.l.b16 %v1324
      %v1509 = vunpack.c.h.b16 %v1324
      %v1510 = vunpack.c.l.b16 %v1325
      %v1511 = vunpack.c.h.b16 %v1325
      %v1512 = vunpack.c.l.b16 %v1326
      %v1513 = vunpack.c.h.b16 %v1326
      %v1514 = vunpack.c.l.b16 %v1327
      %v1515 = vunpack.c.h.b16 %v1327
      %v1516 = vunpack.c.l.b16 %v1328
      %v1517 = vunpack.c.h.b16 %v1328
      %v1518 = vunpack.c.l.b16 %v1329
      %v1519 = vunpack.c.h.b16 %v1329
      %v1520 = vunpack.c.l.b16 %v1330
      %v1521 = vunpack.c.h.b16 %v1330
      %v1522 = vunpack.c.l.b16 %v1331
      %v1523 = vunpack.c.h.b16 %v1331
      %v1524 = vunpack.c.l.b16 %v1332
      %v1525 = vunpack.c.h.b16 %v1332
      %v1526 = vunpack.c.l.b16 %v1333
      %v1527 = vunpack.c.h.b16 %v1333
      %v1528 = vunpack.c.l.b16 %v1334
      %v1529 = vunpack.c.h.b16 %v1334
      %v1530 = vunpack.c.l.b16 %v1335
      %v1531 = vunpack.c.h.b16 %v1335
      %v1532 = vunpack.c.l.b16 %v1336
      %v1533 = vunpack.c.h.b16 %v1336
      %v1534 = vunpack.c.l.b16 %v1337
      %v1535 = vunpack.c.h.b16 %v1337
      %v1536 = vunpack.c.l.b16 %v1338
      %v1537 = vunpack.c.h.b16 %v1338
      %v1538 = vunpack.c.l.b16 %v1339
      %v1539 = vunpack.c.h.b16 %v1339
      %v1540 = vunpack.c.l.b16 %v1340
      %v1541 = vunpack.c.h.b16 %v1340
      %v1542 = vunpack.c.l.b16 %v1341
      %v1543 = vunpack.c.h.b16 %v1341
      %v1544 = vunpack.c.l.b16 %v1342
      %v1545 = vunpack.c.h.b16 %v1342
      %v1546 = vunpack.c.l.b16 %v1343
      %v1547 = vunpack.c.h.b16 %v1343
      %v1548 = vunpack.c.l.b16 %v1344
      %v1549 = vunpack.c.h.b16 %v1344
      %v1550 = vunpack.c.l.b16 %v1345
      %v1551 = vunpack.c.h.b16 %v1345
      %v1552 = vunpack.c.l.b16 %v1346
      %v1553 = vunpack.c.h.b16 %v1346
      %v1554 = vunpack.c.l.b16 %v1347
      %v1555 = vunpack.c.h.b16 %v1347
      %v1556 = vunpack.c.l.b16 %v1348
      %v1557 = vunpack.c.h.b16 %v1348
      %v1558 = vunpack.c.l.b16 %v1349
      %v1559 = vunpack.c.h.b16 %v1349
      %v1560 = vunpack.c.l.b16 %v1350
      %v1561 = vunpack.c.h.b16 %v1350
      %v1562 = vunpack.c.l.b16 %v1351
      %v1563 = vunpack.c.h.b16 %v1351
      %v1564 = vpack.c.b16 %v1440, %v1436
      %v1565 = vpack.c.b16 %v1441, %v1437
      %v1566 = vpack.c.b16 %v1442, %v1438
      %v1567 = vpack.c.b16 %v1443, %v1439
      %v1568 = vpack.c.b16 %v1448, %v1444
      %v1569 = vpack.c.b16 %v1449, %v1445
      %v1570 = vpack.c.b16 %v1450, %v1446
      %v1571 = vpack.c.b16 %v1451, %v1447
      %v1572 = vpack.c.b16 %v1456, %v1452
      %v1573 = vpack.c.b16 %v1457, %v1453
      %v1574 = vpack.c.b16 %v1458, %v1454
      %v1575 = vpack.c.b16 %v1459, %v1455
      %v1576 = vpack.c.b16 %v1464, %v1460
      %v1577 = vpack.c.b16 %v1465, %v1461
      %v1578 = vpack.c.b16 %v1466, %v1462
      %v1579 = vpack.c.b16 %v1467, %v1463
      %v1580 = vpack.c.b16 %v1472, %v1468
      %v1581 = vpack.c.b16 %v1473, %v1469
      %v1582 = vpack.c.b16 %v1474, %v1470
      %v1583 = vpack.c.b16 %v1475, %v1471
      %v1584 = vpack.c.b16 %v1480, %v1476
      %v1585 = vpack.c.b16 %v1481, %v1477
      %v1586 = vpack.c.b16 %v1482, %v1478
      %v1587 = vpack.c.b16 %v1483, %v1479
      %v1588 = vpack.c.b16 %v1488, %v1484
      %v1589 = vpack.c.b16 %v1489, %v1485
      %v1590 = vpack.c.b16 %v1490, %v1486
      %v1591 = vpack.c.b16 %v1491, %v1487
      %v1592 = vpack.c.b16 %v1496, %v1492
      %v1593 = vpack.c.b16 %v1497, %v1493
      %v1594 = vpack.c.b16 %v1498, %v1494
      %v1595 = vpack.c.b16 %v1499, %v1495
      %v1596 = vpack.c.b16 %v1504, %v1500
      %v1597 = vpack.c.b16 %v1505, %v1501
      %v1598 = vpack.c.b16 %v1506, %v1502
      %v1599 = vpack.c.b16 %v1507, %v1503
      %v1600 = vpack.c.b16 %v1512, %v1508
      %v1601 = vpack.c.b16 %v1513, %v1509
      %v1602 = vpack.c.b16 %v1514, %v1510
      %v1603 = vpack.c.b16 %v1515, %v1511
      %v1604 = vpack.c.b16 %v1520, %v1516
      %v1605 = vpack.c.b16 %v1521, %v1517
      %v1606 = vpack.c.b16 %v1522, %v1518
      %v1607 = vpack.c.b16 %v1523, %v1519
      %v1608 = vpack.c.b16 %v1528, %v1524
      %v1609 = vpack.c.b16 %v1529, %v1525
      %v1610 = vpack.c.b16 %v1530, %v1526
      %v1611 = vpack.c.b16 %v1531, %v1527
      %v1612 = vpack.c.b16 %v1536, %v1532
      %v1613 = vpack.c.b16 %v1537, %v1533
      %v1614 = vpack.c.b16 %v1538, %v1534
      %v1615 = vpack.c.b16 %v1539, %v1535
      %v1616 = vpack.c.b16 %v1544, %v1540
      %v1617 = vpack.c.b16 %v1545, %v1541
      %v1618 = vpack.c.b16 %v1546, %v1542
      %v1619 = vpack.c.b16 %v1547, %v1543
      %v1620 = vpack.c.b16 %v1552, %v1548
      %v1621 = vpack.c.b16 %v1553, %v1549
      %v1622 = vpack.c.b16 %v1554, %v1550
      %v1623 = vpack.c.b16 %v1555, %v1551
      %v1624 = vpack.c.b16 %v1560, %v1556
      %v1625 = vpack.c.b16 %v1561, %v1557
      %v1626 = vpack.c.b16 %v1562, %v1558
      %v1627 = vpack.c.b16 %v1563, %v1559
      %1692 = vmatprep.subr.bf16.mxu0 %v1565
      %1693 = vmatpush1.bf16.msra.mxu0 %v1564
      %1694 = vmatprep.subr.bf16.mxu0 %v1569
      %1695 = vmatpush1.bf16.msra.mxu0 %v1568
      %1696 = vmatprep.subr.bf16.mxu0 %v1573
      %1697 = vmatpush1.bf16.msra.mxu0 %v1572
      %1698 = vmatprep.subr.bf16.mxu0 %v1577
      %1699 = vmatpush1.bf16.msra.mxu0 %v1576
      %1700 = vmatprep.subr.bf16.mxu0 %v1581
      %1701 = vmatpush1.bf16.msra.mxu0 %v1580
      %1702 = vmatprep.subr.bf16.mxu0 %v1585
      %1703 = vmatpush1.bf16.msra.mxu0 %v1584
      %1704 = vmatprep.subr.bf16.mxu0 %v1589
      %1705 = vmatpush1.bf16.msra.mxu0 %v1588
      %1706 = vmatprep.subr.bf16.mxu0 %v1593
      %1707 = vmatpush1.bf16.msra.mxu0 %v1592
      %1708 = vmatprep.subr.bf16.mxu0 %v1597
      %1709 = vmatpush1.bf16.msra.mxu0 %v1596
      %1710 = vmatprep.subr.bf16.mxu0 %v1601
      %1711 = vmatpush1.bf16.msra.mxu0 %v1600
      %1712 = vmatprep.subr.bf16.mxu0 %v1605
      %1713 = vmatpush1.bf16.msra.mxu0 %v1604
      %1714 = vmatprep.subr.bf16.mxu0 %v1609
      %1715 = vmatpush1.bf16.msra.mxu0 %v1608
      %1716 = vmatprep.subr.bf16.mxu0 %v1613
      %1717 = vmatpush1.bf16.msra.mxu0 %v1612
      %1718 = vmatprep.subr.bf16.mxu0 %v1617
      %1719 = vmatpush1.bf16.msra.mxu0 %v1616
      %1720 = vmatprep.subr.bf16.mxu0 %v1621
      %1721 = vmatpush1.bf16.msra.mxu0 %v1620
      %1722 = vmatprep.subr.bf16.mxu0 %v1625
      %1723 = vmatpush1.bf16.msra.mxu0 %v1624
      %1724 = vmatprep.mubr.bf16.mxu0 %v1365
      %1725 = vmatmul.mubr.bf16.gmra.mrb[0].mxu0 %v1364
      %v1726 = vpop.f32.mrb[0].mxu0
      %v1727 = vadd.f32 0.0, %v1726
      %v1728 = vpop.f32.mrb[0].mxu0
      %v1729 = vadd.f32 0.0, %v1728
      %v1730 = vpop.f32.mrb[0].mxu0
      %v1731 = vadd.f32 0.0, %v1730
      %v1732 = vpop.f32.mrb[0].mxu0
      %v1733 = vadd.f32 0.0, %v1732
      %1734 = vmatprep.mubr.bf16.mxu0 %v1367
      %1735 = vmatmul.mubr.bf16.gmra.mrb[0].mxu0 %v1366
      %v1736 = vpop.f32.mrb[0].mxu0
      %v1737 = vadd.f32 0.0, %v1736
      %v1738 = vpop.f32.mrb[0].mxu0
      %v1739 = vadd.f32 0.0, %v1738
      %v1740 = vpop.f32.mrb[0].mxu0
      %v1741 = vadd.f32 0.0, %v1740
      %v1742 = vpop.f32.mrb[0].mxu0
      %v1743 = vadd.f32 0.0, %v1742
      %1744 = vdwg.mxu0
      %1745 = vmatprep.subr.bf16.mxu0 %v1567
      %1746 = vmatpush1.bf16.msra.mxu0 %v1566
      %1747 = vmatprep.subr.bf16.mxu0 %v1571
      %1748 = vmatpush1.bf16.msra.mxu0 %v1570
      %1749 = vmatprep.subr.bf16.mxu0 %v1575
      %1750 = vmatpush1.bf16.msra.mxu0 %v1574
      %1751 = vmatprep.subr.bf16.mxu0 %v1579
      %1752 = vmatpush1.bf16.msra.mxu0 %v1578
      %1753 = vmatprep.subr.bf16.mxu0 %v1583
      %1754 = vmatpush1.bf16.msra.mxu0 %v1582
      %1755 = vmatprep.subr.bf16.mxu0 %v1587
      %1756 = vmatpush1.bf16.msra.mxu0 %v1586
      %1757 = vmatprep.subr.bf16.mxu0 %v1591
      %1758 = vmatpush1.bf16.msra.mxu0 %v1590
      %1759 = vmatprep.subr.bf16.mxu0 %v1595
      %1760 = vmatpush1.bf16.msra.mxu0 %v1594
      %1761 = vmatprep.subr.bf16.mxu0 %v1599
      %1762 = vmatpush1.bf16.msra.mxu0 %v1598
      %1763 = vmatprep.subr.bf16.mxu0 %v1603
      %1764 = vmatpush1.bf16.msra.mxu0 %v1602
      %1765 = vmatprep.subr.bf16.mxu0 %v1607
      %1766 = vmatpush1.bf16.msra.mxu0 %v1606
      %1767 = vmatprep.subr.bf16.mxu0 %v1611
      %1768 = vmatpush1.bf16.msra.mxu0 %v1610
      %1769 = vmatprep.subr.bf16.mxu0 %v1615
      %1770 = vmatpush1.bf16.msra.mxu0 %v1614
      %1771 = vmatprep.subr.bf16.mxu0 %v1619
      %1772 = vmatpush1.bf16.msra.mxu0 %v1618
      %1773 = vmatprep.subr.bf16.mxu0 %v1623
      %1774 = vmatpush1.bf16.msra.mxu0 %v1622
      %1775 = vmatprep.subr.bf16.mxu0 %v1627
      %1776 = vmatpush1.bf16.msra.mxu0 %v1626
      %1777 = vmatprep.mubr.bf16.mxu0 %v1365
      %1778 = vmatmul.mubr.bf16.gmra.mrb[0].mxu0 %v1364
      %v1779 = vpop.f32.mrb[0].mxu0
      %v1780 = vadd.f32 0.0, %v1779
      %v1781 = vpop.f32.mrb[0].mxu0
      %v1782 = vadd.f32 0.0, %v1781
      %v1783 = vpop.f32.mrb[0].mxu0
      %v1784 = vadd.f32 0.0, %v1783
      %v1785 = vpop.f32.mrb[0].mxu0
      %v1786 = vadd.f32 0.0, %v1785
      %1787 = vmatprep.mubr.bf16.mxu0 %v1367
      %1788 = vmatmul.mubr.bf16.gmra.mrb[0].mxu0 %v1366
      %v1789 = vpop.f32.mrb[0].mxu0
      %v1790 = vadd.f32 0.0, %v1789
      %v1791 = vpop.f32.mrb[0].mxu0
      %v1792 = vadd.f32 0.0, %v1791
      %v1793 = vpop.f32.mrb[0].mxu0
      %v1794 = vadd.f32 0.0, %v1793
      %v1795 = vpop.f32.mrb[0].mxu0
      %v1796 = vadd.f32 0.0, %v1795
      %1797 = vdwg.mxu0
      %v1798 = vadd.f32 %v1268, %v1727
      %v1799 = vadd.f32 %v1269, %v1729
      %v1800 = vadd.f32 %v1270, %v1780
      %v1801 = vadd.f32 %v1271, %v1782
      %v1802 = vadd.f32 %v1272, %v1731
      %v1803 = vadd.f32 %v1273, %v1733
      %v1804 = vadd.f32 %v1274, %v1784
      %v1805 = vadd.f32 %v1275, %v1786
      %v1806 = vadd.f32 %v1276, %v1737
      %v1807 = vadd.f32 %v1277, %v1739
      %v1808 = vadd.f32 %v1278, %v1790
      %v1809 = vadd.f32 %v1279, %v1792
      %v1810 = vadd.f32 %v1280, %v1741
      %v1811 = vadd.f32 %v1281, %v1743
      %v1812 = vadd.f32 %v1282, %v1794
      %v1813 = vadd.f32 %v1283, %v1796
      %v1814 = vld [vmem:[%s8] sm:$0xf]
      %v1816 = vlaneseq
      %v1817 = vshrl.u32 %v1816, 7
      %v1818 = vsub.s32 0, %v1817
      %v1819 = vrot.slane %v1814, %v1818
      %v1820 = vlaneseq
      %v1821 = vshrl.u32 %v1820, 7
      %v1822 = vsub.s32 1, %v1821
      %v1823 = vrot.slane %v1814, %v1822
      %v1824 = vlaneseq
      %v1825 = vshrl.u32 %v1824, 7
      %v1826 = vsub.s32 2, %v1825
      %v1827 = vrot.slane %v1814, %v1826
      %v1828 = vlaneseq
      %v1829 = vshrl.u32 %v1828, 7
      %v1830 = vsub.s32 3, %v1829
      %v1831 = vrot.slane %v1814, %v1830
      %v1836 = vadd.f32 %v1798, %v1819
      %v1837 = vadd.f32 %v1799, %v1823
      %v1838 = vadd.f32 %v1800, %v1827
      %v1839 = vadd.f32 %v1801, %v1831
      %v1840 = vadd.f32 %v1802, %v1819
      %v1841 = vadd.f32 %v1803, %v1823
      %v1842 = vadd.f32 %v1804, %v1827
      %v1843 = vadd.f32 %v1805, %v1831
      %v1844 = vadd.f32 %v1806, %v1819
      %v1845 = vadd.f32 %v1807, %v1823
      %v1846 = vadd.f32 %v1808, %v1827
      %v1847 = vadd.f32 %v1809, %v1831
      %v1848 = vadd.f32 %v1810, %v1819
      %v1849 = vadd.f32 %v1811, %v1823
      %v1850 = vadd.f32 %v1812, %v1827
      %v1851 = vadd.f32 %v1813, %v1831
      %vm1852 = vcmp.ge.f32.partialorder %v1836, 0.0
      %vm1853 = vcmp.ge.f32.partialorder %v1837, 0.0
      %vm1854 = vcmp.ge.f32.partialorder %v1838, 0.0
      %vm1855 = vcmp.ge.f32.partialorder %v1839, 0.0
      %vm1856 = vcmp.ge.f32.partialorder %v1840, 0.0
      %vm1857 = vcmp.ge.f32.partialorder %v1841, 0.0
      %vm1858 = vcmp.ge.f32.partialorder %v1842, 0.0
      %vm1859 = vcmp.ge.f32.partialorder %v1843, 0.0
      %vm1860 = vcmp.ge.f32.partialorder %v1844, 0.0
      %vm1861 = vcmp.ge.f32.partialorder %v1845, 0.0
      %vm1862 = vcmp.ge.f32.partialorder %v1846, 0.0
      %vm1863 = vcmp.ge.f32.partialorder %v1847, 0.0
      %vm1864 = vcmp.ge.f32.partialorder %v1848, 0.0
      %vm1865 = vcmp.ge.f32.partialorder %v1849, 0.0
      %vm1866 = vcmp.ge.f32.partialorder %v1850, 0.0
      %vm1867 = vcmp.ge.f32.partialorder %v1851, 0.0
      %v1868 = vmul.f32 %v1836, 0.2
      %v1869 = vmul.f32 %v1837, 0.2
      %v1870 = vmul.f32 %v1838, 0.2
      %v1871 = vmul.f32 %v1839, 0.2
      %v1872 = vmul.f32 %v1840, 0.2
      %v1873 = vmul.f32 %v1841, 0.2
      %v1874 = vmul.f32 %v1842, 0.2
      %v1875 = vmul.f32 %v1843, 0.2
      %v1876 = vmul.f32 %v1844, 0.2
      %v1877 = vmul.f32 %v1845, 0.2
      %v1878 = vmul.f32 %v1846, 0.2
      %v1879 = vmul.f32 %v1847, 0.2
      %v1880 = vmul.f32 %v1848, 0.2
      %v1881 = vmul.f32 %v1849, 0.2
      %v1882 = vmul.f32 %v1850, 0.2
      %v1883 = vmul.f32 %v1851, 0.2
      %v1884 = vsel %vm1852, %v1836, %v1868
      %v1885 = vsel %vm1853, %v1837, %v1869
      %v1886 = vsel %vm1854, %v1838, %v1870
      %v1887 = vsel %vm1855, %v1839, %v1871
      %v1888 = vsel %vm1856, %v1840, %v1872
      %v1889 = vsel %vm1857, %v1841, %v1873
      %v1890 = vsel %vm1858, %v1842, %v1874
      %v1891 = vsel %vm1859, %v1843, %v1875
      %v1892 = vsel %vm1860, %v1844, %v1876
      %v1893 = vsel %vm1861, %v1845, %v1877
      %v1894 = vsel %vm1862, %v1846, %v1878
      %v1895 = vsel %vm1863, %v1847, %v1879
      %v1896 = vsel %vm1864, %v1848, %v1880
      %v1897 = vsel %vm1865, %v1849, %v1881
      %v1898 = vsel %vm1866, %v1850, %v1882
      %v1899 = vsel %vm1867, %v1851, %v1883
      %v1900 = vmax.f32 %v1884, %v1888
      %v1901 = vmax.f32 %v1900, %v1892
      %v1902 = vmax.f32 %v1901, %v1896
      %v1903 = vrot.slane %v1902, 4
      %v1904 = vmax.f32 %v1902, %v1903
      %v1905 = vrot.slane %v1904, 2
      %v1906 = vmax.f32 %v1904, %v1905
      %v1907 = vrot.slane %v1906, 1
      %v1908 = vmax.f32 %v1906, %v1907
      %v1909 = vmax.f32 %v1885, %v1889
      %v1910 = vmax.f32 %v1909, %v1893
      %v1911 = vmax.f32 %v1910, %v1897
      %v1912 = vrot.slane %v1911, 4
      %v1913 = vmax.f32 %v1911, %v1912
      %v1914 = vrot.slane %v1913, 2
      %v1915 = vmax.f32 %v1913, %v1914
      %v1916 = vrot.slane %v1915, 1
      %v1917 = vmax.f32 %v1915, %v1916
      %v1918 = vmax.f32 %v1886, %v1890
      %v1919 = vmax.f32 %v1918, %v1894
      %v1920 = vmax.f32 %v1919, %v1898
      %v1921 = vrot.slane %v1920, 4
      %v1922 = vmax.f32 %v1920, %v1921
      %v1923 = vrot.slane %v1922, 2
      %v1924 = vmax.f32 %v1922, %v1923
      %v1925 = vrot.slane %v1924, 1
      %v1926 = vmax.f32 %v1924, %v1925
      %v1927 = vmax.f32 %v1887, %v1891
      %v1928 = vmax.f32 %v1927, %v1895
      %v1929 = vmax.f32 %v1928, %v1899
      %v1930 = vrot.slane %v1929, 4
      %v1931 = vmax.f32 %v1929, %v1930
      %v1932 = vrot.slane %v1931, 2
      %v1933 = vmax.f32 %v1931, %v1932
      %v1934 = vrot.slane %v1933, 1
      %v1935 = vmax.f32 %v1933, %v1934
      %v1936 = vadd.f32 %v1884, %v1888
      %v1937 = vadd.f32 %v1936, %v1892
      %v1938 = vadd.f32 %v1937, %v1896
      %v1939 = vrot.slane %v1938, 4
      %v1940 = vadd.f32 %v1938, %v1939
      %v1941 = vrot.slane %v1940, 2
      %v1942 = vadd.f32 %v1940, %v1941
      %v1943 = vrot.slane %v1942, 1
      %v1944 = vadd.f32 %v1942, %v1943
      %v1945 = vadd.f32 %v1885, %v1889
      %v1946 = vadd.f32 %v1945, %v1893
      %v1947 = vadd.f32 %v1946, %v1897
      %v1948 = vrot.slane %v1947, 4
      %v1949 = vadd.f32 %v1947, %v1948
      %v1950 = vrot.slane %v1949, 2
      %v1951 = vadd.f32 %v1949, %v1950
      %v1952 = vrot.slane %v1951, 1
      %v1953 = vadd.f32 %v1951, %v1952
      %v1954 = vadd.f32 %v1886, %v1890
      %v1955 = vadd.f32 %v1954, %v1894
      %v1956 = vadd.f32 %v1955, %v1898
      %v1957 = vrot.slane %v1956, 4
      %v1958 = vadd.f32 %v1956, %v1957
      %v1959 = vrot.slane %v1958, 2
      %v1960 = vadd.f32 %v1958, %v1959
      %v1961 = vrot.slane %v1960, 1
      %v1962 = vadd.f32 %v1960, %v1961
      %v1963 = vadd.f32 %v1887, %v1891
      %v1964 = vadd.f32 %v1963, %v1895
      %v1965 = vadd.f32 %v1964, %v1899
      %v1966 = vrot.slane %v1965, 4
      %v1967 = vadd.f32 %v1965, %v1966
      %v1968 = vrot.slane %v1967, 2
      %v1969 = vadd.f32 %v1967, %v1968
      %v1970 = vrot.slane %v1969, 1
      %v1971 = vadd.f32 %v1969, %v1970
      %p1972 = scmp.eq.s32.totalorder %s27, 0
      // Predicated region
      $region57: #{dgcnn_forward.9} parent=55 // pred_check
        %p1973 = pneg %p1972
      $region58: #{dgcnn_forward.9} parent=55 // pred_check_branch
        %1975 = sbr.rel (%p1973) target = $region60
      $region59: #{dgcnn_forward.9} parent=55 // pred_region
        %v1976 = vlaneseq
        %vm1977 = vcmp.ge.s32.totalorder %v1976, 0
        %vm1978 = vcmp.lt.s32.totalorder %v1976, 512
        %vm1979 = vmand %vm1977, %vm1978
        %1980 = vst.msk [vmem:[%s503] sm:$0xf] %vm1979, -inf
        %1981 = vst.msk [vmem:[%s507] sm:$0xf] %vm1979, 0.0
      $region60: #{dgcnn_forward.9} parent=55 // pred_fallthru
        _
      %v1982 = vld [vmem:[%s503] sm:$0xf]
      %v1987 = vcombine.low %v1908, %v1917
      %v1988 = vcombine.low %v1926, %v1935
      %v1990 = vunpack.c.l.s4 1966171168
      %v1991 = vunpack.c.0.s8 %v1990
      %v1992 = vlaneseq
      %v1993 = vshrl.u32 %v1992, 7
      %v1994 = vsub.s32 %v1991, %v1993
      %v1995 = vrot.slane %v1987, %v1994
      %v1997 = vunpack.c.l.s4 1966171168
      %v1998 = vunpack.c.0.s8 %v1997
      %v1999 = vlaneseq
      %v2000 = vshrl.u32 %v1999, 7
      %v2001 = vsub.s32 %v1998, %v2000
      %v2002 = vrot.slane %v1988, %v2001
      %v2003 = vcombine.low %v1995, %v2002
      %v2005 = vunpack.c.l.s4 1966171168
      %v2006 = vunpack.c.0.s8 %v2005
      %v2007 = vlaneseq
      %v2008 = vshrl.u32 %v2007, 7
      %v2009 = vsub.s32 %v2006, %v2008
      %v2010 = vrot.slane %v2003, %v2009
      %v2012 = vmax.f32 %v1982, %v2010
      %v2013 = vlaneseq
      %vm2014 = vcmp.ge.s32.totalorder %v2013, 0
      %vm2015 = vcmp.lt.s32.totalorder %v2013, 512
      %vm2016 = vmand %vm2014, %vm2015
      %2017 = vst.msk [vmem:[%s503] sm:$0xf] %vm2016, %v2012
      %v2018 = vld [vmem:[%s507] sm:$0xf]
      %v2023 = vcombine.low %v1944, %v1953
      %v2024 = vcombine.low %v1962, %v1971
      %v2026 = vunpack.c.l.s4 1966171168
      %v2027 = vunpack.c.0.s8 %v2026
      %v2028 = vlaneseq
      %v2029 = vshrl.u32 %v2028, 7
      %v2030 = vsub.s32 %v2027, %v2029
      %v2031 = vrot.slane %v2023, %v2030
      %v2033 = vunpack.c.l.s4 1966171168
      %v2034 = vunpack.c.0.s8 %v2033
      %v2035 = vlaneseq
      %v2036 = vshrl.u32 %v2035, 7
      %v2037 = vsub.s32 %v2034, %v2036
      %v2038 = vrot.slane %v2024, %v2037
      %v2039 = vcombine.low %v2031, %v2038
      %v2041 = vunpack.c.l.s4 1966171168
      %v2042 = vunpack.c.0.s8 %v2041
      %v2043 = vlaneseq
      %v2044 = vshrl.u32 %v2043, 7
      %v2045 = vsub.s32 %v2042, %v2044
      %v2046 = vrot.slane %v2039, %v2045
      %v2048 = vadd.f32 %v2018, %v2046
      %2049 = vst.msk [vmem:[%s507] sm:$0xf] %vm2016, %v2048
      // Predicated region
      $region61: #{dgcnn_forward.9} parent=55 // pred_check
        %p2050 = pneg %p1972
      $region62: #{dgcnn_forward.9} parent=55 // pred_check_branch
        %2052 = sbr.rel (%p2050) target = $region64
      $region63: #{dgcnn_forward.9} parent=55 // pred_region
        %v2053 = vld [vmem:[%s507] sm:$0xf]
        %v2054 = vmul.f32 %v2053, 0.03125
        %2055 = vst.msk [vmem:[%s507] sm:$0xf] %vm2016, %v2054
      $region64: #{dgcnn_forward.9} parent=55 // pred_fallthru
        _
      %p2056 = scmp.lt.s32.totalorder %s26, 1
      %s2057 = scalar_select %p2056, %s26, 1
      %s2058 = smul.addr %s2057, 4
      %s2059 = scalar_lea.vmem %s9, %s2058
      %p2060 = scmp.lt.s32.totalorder %s26, 1
      %s2061 = scalar_select %p2060, %s26, 1
      %s2062 = smul.addr %s2061, 4
      %s2063 = scalar_lea.vmem %s10, %s2062
      // Predicated region
      $region65: #{dgcnn_forward.9} parent=55 // pred_check
        %p2064 = pneg %p269
      $region66: #{dgcnn_forward.9} parent=55 // pred_check_branch
        %2066 = sbr.rel (%p2064) target = $region68
      $region67: #{dgcnn_forward.9} parent=55 // pred_region
        _
      $region68: #{dgcnn_forward.9} parent=55 // pred_fallthru
        _
      // Predicated region
      $region69: #{dgcnn_forward.9} parent=55 // pred_check
        %p2067 = pneg %p295
      $region70: #{dgcnn_forward.9} parent=55 // pred_check_branch
        %2069 = sbr.rel (%p2067) target = $region72
      $region71: #{dgcnn_forward.9} parent=55 // pred_region
        _
      $region72: #{dgcnn_forward.9} parent=55 // pred_fallthru
        _
    $region56: #{dgcnn_forward.9} parent=5 // pred_fallthru
      _
    %p2070 = scmp.le.s32.totalorder 2, %s17
    // Predicated region
    $region73: #{dgcnn_forward.9} parent=5 // pred_check
      %p2071 = pneg %p2070
    $region74: #{dgcnn_forward.9} parent=5 // pred_check_branch
      %2073 = sbr.rel (%p2071) target = $region76
    $region75: #{dgcnn_forward.9} parent=5 // pred_region
      %s2074 = ssub.s32 %s17, 2
      // Predicated region
      $region77: #{dgcnn_forward.9} parent=75 // pred_check
        %p2075 = pneg %p275
      $region78: #{dgcnn_forward.9} parent=75 // pred_check_branch
        %2077 = sbr.rel (%p2075) target = $region80
      $region79: #{dgcnn_forward.9} parent=75 // pred_region
        %p2078 = scmp.lt.s32.totalorder %s28, 1
        %s2079 = scalar_select %p2078, %s28, 1
        %s2080 = smul.addr %s2079, 4
        %s2081 = scalar_lea.vmem %s9, %s2080
      $region80: #{dgcnn_forward.9} parent=75 // pred_fallthru
        _
      // Predicated region
      $region81: #{dgcnn_forward.9} parent=75 // pred_check
        %p2082 = pneg %p301
      $region82: #{dgcnn_forward.9} parent=75 // pred_check_branch
        %2084 = sbr.rel (%p2082) target = $region84
      $region83: #{dgcnn_forward.9} parent=75 // pred_region
        %p2085 = scmp.lt.s32.totalorder %s28, 1
        %s2086 = scalar_select %p2085, %s28, 1
        %s2087 = smul.addr %s2086, 4
        %s2088 = scalar_lea.vmem %s10, %s2087
      $region84: #{dgcnn_forward.9} parent=75 // pred_fallthru
        _
    $region76: #{dgcnn_forward.9} parent=5 // pred_fallthru
      _
  $region6: #{dgcnn_forward.9} parent=0 // loop_footer
    %s21 = sadd.s32 1, %s17
  $region7: #{dgcnn_forward.9} parent=0 // loop_footer_branch
    %16 = sbr.rel target = $region3
  $region8: #{dgcnn_forward.9} parent=0 // loop_exit
    _

</llo_original>
